<compile_context>
chip_gen: v5e
topology: v5e:2x2
jax: 0.10.0
libtpu: 0.0.40
codegen_flags: <defaults>
</compile_context>

<pallas_src>
import functools

import jax
import jax.numpy as jnp
from jax.experimental import pallas as pl
from jax.experimental.pallas import tpu as pltpu


def _layernorm(x, gamma, beta, eps=1e-5):
    # PyTorch nn.LayerNorm: biased variance over last dim, eps inside rsqrt.
    mean = jnp.mean(x, axis=-1, keepdims=True)
    var = jnp.mean(jnp.square(x - mean), axis=-1, keepdims=True)
    inv = jax.lax.rsqrt(var + eps)
    return (x - mean) * inv * gamma + beta


def geo_loftr_kernel(nhead, dim,
                     eqk_ref, xfull_ref, xt_ref,
                     wv_ref, wpe_ref, wm_ref, w1x_ref, w1m_ref, w2_ref,
                     g1_ref, b1_ref, g2_ref, b2_ref,
                     out_ref, msg_ref):
    """One grid step handles one (batch, L-tile) pair entirely in VMEM."""
    TL = out_ref.shape[1]
    S = xfull_ref.shape[1]
    C = xfull_ref.shape[2]
    cdt = eqk_ref.dtype                     # matmul-operand dtype (f32 or bf16)

    x_full = xfull_ref[0]                   # (S, C)  full sequence (keys/values)
    x_t = xt_ref[0]                         # (TL, C) current query tile

    # Value projection over all S rows (queries may be L-tiled, values are not).
    v = jnp.dot(x_full, wv_ref[...], preferred_element_type=jnp.float32)   # (S, C) f32
    v_c = v.astype(cdt)

    # Folded positional projection -> per-head attention logits (f32).
    eqk2 = eqk_ref[0].reshape(TL * S, C)
    logits = jnp.dot(eqk2, wpe_ref[...], preferred_element_type=jnp.float32)
    logits = logits.reshape(TL, S, nhead)                                   # (TL, S, H)

    # Per-head softmax over S (S lane-dense in the 2-D slice) + weighted sum of
    # that head's value columns, written straight into a (TL, C) f32 slab.
    for h in range(nhead):                  # nhead is small and static
        lg = logits[:, :, h]                                                # (TL, S)
        m = jnp.max(lg, axis=-1, keepdims=True)
        p = jnp.exp(lg - m)
        a = p / jnp.sum(p, axis=-1, keepdims=True)
        head = jnp.dot(a.astype(cdt), v_c[:, h * dim:(h + 1) * dim],
                       preferred_element_type=jnp.float32)                  # (TL, D)
        msg_ref[:, h * dim:(h + 1) * dim] = head

    message = msg_ref[...]                                                  # (TL, C) f32

    # merge + norm1 (LayerNorm statistics in f32).
    message = jnp.dot(message.astype(cdt), wm_ref[...],
                      preferred_element_type=jnp.float32)
    message = _layernorm(message, g1_ref[...], b1_ref[...])

    # mlp(concat([x, message])) without materializing the concat, + norm2.
    hid = (jnp.dot(x_t, w1x_ref[...], preferred_element_type=jnp.float32)
           + jnp.dot(message.astype(cdt), w1m_ref[...],
                     preferred_element_type=jnp.float32))
    hid = jnp.maximum(hid, 0.0)
    msg2 = jnp.dot(hid.astype(cdt), w2_ref[...], preferred_element_type=jnp.float32)
    msg2 = _layernorm(msg2, g2_ref[...], b2_ref[...])

    out_ref[0] = (x_t.astype(jnp.float32) + msg2).astype(out_ref.dtype)


def _pick_l_tile(L, S, C, itemsize, budget_bytes=24 * 1024 * 1024):
    """Largest L-tile whose double-buffered embed_qk slab fits the VMEM budget."""
    if 2 * L * S * C * itemsize <= budget_bytes:
        return L
    best = None
    for t in range(8, L, 8):                # tiles must be multiples of 8 (sublane)
        if L % t == 0 and 2 * t * S * C * itemsize <= budget_bytes:
            best = t
    # TODO(synk): if even TL=8 is over budget (huge S), tile S with online softmax.
    return best if best is not None else L


def geo_loftr_encoder_layer(embed_qk, x, params, nhead, *, compute_dtype=None, tl=None):
    B, L, S, C = embed_qk.shape
    assert x.shape == (B, L, C) and C % nhead == 0
    assert L == S, "self-attention: value has L rows, softmax runs over S"
    dim = C // nhead

    wv, wp, wp2, wm, w1, w2, g1, b1, g2, b2 = params

    # Fold p_proj and p_proj_2 into one (C, nhead) projection (exact).
    wpe = (wp.astype(jnp.float32) @ wp2.astype(jnp.float32))
    # Split mlp[0] so the kernel never materializes concat([x, message], -1).
    w1x, w1m = w1[:C], w1[C:]

    cdt = compute_dtype if compute_dtype is not None else x.dtype
    itemsize = jnp.dtype(cdt).itemsize

    cast = lambda a: a.astype(cdt)
    embed_qk_c = cast(embed_qk)
    x_c = cast(x)
    wv_c, wpe_c, wm_c, w1x_c, w1m_c, w2_c = map(cast, (wv, wpe, wm, w1x, w1m, w2))
    g1_2, b1_2, g2_2, b2_2 = (a.reshape(1, C).astype(jnp.float32)
                              for a in (g1, b1, g2, b2))

    if tl is None:
        tl = _pick_l_tile(L, S, C, itemsize)
    assert L % tl == 0
    nl = L // tl

    full = lambda a: pl.BlockSpec(a.shape, lambda b, l: (0,) * a.ndim)

    kernel = functools.partial(geo_loftr_kernel, nhead, dim)
    return pl.pallas_call(
        kernel,
        out_shape=jax.ShapeDtypeStruct((B, L, C), x.dtype),
        grid=(B, nl),
        in_specs=[
            pl.BlockSpec((1, tl, S, C), lambda b, l: (b, l, 0, 0)),   # embed_qk tile
            pl.BlockSpec((1, S, C), lambda b, l: (b, 0, 0)),          # x, full S (values)
            pl.BlockSpec((1, tl, C), lambda b, l: (b, l, 0)),         # x, query tile
            full(wv_c), full(wpe_c), full(wm_c),
            full(w1x_c), full(w1m_c), full(w2_c),
            full(g1_2), full(b1_2), full(g2_2), full(b2_2),
        ],
        out_specs=pl.BlockSpec((1, tl, C), lambda b, l: (b, l, 0)),
        scratch_shapes=[pltpu.VMEM((tl, C), jnp.float32)],
        compiler_params=pltpu.CompilerParams(
            dimension_semantics=("parallel", "parallel"),
            vmem_limit_bytes=48 * 1024 * 1024),
    )(embed_qk_c, x_c, x_c, wv_c, wpe_c, wm_c, w1x_c, w1m_c, w2_c,
      g1_2, b1_2, g2_2, b2_2)


def _reference(embed_qk, x, params, nhead):
    """Pure-JAX reference mirroring the PyTorch forward (unfused weights)."""
    wv, wp, wp2, wm, w1, w2, g1, b1, g2, b2 = params
    B, L, S, C = embed_qk.shape
    dim = C // nhead

    def ln(t, g, b, eps=1e-5):
        mu = jnp.mean(t, axis=-1, keepdims=True)
        var = jnp.mean((t - mu) ** 2, axis=-1, keepdims=True)
        return (t - mu) / jnp.sqrt(var + eps) * g + b

    value = (x @ wv).reshape(B, L, nhead, dim)                  # (B,S,H,D)
    pe = (embed_qk @ wp) @ wp2                                  # (B,L,S,H)
    A = jax.nn.softmax(pe, axis=2)
    message = jnp.einsum("nlsh,nshd->nlhd", A, value)           # (B,L,H,D)
    message = message.reshape(B, L, nhead * dim) @ wm
    message = ln(message, g1, b1)
    cat = jnp.concatenate([x, message], axis=2)
    message = jnp.maximum(cat @ w1, 0.0) @ w2
    message = ln(message, g2, b2)
    return x + message


if __name__ == "__main__":
    B, L, S = 2, 16, 16          # self-attention: L == S
    d_model, nhead = 32, 4

    key = jax.random.PRNGKey(0)
    keys = jax.random.split(key, 12)

    embed_qk = jax.random.normal(keys[0], (B, L, S, d_model), jnp.float32)
    x = jax.random.normal(keys[1], (B, L, d_model), jnp.float32)

    def w(k, fan_in, fan_out):
        return jax.random.normal(k, (fan_in, fan_out), jnp.float32) / jnp.sqrt(fan_in)

    params = (
        w(keys[2], d_model, d_model),            # v_proj
        w(keys[3], d_model, d_model),            # p_proj
        w(keys[4], d_model, nhead),              # p_proj_2
        w(keys[5], d_model, d_model),            # merge
        w(keys[6], 2 * d_model, 2 * d_model),    # mlp[0]
        w(keys[7], 2 * d_model, d_model),        # mlp[2]
        1.0 + 0.01 * jax.random.normal(keys[8], (d_model,), jnp.float32),   # norm1 gamma
        0.01 * jax.random.normal(keys[9], (d_model,), jnp.float32),         # norm1 beta
        1.0 + 0.01 * jax.random.normal(keys[10], (d_model,), jnp.float32),  # norm2 gamma
        0.01 * jax.random.normal(keys[11], (d_model,), jnp.float32),        # norm2 beta
    )

    ref = _reference(embed_qk, x, params, nhead)

    # f32 path: must match the reference tightly.
    out = geo_loftr_encoder_layer(embed_qk, x, params, nhead)
    out = jax.block_until_ready(out)
    assert out.shape == (B, L, d_model)
    assert jnp.allclose(out, ref, rtol=1e-4, atol=1e-4), "mismatch vs reference (f32)"

    # bf16 matmul-operand path (bandwidth optimization): loose tolerance check.
    out_bf = geo_loftr_encoder_layer(embed_qk.astype(jnp.bfloat16),
                                     x.astype(jnp.bfloat16),
                                     params, nhead,
                                     compute_dtype=jnp.bfloat16)
    out_bf = jax.block_until_ready(out_bf)
    out_bf32 = out_bf.astype(jnp.float32)
    assert out_bf.shape == (B, L, d_model)
    assert bool(jnp.all(jnp.isfinite(out_bf32)))
    assert float(jnp.max(jnp.abs(out_bf32 - ref))) < 0.3, "mismatch vs reference (bf16)"

    print("KERNEL_OK")
</pallas_src>

<mosaic_0001>
module attributes {stable_mosaic.version = 11 : i64} {
  func.func @geo_loftr_kernel(%arg0: i32, %arg1: i32, %arg2: memref<1x16x16x32xf32, #tpu.memory_space<vmem>>, %arg3: memref<1x16x32xf32, #tpu.memory_space<vmem>>, %arg4: memref<1x16x32xf32, #tpu.memory_space<vmem>>, %arg5: memref<32x32xf32, #tpu.memory_space<vmem>>, %arg6: memref<32x4xf32, #tpu.memory_space<vmem>>, %arg7: memref<32x32xf32, #tpu.memory_space<vmem>>, %arg8: memref<32x64xf32, #tpu.memory_space<vmem>>, %arg9: memref<32x64xf32, #tpu.memory_space<vmem>>, %arg10: memref<64x32xf32, #tpu.memory_space<vmem>>, %arg11: memref<1x32xf32, #tpu.memory_space<vmem>>, %arg12: memref<1x32xf32, #tpu.memory_space<vmem>>, %arg13: memref<1x32xf32, #tpu.memory_space<vmem>>, %arg14: memref<1x32xf32, #tpu.memory_space<vmem>>, %arg15: memref<1x16x32xf32, #tpu.memory_space<vmem>>, %arg16: memref<16x32xf32, #tpu.memory_space<vmem>>) attributes {dimension_semantics = [#tpu.dimension_semantics<parallel>, #tpu.dimension_semantics<parallel>], iteration_bounds = array<i64: 2, 1>, scalar_prefetch = 0 : i64, scratch_operands = 1 : i64, tpu.core_type = #tpu.core_type<tc>, window_params = [{transform_indices = @transform_0, window_bounds = array<i64: 1, 16, 16, 32>}, {transform_indices = @transform_1, window_bounds = array<i64: 1, 16, 32>}, {transform_indices = @transform_2, window_bounds = array<i64: 1, 16, 32>}, {pipeline_mode = #tpu.pipeline_mode<synchronous>, transform_indices = @transform_3, window_bounds = array<i64: 32, 32>}, {pipeline_mode = #tpu.pipeline_mode<synchronous>, transform_indices = @transform_4, window_bounds = array<i64: 32, 4>}, {pipeline_mode = #tpu.pipeline_mode<synchronous>, transform_indices = @transform_5, window_bounds = array<i64: 32, 32>}, {pipeline_mode = #tpu.pipeline_mode<synchronous>, transform_indices = @transform_6, window_bounds = array<i64: 32, 64>}, {pipeline_mode = #tpu.pipeline_mode<synchronous>, transform_indices = @transform_7, window_bounds = array<i64: 32, 64>}, {pipeline_mode = #tpu.pipeline_mode<synchronous>, transform_indices = @transform_8, window_bounds = array<i64: 64, 32>}, {pipeline_mode = #tpu.pipeline_mode<synchronous>, transform_indices = @transform_9, window_bounds = array<i64: 1, 32>}, {pipeline_mode = #tpu.pipeline_mode<synchronous>, transform_indices = @transform_10, window_bounds = array<i64: 1, 32>}, {pipeline_mode = #tpu.pipeline_mode<synchronous>, transform_indices = @transform_11, window_bounds = array<i64: 1, 32>}, {pipeline_mode = #tpu.pipeline_mode<synchronous>, transform_indices = @transform_12, window_bounds = array<i64: 1, 32>}, {transform_indices = @transform_13, window_bounds = array<i64: 1, 16, 32>}]} {
    %c0 = arith.constant 0 : index
    %c0_0 = arith.constant 0 : index
    %c0_1 = arith.constant 0 : index
    %0 = vector.load %arg3[%c0, %c0_0, %c0_1] : memref<1x16x32xf32, #tpu.memory_space<vmem>>, vector<1x16x32xf32>
    %1 = vector.shape_cast %0 : vector<1x16x32xf32> to vector<16x32xf32>
    %c0_2 = arith.constant 0 : index
    %c0_3 = arith.constant 0 : index
    %c0_4 = arith.constant 0 : index
    %2 = vector.load %arg4[%c0_2, %c0_3, %c0_4] : memref<1x16x32xf32, #tpu.memory_space<vmem>>, vector<1x16x32xf32>
    %3 = vector.shape_cast %2 : vector<1x16x32xf32> to vector<16x32xf32>
    %c0_5 = arith.constant 0 : index
    %c0_6 = arith.constant 0 : index
    %4 = vector.load %arg5[%c0_5, %c0_6] : memref<32x32xf32, #tpu.memory_space<vmem>>, vector<32x32xf32>
    %cst = arith.constant dense<0.000000e+00> : vector<16x32xf32>
    %5 = tpu.matmul %1, %4, %cst {dimension_numbers = #tpu.dot_dimension_numbers<[1], [0], [0], [1], [0, 0, 1, 1], [], []>} : vector<16x32xf32>, vector<32x32xf32>, vector<16x32xf32> -> vector<16x32xf32>
    %c0_7 = arith.constant 0 : index
    %c0_8 = arith.constant 0 : index
    %c0_9 = arith.constant 0 : index
    %c0_10 = arith.constant 0 : index
    %6 = vector.load %arg2[%c0_7, %c0_8, %c0_9, %c0_10] : memref<1x16x16x32xf32, #tpu.memory_space<vmem>>, vector<1x16x16x32xf32>
    %7 = vector.shape_cast %6 : vector<1x16x16x32xf32> to vector<16x16x32xf32>
    %8 = vector.shape_cast %7 : vector<16x16x32xf32> to vector<256x32xf32>
    %c0_11 = arith.constant 0 : index
    %c0_12 = arith.constant 0 : index
    %9 = vector.load %arg6[%c0_11, %c0_12] : memref<32x4xf32, #tpu.memory_space<vmem>>, vector<32x4xf32>
    %cst_13 = arith.constant dense<0.000000e+00> : vector<256x4xf32>
    %10 = tpu.matmul %8, %9, %cst_13 {dimension_numbers = #tpu.dot_dimension_numbers<[1], [0], [0], [1], [0, 0, 1, 1], [], []>} : vector<256x32xf32>, vector<32x4xf32>, vector<256x4xf32> -> vector<256x4xf32>
    %11 = vector.shape_cast %10 : vector<256x4xf32> to vector<16x16x4xf32>
    %12 = vector.extract_strided_slice %11 {offsets = [0, 0, 0], sizes = [16, 16, 1], strides = [1, 1, 1]} : vector<16x16x4xf32> to vector<16x16x1xf32>
    %13 = vector.shape_cast %12 : vector<16x16x1xf32> to vector<16x16xf32>
    %cst_14 = arith.constant dense<0xFF800000> : vector<16xf32>
    %14 = vector.multi_reduction <maximumf>, %13, %cst_14 [1] : vector<16x16xf32> to vector<16xf32>
    %15 = vector.shape_cast %14 : vector<16xf32> to vector<16x1xf32>
    %16 = vector.broadcast %15 : vector<16x1xf32> to vector<16x16xf32>
    %17 = arith.subf %13, %16 : vector<16x16xf32>
    %18 = math.exp %17 : vector<16x16xf32>
    %cst_15 = arith.constant dense<0.000000e+00> : vector<16xf32>
    %19 = vector.multi_reduction <add>, %18, %cst_15 [1] : vector<16x16xf32> to vector<16xf32>
    %20 = vector.shape_cast %19 : vector<16xf32> to vector<16x1xf32>
    %21 = vector.broadcast %20 : vector<16x1xf32> to vector<16x16xf32>
    %22 = arith.divf %18, %21 : vector<16x16xf32>
    %23 = vector.extract_strided_slice %5 {offsets = [0, 0], sizes = [16, 8], strides = [1, 1]} : vector<16x32xf32> to vector<16x8xf32>
    %cst_16 = arith.constant dense<0.000000e+00> : vector<16x8xf32>
    %24 = tpu.matmul %22, %23, %cst_16 {dimension_numbers = #tpu.dot_dimension_numbers<[1], [0], [0], [1], [0, 0, 1, 1], [], []>} : vector<16x16xf32>, vector<16x8xf32>, vector<16x8xf32> -> vector<16x8xf32>
    %c0_17 = arith.constant 0 : index
    %c0_18 = arith.constant 0 : index
    %25 = vector.load %arg16[%c0_17, %c0_18] : memref<16x32xf32, #tpu.memory_space<vmem>>, vector<16x8xf32>
    tpu.vector_store %arg16[%c0_17, %c0_18], %24 {strides = array<i32>} : memref<16x32xf32, #tpu.memory_space<vmem>>, vector<16x8xf32>,
    %26 = vector.extract_strided_slice %11 {offsets = [0, 0, 1], sizes = [16, 16, 1], strides = [1, 1, 1]} : vector<16x16x4xf32> to vector<16x16x1xf32>
    %27 = vector.shape_cast %26 : vector<16x16x1xf32> to vector<16x16xf32>
    %cst_19 = arith.constant dense<0xFF800000> : vector<16xf32>
    %28 = vector.multi_reduction <maximumf>, %27, %cst_19 [1] : vector<16x16xf32> to vector<16xf32>
    %29 = vector.shape_cast %28 : vector<16xf32> to vector<16x1xf32>
    %30 = vector.broadcast %29 : vector<16x1xf32> to vector<16x16xf32>
    %31 = arith.subf %27, %30 : vector<16x16xf32>
    %32 = math.exp %31 : vector<16x16xf32>
    %cst_20 = arith.constant dense<0.000000e+00> : vector<16xf32>
    %33 = vector.multi_reduction <add>, %32, %cst_20 [1] : vector<16x16xf32> to vector<16xf32>
    %34 = vector.shape_cast %33 : vector<16xf32> to vector<16x1xf32>
    %35 = vector.broadcast %34 : vector<16x1xf32> to vector<16x16xf32>
    %36 = arith.divf %32, %35 : vector<16x16xf32>
    %37 = vector.extract_strided_slice %5 {offsets = [0, 8], sizes = [16, 8], strides = [1, 1]} : vector<16x32xf32> to vector<16x8xf32>
    %cst_21 = arith.constant dense<0.000000e+00> : vector<16x8xf32>
    %38 = tpu.matmul %36, %37, %cst_21 {dimension_numbers = #tpu.dot_dimension_numbers<[1], [0], [0], [1], [0, 0, 1, 1], [], []>} : vector<16x16xf32>, vector<16x8xf32>, vector<16x8xf32> -> vector<16x8xf32>
    %c0_22 = arith.constant 0 : index
    %c8 = arith.constant 8 : index
    %39 = vector.load %arg16[%c0_22, %c8] : memref<16x32xf32, #tpu.memory_space<vmem>>, vector<16x8xf32>
    tpu.vector_store %arg16[%c0_22, %c8], %38 {strides = array<i32>} : memref<16x32xf32, #tpu.memory_space<vmem>>, vector<16x8xf32>,
    %40 = vector.extract_strided_slice %11 {offsets = [0, 0, 2], sizes = [16, 16, 1], strides = [1, 1, 1]} : vector<16x16x4xf32> to vector<16x16x1xf32>
    %41 = vector.shape_cast %40 : vector<16x16x1xf32> to vector<16x16xf32>
    %cst_23 = arith.constant dense<0xFF800000> : vector<16xf32>
    %42 = vector.multi_reduction <maximumf>, %41, %cst_23 [1] : vector<16x16xf32> to vector<16xf32>
    %43 = vector.shape_cast %42 : vector<16xf32> to vector<16x1xf32>
    %44 = vector.broadcast %43 : vector<16x1xf32> to vector<16x16xf32>
    %45 = arith.subf %41, %44 : vector<16x16xf32>
    %46 = math.exp %45 : vector<16x16xf32>
    %cst_24 = arith.constant dense<0.000000e+00> : vector<16xf32>
    %47 = vector.multi_reduction <add>, %46, %cst_24 [1] : vector<16x16xf32> to vector<16xf32>
    %48 = vector.shape_cast %47 : vector<16xf32> to vector<16x1xf32>
    %49 = vector.broadcast %48 : vector<16x1xf32> to vector<16x16xf32>
    %50 = arith.divf %46, %49 : vector<16x16xf32>
    %51 = vector.extract_strided_slice %5 {offsets = [0, 16], sizes = [16, 8], strides = [1, 1]} : vector<16x32xf32> to vector<16x8xf32>
    %cst_25 = arith.constant dense<0.000000e+00> : vector<16x8xf32>
    %52 = tpu.matmul %50, %51, %cst_25 {dimension_numbers = #tpu.dot_dimension_numbers<[1], [0], [0], [1], [0, 0, 1, 1], [], []>} : vector<16x16xf32>, vector<16x8xf32>, vector<16x8xf32> -> vector<16x8xf32>
    %c0_26 = arith.constant 0 : index
    %c16 = arith.constant 16 : index
    %53 = vector.load %arg16[%c0_26, %c16] : memref<16x32xf32, #tpu.memory_space<vmem>>, vector<16x8xf32>
    tpu.vector_store %arg16[%c0_26, %c16], %52 {strides = array<i32>} : memref<16x32xf32, #tpu.memory_space<vmem>>, vector<16x8xf32>,
    %54 = vector.extract_strided_slice %11 {offsets = [0, 0, 3], sizes = [16, 16, 1], strides = [1, 1, 1]} : vector<16x16x4xf32> to vector<16x16x1xf32>
    %55 = vector.shape_cast %54 : vector<16x16x1xf32> to vector<16x16xf32>
    %cst_27 = arith.constant dense<0xFF800000> : vector<16xf32>
    %56 = vector.multi_reduction <maximumf>, %55, %cst_27 [1] : vector<16x16xf32> to vector<16xf32>
    %57 = vector.shape_cast %56 : vector<16xf32> to vector<16x1xf32>
    %58 = vector.broadcast %57 : vector<16x1xf32> to vector<16x16xf32>
    %59 = arith.subf %55, %58 : vector<16x16xf32>
    %60 = math.exp %59 : vector<16x16xf32>
    %cst_28 = arith.constant dense<0.000000e+00> : vector<16xf32>
    %61 = vector.multi_reduction <add>, %60, %cst_28 [1] : vector<16x16xf32> to vector<16xf32>
    %62 = vector.shape_cast %61 : vector<16xf32> to vector<16x1xf32>
    %63 = vector.broadcast %62 : vector<16x1xf32> to vector<16x16xf32>
    %64 = arith.divf %60, %63 : vector<16x16xf32>
    %65 = vector.extract_strided_slice %5 {offsets = [0, 24], sizes = [16, 8], strides = [1, 1]} : vector<16x32xf32> to vector<16x8xf32>
    %cst_29 = arith.constant dense<0.000000e+00> : vector<16x8xf32>
    %66 = tpu.matmul %64, %65, %cst_29 {dimension_numbers = #tpu.dot_dimension_numbers<[1], [0], [0], [1], [0, 0, 1, 1], [], []>} : vector<16x16xf32>, vector<16x8xf32>, vector<16x8xf32> -> vector<16x8xf32>
    %c0_30 = arith.constant 0 : index
    %c24 = arith.constant 24 : index
    %67 = vector.load %arg16[%c0_30, %c24] : memref<16x32xf32, #tpu.memory_space<vmem>>, vector<16x8xf32>
    tpu.vector_store %arg16[%c0_30, %c24], %66 {strides = array<i32>} : memref<16x32xf32, #tpu.memory_space<vmem>>, vector<16x8xf32>,
    %c0_31 = arith.constant 0 : index
    %c0_32 = arith.constant 0 : index
    %68 = vector.load %arg16[%c0_31, %c0_32] : memref<16x32xf32, #tpu.memory_space<vmem>>, vector<16x32xf32>
    %c0_33 = arith.constant 0 : index
    %c0_34 = arith.constant 0 : index
    %69 = vector.load %arg7[%c0_33, %c0_34] : memref<32x32xf32, #tpu.memory_space<vmem>>, vector<32x32xf32>
    %cst_35 = arith.constant dense<0.000000e+00> : vector<16x32xf32>
    %70 = tpu.matmul %68, %69, %cst_35 {dimension_numbers = #tpu.dot_dimension_numbers<[1], [0], [0], [1], [0, 0, 1, 1], [], []>} : vector<16x32xf32>, vector<32x32xf32>, vector<16x32xf32> -> vector<16x32xf32>
    %c0_36 = arith.constant 0 : index
    %c0_37 = arith.constant 0 : index
    %71 = vector.load %arg11[%c0_36, %c0_37] : memref<1x32xf32, #tpu.memory_space<vmem>>, vector<1x32xf32>
    %c0_38 = arith.constant 0 : index
    %c0_39 = arith.constant 0 : index
    %72 = vector.load %arg12[%c0_38, %c0_39] : memref<1x32xf32, #tpu.memory_space<vmem>>, vector<1x32xf32>
    %cst_40 = arith.constant dense<0.000000e+00> : vector<16xf32>
    %73 = vector.multi_reduction <add>, %70, %cst_40 [1] : vector<16x32xf32> to vector<16xf32>
    %74 = vector.shape_cast %73 : vector<16xf32> to vector<16x1xf32>
    %cst_41 = arith.constant 3.200000e+01 : f32
    %75 = vector.broadcast %cst_41 : f32 to vector<16x1xf32>
    %76 = arith.divf %74, %75 : vector<16x1xf32>
    %77 = vector.broadcast %76 : vector<16x1xf32> to vector<16x32xf32>
    %78 = arith.subf %70, %77 : vector<16x32xf32>
    %79 = arith.mulf %78, %78 : vector<16x32xf32>
    %cst_42 = arith.constant dense<0.000000e+00> : vector<16xf32>
    %80 = vector.multi_reduction <add>, %79, %cst_42 [1] : vector<16x32xf32> to vector<16xf32>
    %81 = vector.shape_cast %80 : vector<16xf32> to vector<16x1xf32>
    %cst_43 = arith.constant 3.200000e+01 : f32
    %82 = vector.broadcast %cst_43 : f32 to vector<16x1xf32>
    %83 = arith.divf %81, %82 : vector<16x1xf32>
    %cst_44 = arith.constant 9.99999974E-6 : f32
    %84 = vector.broadcast %cst_44 : f32 to vector<16x1xf32>
    %85 = arith.addf %83, %84 : vector<16x1xf32>
    %86 = math.rsqrt %85 : vector<16x1xf32>
    %87 = vector.broadcast %76 : vector<16x1xf32> to vector<16x32xf32>
    %88 = arith.subf %70, %87 : vector<16x32xf32>
    %89 = vector.broadcast %86 : vector<16x1xf32> to vector<16x32xf32>
    %90 = arith.mulf %88, %89 : vector<16x32xf32>
    %91 = vector.broadcast %71 : vector<1x32xf32> to vector<16x32xf32>
    %92 = arith.mulf %90, %91 : vector<16x32xf32>
    %93 = vector.broadcast %72 : vector<1x32xf32> to vector<16x32xf32>
    %94 = arith.addf %92, %93 : vector<16x32xf32>
    %c0_45 = arith.constant 0 : index
    %c0_46 = arith.constant 0 : index
    %95 = vector.load %arg8[%c0_45, %c0_46] : memref<32x64xf32, #tpu.memory_space<vmem>>, vector<32x64xf32>
    %cst_47 = arith.constant dense<0.000000e+00> : vector<16x64xf32>
    %96 = tpu.matmul %3, %95, %cst_47 {dimension_numbers = #tpu.dot_dimension_numbers<[1], [0], [0], [1], [0, 0, 1, 1], [], []>} : vector<16x32xf32>, vector<32x64xf32>, vector<16x64xf32> -> vector<16x64xf32>
    %c0_48 = arith.constant 0 : index
    %c0_49 = arith.constant 0 : index
    %97 = vector.load %arg9[%c0_48, %c0_49] : memref<32x64xf32, #tpu.memory_space<vmem>>, vector<32x64xf32>
    %cst_50 = arith.constant dense<0.000000e+00> : vector<16x64xf32>
    %98 = tpu.matmul %94, %97, %cst_50 {dimension_numbers = #tpu.dot_dimension_numbers<[1], [0], [0], [1], [0, 0, 1, 1], [], []>} : vector<16x32xf32>, vector<32x64xf32>, vector<16x64xf32> -> vector<16x64xf32>
    %99 = arith.addf %96, %98 : vector<16x64xf32>
    %cst_51 = arith.constant 0.000000e+00 : f32
    %100 = vector.broadcast %cst_51 : f32 to vector<16x64xf32>
    %101 = arith.maximumf %99, %100 : vector<16x64xf32>
    %c0_52 = arith.constant 0 : index
    %c0_53 = arith.constant 0 : index
    %102 = vector.load %arg10[%c0_52, %c0_53] : memref<64x32xf32, #tpu.memory_space<vmem>>, vector<64x32xf32>
    %cst_54 = arith.constant dense<0.000000e+00> : vector<16x32xf32>
    %103 = tpu.matmul %101, %102, %cst_54 {dimension_numbers = #tpu.dot_dimension_numbers<[1], [0], [0], [1], [0, 0, 1, 1], [], []>} : vector<16x64xf32>, vector<64x32xf32>, vector<16x32xf32> -> vector<16x32xf32>
    %c0_55 = arith.constant 0 : index
    %c0_56 = arith.constant 0 : index
    %104 = vector.load %arg13[%c0_55, %c0_56] : memref<1x32xf32, #tpu.memory_space<vmem>>, vector<1x32xf32>
    %c0_57 = arith.constant 0 : index
    %c0_58 = arith.constant 0 : index
    %105 = vector.load %arg14[%c0_57, %c0_58] : memref<1x32xf32, #tpu.memory_space<vmem>>, vector<1x32xf32>
    %cst_59 = arith.constant dense<0.000000e+00> : vector<16xf32>
    %106 = vector.multi_reduction <add>, %103, %cst_59 [1] : vector<16x32xf32> to vector<16xf32>
    %107 = vector.shape_cast %106 : vector<16xf32> to vector<16x1xf32>
    %cst_60 = arith.constant 3.200000e+01 : f32
    %108 = vector.broadcast %cst_60 : f32 to vector<16x1xf32>
    %109 = arith.divf %107, %108 : vector<16x1xf32>
    %110 = vector.broadcast %109 : vector<16x1xf32> to vector<16x32xf32>
    %111 = arith.subf %103, %110 : vector<16x32xf32>
    %112 = arith.mulf %111, %111 : vector<16x32xf32>
    %cst_61 = arith.constant dense<0.000000e+00> : vector<16xf32>
    %113 = vector.multi_reduction <add>, %112, %cst_61 [1] : vector<16x32xf32> to vector<16xf32>
    %114 = vector.shape_cast %113 : vector<16xf32> to vector<16x1xf32>
    %cst_62 = arith.constant 3.200000e+01 : f32
    %115 = vector.broadcast %cst_62 : f32 to vector<16x1xf32>
    %116 = arith.divf %114, %115 : vector<16x1xf32>
    %cst_63 = arith.constant 9.99999974E-6 : f32
    %117 = vector.broadcast %cst_63 : f32 to vector<16x1xf32>
    %118 = arith.addf %116, %117 : vector<16x1xf32>
    %119 = math.rsqrt %118 : vector<16x1xf32>
    %120 = vector.broadcast %109 : vector<16x1xf32> to vector<16x32xf32>
    %121 = arith.subf %103, %120 : vector<16x32xf32>
    %122 = vector.broadcast %119 : vector<16x1xf32> to vector<16x32xf32>
    %123 = arith.mulf %121, %122 : vector<16x32xf32>
    %124 = vector.broadcast %104 : vector<1x32xf32> to vector<16x32xf32>
    %125 = arith.mulf %123, %124 : vector<16x32xf32>
    %126 = vector.broadcast %105 : vector<1x32xf32> to vector<16x32xf32>
    %127 = arith.addf %125, %126 : vector<16x32xf32>
    %128 = arith.addf %3, %127 : vector<16x32xf32>
    %c0_64 = arith.constant 0 : index
    %c0_65 = arith.constant 0 : index
    %c0_66 = arith.constant 0 : index
    %129 = vector.load %arg15[%c0_64, %c0_65, %c0_66] : memref<1x16x32xf32, #tpu.memory_space<vmem>>, vector<1x16x32xf32>
    %130 = vector.shape_cast %129 : vector<1x16x32xf32> to vector<16x32xf32>
    %131 = vector.shape_cast %128 : vector<16x32xf32> to vector<1x16x32xf32>
    tpu.vector_store %arg15[%c0_64, %c0_65, %c0_66], %131 {strides = array<i32>} : memref<1x16x32xf32, #tpu.memory_space<vmem>>, vector<1x16x32xf32>,
    return
  }
  func.func @transform_0(%arg0: i32, %arg1: i32) -> (i32, i32, i32, i32) {
    %c0_i32 = arith.constant 0 : i32
    %c0_i32_0 = arith.constant 0 : i32
    %c0_i32_1 = arith.constant 0 : i32
    return %arg0, %arg1, %c0_i32, %c0_i32_0 : i32, i32, i32, i32
  }
  func.func @transform_1(%arg0: i32, %arg1: i32) -> (i32, i32, i32) {
    %c0_i32 = arith.constant 0 : i32
    %c0_i32_0 = arith.constant 0 : i32
    %c0_i32_1 = arith.constant 0 : i32
    return %arg0, %c0_i32, %c0_i32_0 : i32, i32, i32
  }
  func.func @transform_2(%arg0: i32, %arg1: i32) -> (i32, i32, i32) {
    %c0_i32 = arith.constant 0 : i32
    %c0_i32_0 = arith.constant 0 : i32
    return %arg0, %arg1, %c0_i32 : i32, i32, i32
  }
  func.func @transform_3(%arg0: i32, %arg1: i32) -> (i32, i32) {
    %c0_i32 = arith.constant 0 : i32
    %c0_i32_0 = arith.constant 0 : i32
    %c0_i32_1 = arith.constant 0 : i32
    return %c0_i32, %c0_i32_0 : i32, i32
  }
  func.func @transform_4(%arg0: i32, %arg1: i32) -> (i32, i32) {
    %c0_i32 = arith.constant 0 : i32
    %c0_i32_0 = arith.constant 0 : i32
    %c0_i32_1 = arith.constant 0 : i32
    return %c0_i32, %c0_i32_0 : i32, i32
  }
  func.func @transform_5(%arg0: i32, %arg1: i32) -> (i32, i32) {
    %c0_i32 = arith.constant 0 : i32
    %c0_i32_0 = arith.constant 0 : i32
    %c0_i32_1 = arith.constant 0 : i32
    return %c0_i32, %c0_i32_0 : i32, i32
  }
  func.func @transform_6(%arg0: i32, %arg1: i32) -> (i32, i32) {
    %c0_i32 = arith.constant 0 : i32
    %c0_i32_0 = arith.constant 0 : i32
    %c0_i32_1 = arith.constant 0 : i32
    return %c0_i32, %c0_i32_0 : i32, i32
  }
  func.func @transform_7(%arg0: i32, %arg1: i32) -> (i32, i32) {
    %c0_i32 = arith.constant 0 : i32
    %c0_i32_0 = arith.constant 0 : i32
    %c0_i32_1 = arith.constant 0 : i32
    return %c0_i32, %c0_i32_0 : i32, i32
  }
  func.func @transform_8(%arg0: i32, %arg1: i32) -> (i32, i32) {
    %c0_i32 = arith.constant 0 : i32
    %c0_i32_0 = arith.constant 0 : i32
    %c0_i32_1 = arith.constant 0 : i32
    return %c0_i32, %c0_i32_0 : i32, i32
  }
  func.func @transform_9(%arg0: i32, %arg1: i32) -> (i32, i32) {
    %c0_i32 = arith.constant 0 : i32
    %c0_i32_0 = arith.constant 0 : i32
    %c0_i32_1 = arith.constant 0 : i32
    return %c0_i32, %c0_i32_0 : i32, i32
  }
  func.func @transform_10(%arg0: i32, %arg1: i32) -> (i32, i32) {
    %c0_i32 = arith.constant 0 : i32
    %c0_i32_0 = arith.constant 0 : i32
    %c0_i32_1 = arith.constant 0 : i32
    return %c0_i32, %c0_i32_0 : i32, i32
  }
  func.func @transform_11(%arg0: i32, %arg1: i32) -> (i32, i32) {
    %c0_i32 = arith.constant 0 : i32
    %c0_i32_0 = arith.constant 0 : i32
    %c0_i32_1 = arith.constant 0 : i32
    return %c0_i32, %c0_i32_0 : i32, i32
  }
  func.func @transform_12(%arg0: i32, %arg1: i32) -> (i32, i32) {
    %c0_i32 = arith.constant 0 : i32
    %c0_i32_0 = arith.constant 0 : i32
    %c0_i32_1 = arith.constant 0 : i32
    return %c0_i32, %c0_i32_0 : i32, i32
  }
  func.func @transform_13(%arg0: i32, %arg1: i32) -> (i32, i32, i32) {
    %c0_i32 = arith.constant 0 : i32
    %c0_i32_0 = arith.constant 0 : i32
    return %arg0, %arg1, %c0_i32 : i32, i32, i32
  }
}

</mosaic_0001>

<llo_original>
// kernel: tpu_custom_call.1
$region0: #{tpu_custom_call.1}
  #allocation0 [shape = 'u32[]', space=smem, size = 0x4, offset = 0x4, fixed_abs, tag = 'smem constant byte address 0x4 - core index']
  #allocation1 [shape = 'u32[72,128]{1,0:T(1,128)}', space=vmem, size = 0x9000, scoped, tag = 'internal scratch']
  #allocation2 [shape = 'f32[16,32]{1,0:T(8,128)}', space=vmem, size = 0x2000, scoped, tag = 'scratch operand']
  %s0 = inlined_call_operand.hbm [shape: f32[2,16,16,32], index: 0, kind: input, shape index: {}]
  %s1 = inlined_call_operand.vmem [shape: f32[2,16,32], index: 1, kind: input, shape index: {}]
  %s2 = inlined_call_operand.vmem [shape: f32[2,16,32], index: 2, kind: input, shape index: {}]
  %s3 = inlined_call_operand.vmem [shape: f32[32,32], index: 3, kind: input, shape index: {}]
  %s4 = inlined_call_operand.vmem [shape: f32[32,4], index: 4, kind: input, shape index: {}]
  %s5 = inlined_call_operand.hbm [shape: f32[32,32], index: 5, kind: input, shape index: {}]
  %s6 = inlined_call_operand.hbm [shape: f32[32,64], index: 6, kind: input, shape index: {}]
  %s7 = inlined_call_operand.hbm [shape: f32[32,64], index: 7, kind: input, shape index: {}]
  %s8 = inlined_call_operand.vmem [shape: f32[64,32], index: 8, kind: input, shape index: {}]
  %s9 = inlined_call_operand.vmem [shape: f32[1,32], index: 9, kind: input, shape index: {}]
  %s10 = inlined_call_operand.vmem [shape: f32[1,32], index: 10, kind: input, shape index: {}]
  %s11 = inlined_call_operand.vmem [shape: f32[1,32], index: 11, kind: input, shape index: {}]
  %s12 = inlined_call_operand.vmem [shape: f32[1,32], index: 12, kind: input, shape index: {}]
  %s13 = inlined_call_operand.hbm [shape: f32[2,16,32], index: 13, kind: output, shape index: {}]
  %s14 = sld [smem:[#allocation0]]
  $region101: #{tpu_custom_call.1} parent=0
    _
  %s16 = ssub.s32 1, %s14
  %s17 = scalar_select 0, %s16, %s14
  $region1: #{tpu_custom_call.1} parent=0
    #allocation3 [shape = 'u8[262144]{0}', space=vmem, size = 0x40000, scoped, tag = 'input window, operand 0']
    #allocation4 [shape = 's32[2]{0}', space=sflag, size = 0x8, scoped, tag = 'scoped memory for tpu_custom_call.1']
    #allocation5 [shape = 's32[2]{0}', space=sflag, size = 0x8, scoped, tag = 'scoped memory for tpu_custom_call.1']
    #allocation6 [shape = 'u8[16384]{0}', space=vmem, size = 0x4000, scoped, tag = 'input window, operand 5, single buffered']
    #allocation7 [shape = 's32[1]{0}', space=sflag, size = 0x4, scoped, tag = 'scoped memory for tpu_custom_call.1']
    #allocation8 [shape = 'u8[16384]{0}', space=vmem, size = 0x4000, scoped, tag = 'input window, operand 6, single buffered']
    #allocation9 [shape = 'u8[16384]{0}', space=vmem, size = 0x4000, scoped, tag = 'input window, operand 7, single buffered']
    #allocation10 [shape = 's32[1]{0}', space=sflag, size = 0x4, scoped, tag = 'scoped memory for tpu_custom_call.1']
    #allocation11 [shape = 'u8[16384]{0}', space=vmem, size = 0x4000, scoped, tag = 'output window, operand 0']
    %18 = vsyncpa [#allocation4], 0
    %s19 = scalar_lea.sflag [#allocation4], 1
    %20 = vsyncpa %s19, 0
    %21 = vsyncpa [#allocation7], 0
    %22 = vsyncpa [#allocation10], 0
    %23 = vsyncpa [#allocation5], 0
    %s24 = scalar_lea.sflag [#allocation5], 1
    %25 = vsyncpa %s24, 0
    loop: start=0, step=1, limit=4
    $region2: #{tpu_custom_call.1} parent=1 // loop_pre_header
      _
    $region3: #{tpu_custom_call.1} parent=1 // loop_header
      %s27 = sphi 0, %s31
      %p28 = scmp.ge.s32.totalorder %s27, 4
      %s34 = sphi 0, %s46
      %s35 = sphi 0, %s42
      %s36 = sphi 0, %s34
      %s37 = sphi 0, %s35
      %s38 = sphi 0, %s36
      %s39 = sphi 0, %s37
      %s51 = sphi 0, %s53
      %s54 = sphi 0, %s51
      %s55 = sphi 0, %s54
      %s71 = sphi 0, %s55
      %s77 = sphi 0, %s79
      %s80 = sphi 0, %s77
      %s81 = sphi 0, %s80
      %s97 = sphi 0, %s81
      %s105 = sphi 0, %s107
      %s108 = sphi 0, %s105
      %s109 = sphi 0, %s108
      %s125 = sphi 0, %s109
      %s129 = sphi 0, %s129
      %s131 = sphi 0, %s129
      %s132 = sphi 0, %s131
      %s146 = sphi 0, %s132
      %s150 = sphi 0, %s150
      %s152 = sphi 0, %s150
      %s153 = sphi 0, %s152
      %s167 = sphi 0, %s153
      %s171 = sphi 0, %s171
      %s173 = sphi 0, %s171
      %s174 = sphi 0, %s173
      %s188 = sphi 0, %s174
      %s192 = sphi 0, %s192
      %s194 = sphi 0, %s192
      %s195 = sphi 0, %s194
      %s209 = sphi 0, %s195
      %s213 = sphi 0, %s213
      %s215 = sphi 0, %s213
      %s216 = sphi 0, %s215
      %s230 = sphi 0, %s216
      %s234 = sphi 0, %s234
      %s236 = sphi 0, %s234
      %s237 = sphi 0, %s236
      %s251 = sphi 0, %s237
      %s255 = sphi 0, %s255
      %s257 = sphi 0, %s255
      %s258 = sphi 0, %s257
      %s272 = sphi 0, %s258
      %s276 = sphi 0, %s276
      %s278 = sphi 0, %s276
      %s279 = sphi 0, %s278
      %s293 = sphi 0, %s279
      %s297 = sphi 0, %s297
      %s299 = sphi 0, %s297
      %s300 = sphi 0, %s299
      %s314 = sphi 0, %s300
      %s318 = sphi 0, %s318
      %s320 = sphi 0, %s318
      %s321 = sphi 0, %s320
      %s335 = sphi 0, %s321
      %s343 = sphi 0, %s345
      %s346 = sphi 0, %s343
      %s347 = sphi 0, %s346
      %s363 = sphi 0, %s347
    $region4: #{tpu_custom_call.1} parent=1 // loop_header_branch
      %30 = sbr.rel (%p28) target = $region8
    $region5: #{tpu_custom_call.1} parent=1 // loop_body
      %s32 = ssub.s32 %s27, 1
      %s33 = ssub.s32 %s27, 2
      %s40 = sadd.s32 1, %s35
      %p41 = scmp.ge.s32.totalorder %s40, 1
      %s42 = scalar_select %p41, 0, %s40
      %s43 = sadd.s32 1, %s34
      %s44 = scalar_select %p41, %s43, %s34
      %p45 = scmp.ge.s32.totalorder %s44, 2
      %s46 = scalar_select %p45, 0, %s44
      %s47 = ssub.s32 %s34, %s46
      %s48 = ssub.s32 %s35, %s42
      %s49 = sor.u32 %s47, %s48
      %p50 = scmp.eq.s32.totalorder %s49, 0
      %s52 = sadd.s32 %s51, 1
      %s53 = scalar_select %p50, %s51, %s52
      %p56 = pneg %p50
      %p57 = scmp.eq.s32.totalorder %s27, 1
      %p58 = por %p56, %p57
      %p59 = scmp.ne.s32.totalorder %s51, %s54
      %p60 = scmp.eq.s32.totalorder %s27, 0
      %p61 = por %p59, %p60
      %p62 = scmp.ne.s32.totalorder %s51, %s54
      %p63 = scmp.eq.s32.totalorder %s32, 1
      %p64 = por %p62, %p63
      %p65 = scmp.ne.s32.totalorder %s54, %s55
      %p66 = scmp.eq.s32.totalorder %s32, 0
      %p67 = por %p65, %p66
      %p68 = scmp.ne.s32.totalorder %s54, %s55
      %p69 = scmp.eq.s32.totalorder %s33, 1
      %p70 = por %p68, %p69
      %p72 = scmp.ne.s32.totalorder %s55, %s71
      %p73 = scmp.eq.s32.totalorder %s33, 0
      %p74 = por %p72, %p73
      %s75 = ssub.s32 %s34, %s46
      %p76 = scmp.eq.s32.totalorder %s75, 0
      %s78 = sadd.s32 %s77, 1
      %s79 = scalar_select %p76, %s77, %s78
      %p82 = pneg %p76
      %p83 = scmp.eq.s32.totalorder %s27, 1
      %p84 = por %p82, %p83
      %p85 = scmp.ne.s32.totalorder %s77, %s80
      %p86 = scmp.eq.s32.totalorder %s27, 0
      %p87 = por %p85, %p86
      %p88 = scmp.ne.s32.totalorder %s77, %s80
      %p89 = scmp.eq.s32.totalorder %s32, 1
      %p90 = por %p88, %p89
      %p91 = scmp.ne.s32.totalorder %s80, %s81
      %p92 = scmp.eq.s32.totalorder %s32, 0
      %p93 = por %p91, %p92
      %p94 = scmp.ne.s32.totalorder %s80, %s81
      %p95 = scmp.eq.s32.totalorder %s33, 1
      %p96 = por %p94, %p95
      %p98 = scmp.ne.s32.totalorder %s81, %s97
      %p99 = scmp.eq.s32.totalorder %s33, 0
      %p100 = por %p98, %p99
      %s101 = ssub.s32 %s34, %s46
      %s102 = ssub.s32 %s35, %s42
      %s103 = sor.u32 %s101, %s102
      %p104 = scmp.eq.s32.totalorder %s103, 0
      %s106 = sadd.s32 %s105, 1
      %s107 = scalar_select %p104, %s105, %s106
      %p110 = pneg %p104
      %p111 = scmp.eq.s32.totalorder %s27, 1
      %p112 = por %p110, %p111
      %p113 = scmp.ne.s32.totalorder %s105, %s108
      %p114 = scmp.eq.s32.totalorder %s27, 0
      %p115 = por %p113, %p114
      %p116 = scmp.ne.s32.totalorder %s105, %s108
      %p117 = scmp.eq.s32.totalorder %s32, 1
      %p118 = por %p116, %p117
      %p119 = scmp.ne.s32.totalorder %s108, %s109
      %p120 = scmp.eq.s32.totalorder %s32, 0
      %p121 = por %p119, %p120
      %p122 = scmp.ne.s32.totalorder %s108, %s109
      %p123 = scmp.eq.s32.totalorder %s33, 1
      %p124 = por %p122, %p123
      %p126 = scmp.ne.s32.totalorder %s109, %s125
      %p127 = scmp.eq.s32.totalorder %s33, 0
      %p128 = por %p126, %p127
      %s130 = sadd.s32 %s129, 1
      %p133 = scmp.eq.s32.totalorder %s27, 1
      %p134 = scmp.ne.s32.totalorder %s129, %s131
      %p135 = scmp.eq.s32.totalorder %s27, 0
      %p136 = por %p134, %p135
      %p137 = scmp.ne.s32.totalorder %s129, %s131
      %p138 = scmp.eq.s32.totalorder %s32, 1
      %p139 = por %p137, %p138
      %p140 = scmp.ne.s32.totalorder %s131, %s132
      %p141 = scmp.eq.s32.totalorder %s32, 0
      %p142 = por %p140, %p141
      %p143 = scmp.ne.s32.totalorder %s131, %s132
      %p144 = scmp.eq.s32.totalorder %s33, 1
      %p145 = por %p143, %p144
      %p147 = scmp.ne.s32.totalorder %s132, %s146
      %p148 = scmp.eq.s32.totalorder %s33, 0
      %p149 = por %p147, %p148
      %s151 = sadd.s32 %s150, 1
      %p154 = scmp.eq.s32.totalorder %s27, 1
      %p155 = scmp.ne.s32.totalorder %s150, %s152
      %p156 = scmp.eq.s32.totalorder %s27, 0
      %p157 = por %p155, %p156
      %p158 = scmp.ne.s32.totalorder %s150, %s152
      %p159 = scmp.eq.s32.totalorder %s32, 1
      %p160 = por %p158, %p159
      %p161 = scmp.ne.s32.totalorder %s152, %s153
      %p162 = scmp.eq.s32.totalorder %s32, 0
      %p163 = por %p161, %p162
      %p164 = scmp.ne.s32.totalorder %s152, %s153
      %p165 = scmp.eq.s32.totalorder %s33, 1
      %p166 = por %p164, %p165
      %p168 = scmp.ne.s32.totalorder %s153, %s167
      %p169 = scmp.eq.s32.totalorder %s33, 0
      %p170 = por %p168, %p169
      %s172 = sadd.s32 %s171, 1
      %p175 = scmp.eq.s32.totalorder %s27, 1
      %p176 = scmp.ne.s32.totalorder %s171, %s173
      %p177 = scmp.eq.s32.totalorder %s27, 0
      %p178 = por %p176, %p177
      %p179 = scmp.ne.s32.totalorder %s171, %s173
      %p180 = scmp.eq.s32.totalorder %s32, 1
      %p181 = por %p179, %p180
      %p182 = scmp.ne.s32.totalorder %s173, %s174
      %p183 = scmp.eq.s32.totalorder %s32, 0
      %p184 = por %p182, %p183
      %p185 = scmp.ne.s32.totalorder %s173, %s174
      %p186 = scmp.eq.s32.totalorder %s33, 1
      %p187 = por %p185, %p186
      %p189 = scmp.ne.s32.totalorder %s174, %s188
      %p190 = scmp.eq.s32.totalorder %s33, 0
      %p191 = por %p189, %p190
      %s193 = sadd.s32 %s192, 1
      %p196 = scmp.eq.s32.totalorder %s27, 1
      %p197 = scmp.ne.s32.totalorder %s192, %s194
      %p198 = scmp.eq.s32.totalorder %s27, 0
      %p199 = por %p197, %p198
      %p200 = scmp.ne.s32.totalorder %s192, %s194
      %p201 = scmp.eq.s32.totalorder %s32, 1
      %p202 = por %p200, %p201
      %p203 = scmp.ne.s32.totalorder %s194, %s195
      %p204 = scmp.eq.s32.totalorder %s32, 0
      %p205 = por %p203, %p204
      %p206 = scmp.ne.s32.totalorder %s194, %s195
      %p207 = scmp.eq.s32.totalorder %s33, 1
      %p208 = por %p206, %p207
      %p210 = scmp.ne.s32.totalorder %s195, %s209
      %p211 = scmp.eq.s32.totalorder %s33, 0
      %p212 = por %p210, %p211
      %s214 = sadd.s32 %s213, 1
      %p217 = scmp.eq.s32.totalorder %s27, 1
      %p218 = scmp.ne.s32.totalorder %s213, %s215
      %p219 = scmp.eq.s32.totalorder %s27, 0
      %p220 = por %p218, %p219
      %p221 = scmp.ne.s32.totalorder %s213, %s215
      %p222 = scmp.eq.s32.totalorder %s32, 1
      %p223 = por %p221, %p222
      %p224 = scmp.ne.s32.totalorder %s215, %s216
      %p225 = scmp.eq.s32.totalorder %s32, 0
      %p226 = por %p224, %p225
      %p227 = scmp.ne.s32.totalorder %s215, %s216
      %p228 = scmp.eq.s32.totalorder %s33, 1
      %p229 = por %p227, %p228
      %p231 = scmp.ne.s32.totalorder %s216, %s230
      %p232 = scmp.eq.s32.totalorder %s33, 0
      %p233 = por %p231, %p232
      %s235 = sadd.s32 %s234, 1
      %p238 = scmp.eq.s32.totalorder %s27, 1
      %p239 = scmp.ne.s32.totalorder %s234, %s236
      %p240 = scmp.eq.s32.totalorder %s27, 0
      %p241 = por %p239, %p240
      %p242 = scmp.ne.s32.totalorder %s234, %s236
      %p243 = scmp.eq.s32.totalorder %s32, 1
      %p244 = por %p242, %p243
      %p245 = scmp.ne.s32.totalorder %s236, %s237
      %p246 = scmp.eq.s32.totalorder %s32, 0
      %p247 = por %p245, %p246
      %p248 = scmp.ne.s32.totalorder %s236, %s237
      %p249 = scmp.eq.s32.totalorder %s33, 1
      %p250 = por %p248, %p249
      %p252 = scmp.ne.s32.totalorder %s237, %s251
      %p253 = scmp.eq.s32.totalorder %s33, 0
      %p254 = por %p252, %p253
      %s256 = sadd.s32 %s255, 1
      %p259 = scmp.eq.s32.totalorder %s27, 1
      %p260 = scmp.ne.s32.totalorder %s255, %s257
      %p261 = scmp.eq.s32.totalorder %s27, 0
      %p262 = por %p260, %p261
      %p263 = scmp.ne.s32.totalorder %s255, %s257
      %p264 = scmp.eq.s32.totalorder %s32, 1
      %p265 = por %p263, %p264
      %p266 = scmp.ne.s32.totalorder %s257, %s258
      %p267 = scmp.eq.s32.totalorder %s32, 0
      %p268 = por %p266, %p267
      %p269 = scmp.ne.s32.totalorder %s257, %s258
      %p270 = scmp.eq.s32.totalorder %s33, 1
      %p271 = por %p269, %p270
      %p273 = scmp.ne.s32.totalorder %s258, %s272
      %p274 = scmp.eq.s32.totalorder %s33, 0
      %p275 = por %p273, %p274
      %s277 = sadd.s32 %s276, 1
      %p280 = scmp.eq.s32.totalorder %s27, 1
      %p281 = scmp.ne.s32.totalorder %s276, %s278
      %p282 = scmp.eq.s32.totalorder %s27, 0
      %p283 = por %p281, %p282
      %p284 = scmp.ne.s32.totalorder %s276, %s278
      %p285 = scmp.eq.s32.totalorder %s32, 1
      %p286 = por %p284, %p285
      %p287 = scmp.ne.s32.totalorder %s278, %s279
      %p288 = scmp.eq.s32.totalorder %s32, 0
      %p289 = por %p287, %p288
      %p290 = scmp.ne.s32.totalorder %s278, %s279
      %p291 = scmp.eq.s32.totalorder %s33, 1
      %p292 = por %p290, %p291
      %p294 = scmp.ne.s32.totalorder %s279, %s293
      %p295 = scmp.eq.s32.totalorder %s33, 0
      %p296 = por %p294, %p295
      %s298 = sadd.s32 %s297, 1
      %p301 = scmp.eq.s32.totalorder %s27, 1
      %p302 = scmp.ne.s32.totalorder %s297, %s299
      %p303 = scmp.eq.s32.totalorder %s27, 0
      %p304 = por %p302, %p303
      %p305 = scmp.ne.s32.totalorder %s297, %s299
      %p306 = scmp.eq.s32.totalorder %s32, 1
      %p307 = por %p305, %p306
      %p308 = scmp.ne.s32.totalorder %s299, %s300
      %p309 = scmp.eq.s32.totalorder %s32, 0
      %p310 = por %p308, %p309
      %p311 = scmp.ne.s32.totalorder %s299, %s300
      %p312 = scmp.eq.s32.totalorder %s33, 1
      %p313 = por %p311, %p312
      %p315 = scmp.ne.s32.totalorder %s300, %s314
      %p316 = scmp.eq.s32.totalorder %s33, 0
      %p317 = por %p315, %p316
      %s319 = sadd.s32 %s318, 1
      %p322 = scmp.eq.s32.totalorder %s27, 1
      %p323 = scmp.ne.s32.totalorder %s318, %s320
      %p324 = scmp.eq.s32.totalorder %s27, 0
      %p325 = por %p323, %p324
      %p326 = scmp.ne.s32.totalorder %s318, %s320
      %p327 = scmp.eq.s32.totalorder %s32, 1
      %p328 = por %p326, %p327
      %p329 = scmp.ne.s32.totalorder %s320, %s321
      %p330 = scmp.eq.s32.totalorder %s32, 0
      %p331 = por %p329, %p330
      %p332 = scmp.ne.s32.totalorder %s320, %s321
      %p333 = scmp.eq.s32.totalorder %s33, 1
      %p334 = por %p332, %p333
      %p336 = scmp.ne.s32.totalorder %s321, %s335
      %p337 = scmp.eq.s32.totalorder %s33, 0
      %p338 = por %p336, %p337
      %s339 = ssub.s32 %s34, %s46
      %s340 = ssub.s32 %s35, %s42
      %s341 = sor.u32 %s339, %s340
      %p342 = scmp.eq.s32.totalorder %s341, 0
      %s344 = sadd.s32 %s343, 1
      %s345 = scalar_select %p342, %s343, %s344
      %p348 = pneg %p342
      %p349 = scmp.eq.s32.totalorder %s27, 1
      %p350 = por %p348, %p349
      %p351 = scmp.ne.s32.totalorder %s343, %s346
      %p352 = scmp.eq.s32.totalorder %s27, 0
      %p353 = por %p351, %p352
      %p354 = scmp.ne.s32.totalorder %s343, %s346
      %p355 = scmp.eq.s32.totalorder %s32, 1
      %p356 = por %p354, %p355
      %p357 = scmp.ne.s32.totalorder %s346, %s347
      %p358 = scmp.eq.s32.totalorder %s32, 0
      %p359 = por %p357, %p358
      %p360 = scmp.ne.s32.totalorder %s346, %s347
      %p361 = scmp.eq.s32.totalorder %s33, 1
      %p362 = por %p360, %p361
      %p364 = scmp.ne.s32.totalorder %s347, %s363
      %p365 = scmp.eq.s32.totalorder %s33, 0
      %p366 = por %p364, %p365
      %p367 = scmp.le.s32.totalorder 1, %s27
      %p368 = scmp.lt.s32.totalorder %s27, 3
      %p369 = pnand %p367, %p368
      %p370 = pneg %p369
      // Predicated region
      $region9: #{tpu_custom_call.1} parent=5 // pred_check
        _
      $region10: #{tpu_custom_call.1} parent=5 // pred_check_branch
        %372 = sbr.rel (%p369) target = $region12
      $region11: #{tpu_custom_call.1} parent=5 // pred_region
        %s373 = ssub.s32 %s27, 1
        // Predicated region
        $region13: #{tpu_custom_call.1} parent=11 // pred_check
          %p374 = pneg %p142
        $region14: #{tpu_custom_call.1} parent=11 // pred_check_branch
          %376 = sbr.rel (%p374) target = $region16
        $region15: #{tpu_custom_call.1} parent=11 // pred_region
          _
        $region16: #{tpu_custom_call.1} parent=11 // pred_fallthru
          _
        // Predicated region
        $region17: #{tpu_custom_call.1} parent=11 // pred_check
          %p377 = pneg %p163
        $region18: #{tpu_custom_call.1} parent=11 // pred_check_branch
          %379 = sbr.rel (%p377) target = $region20
        $region19: #{tpu_custom_call.1} parent=11 // pred_region
          _
        $region20: #{tpu_custom_call.1} parent=11 // pred_fallthru
          _
        // Predicated region
        $region21: #{tpu_custom_call.1} parent=11 // pred_check
          %p380 = pneg %p184
        $region22: #{tpu_custom_call.1} parent=11 // pred_check_branch
          %382 = sbr.rel (%p380) target = $region24
        $region23: #{tpu_custom_call.1} parent=11 // pred_region
          %384 = vsyncadd [#allocation7], 0
          %s385 = sshll.u32 %s5, 4
          %s386 = int_to_ptr.hbm [resolvable:$true] %s385
          %s387 = sshll.u32 [#allocation6], 4
          %s388 = int_to_ptr.vmem [resolvable:$true] %s387
          %393 = dma.hbm_to_vmem [thread:$0]  %s386, 512, %s388, [#allocation7], 128, 128, 8
        $region24: #{tpu_custom_call.1} parent=11 // pred_fallthru
          _
        // Predicated region
        $region25: #{tpu_custom_call.1} parent=11 // pred_check
          %p394 = pneg %p205
        $region26: #{tpu_custom_call.1} parent=11 // pred_check_branch
          %396 = sbr.rel (%p394) target = $region28
        $region27: #{tpu_custom_call.1} parent=11 // pred_region
          %398 = vsyncadd [#allocation7], 0
          %s399 = sshll.u32 %s6, 4
          %s400 = int_to_ptr.hbm [resolvable:$true] %s399
          %s401 = sshll.u32 [#allocation8], 4
          %s402 = int_to_ptr.vmem [resolvable:$true] %s401
          %407 = dma.hbm_to_vmem [thread:$0]  %s400, 512, %s402, [#allocation7], 128, 128, 8
        $region28: #{tpu_custom_call.1} parent=11 // pred_fallthru
          _
        // Predicated region
        $region29: #{tpu_custom_call.1} parent=11 // pred_check
          %p408 = pneg %p226
        $region30: #{tpu_custom_call.1} parent=11 // pred_check_branch
          %410 = sbr.rel (%p408) target = $region32
        $region31: #{tpu_custom_call.1} parent=11 // pred_region
          %412 = vsyncadd [#allocation10], 0
          %s413 = sshll.u32 %s7, 4
          %s414 = int_to_ptr.hbm [resolvable:$true] %s413
          %s415 = sshll.u32 [#allocation9], 4
          %s416 = int_to_ptr.vmem [resolvable:$true] %s415
          %421 = dma.hbm_to_vmem [thread:$0]  %s414, 512, %s416, [#allocation10], 128, 128, 8
        $region32: #{tpu_custom_call.1} parent=11 // pred_fallthru
          _
        // Predicated region
        $region33: #{tpu_custom_call.1} parent=11 // pred_check
          %p422 = pneg %p247
        $region34: #{tpu_custom_call.1} parent=11 // pred_check_branch
          %424 = sbr.rel (%p422) target = $region36
        $region35: #{tpu_custom_call.1} parent=11 // pred_region
          _
        $region36: #{tpu_custom_call.1} parent=11 // pred_fallthru
          _
        // Predicated region
        $region37: #{tpu_custom_call.1} parent=11 // pred_check
          %p425 = pneg %p268
        $region38: #{tpu_custom_call.1} parent=11 // pred_check_branch
          %427 = sbr.rel (%p425) target = $region40
        $region39: #{tpu_custom_call.1} parent=11 // pred_region
          _
        $region40: #{tpu_custom_call.1} parent=11 // pred_fallthru
          _
        // Predicated region
        $region41: #{tpu_custom_call.1} parent=11 // pred_check
          %p428 = pneg %p289
        $region42: #{tpu_custom_call.1} parent=11 // pred_check_branch
          %430 = sbr.rel (%p428) target = $region44
        $region43: #{tpu_custom_call.1} parent=11 // pred_region
          _
        $region44: #{tpu_custom_call.1} parent=11 // pred_fallthru
          _
        // Predicated region
        $region45: #{tpu_custom_call.1} parent=11 // pred_check
          %p431 = pneg %p310
        $region46: #{tpu_custom_call.1} parent=11 // pred_check_branch
          %433 = sbr.rel (%p431) target = $region48
        $region47: #{tpu_custom_call.1} parent=11 // pred_region
          _
        $region48: #{tpu_custom_call.1} parent=11 // pred_fallthru
          _
        // Predicated region
        $region49: #{tpu_custom_call.1} parent=11 // pred_check
          %p434 = pneg %p331
        $region50: #{tpu_custom_call.1} parent=11 // pred_check_branch
          %436 = sbr.rel (%p434) target = $region52
        $region51: #{tpu_custom_call.1} parent=11 // pred_region
          _
        $region52: #{tpu_custom_call.1} parent=11 // pred_fallthru
          _
      $region12: #{tpu_custom_call.1} parent=5 // pred_fallthru
        _
      %p437 = scmp.lt.s32.totalorder %s27, 2
      // Predicated region
      $region53: #{tpu_custom_call.1} parent=5 // pred_check
        %p438 = pneg %p437
      $region54: #{tpu_custom_call.1} parent=5 // pred_check_branch
        %440 = sbr.rel (%p438) target = $region56
      $region55: #{tpu_custom_call.1} parent=5 // pred_region
        // Predicated region
        $region57: #{tpu_custom_call.1} parent=55 // pred_check
          %p441 = pneg %p61
        $region58: #{tpu_custom_call.1} parent=55 // pred_check_branch
          %443 = sbr.rel (%p441) target = $region60
        $region59: #{tpu_custom_call.1} parent=55 // pred_region
          %s444 = sand.u32 %s51, 1
          %s445 = scalar_lea.sflag [#allocation4], %s444
          %s446 = sand.u32 %s51, 1
          %s447 = smul.addr %s446, 256
          %s448 = scalar_lea.vmem [#allocation3], %s447
          %s449 = smul.u32 16, %s35
          %451 = vsyncadd %s445, 0
          %s452 = smul.addr %s449, 2
          %s453 = smul.addr %s34, 32
          %s454 = sadd.s32 %s452, %s453
          %s455 = smul.addr %s454, 8
          %s456 = scalar_lea.hbm %s0, %s455
          %s457 = sshll.u32 %s456, 4
          %s458 = int_to_ptr.hbm [resolvable:$true] %s457
          %s459 = sshll.u32 %s448, 4
          %s460 = int_to_ptr.vmem [resolvable:$true] %s459
          %465 = dma.hbm_to_vmem [thread:$0]  %s458, 4096, %s460, %s445, 128, 128, 8
        $region60: #{tpu_custom_call.1} parent=55 // pred_fallthru
          _
        // Predicated region
        $region61: #{tpu_custom_call.1} parent=55 // pred_check
          %p466 = pneg %p87
        $region62: #{tpu_custom_call.1} parent=55 // pred_check_branch
          %468 = sbr.rel (%p466) target = $region64
        $region63: #{tpu_custom_call.1} parent=55 // pred_region
          %p469 = scmp.lt.s32.totalorder %s34, 1
          %s470 = scalar_select %p469, %s34, 1
          %s471 = smul.addr %s470, 2
          %s472 = smul.addr %s471, 8
          %s473 = scalar_lea.vmem %s1, %s472
        $region64: #{tpu_custom_call.1} parent=55 // pred_fallthru
          _
        // Predicated region
        $region65: #{tpu_custom_call.1} parent=55 // pred_check
          %p474 = pneg %p115
        $region66: #{tpu_custom_call.1} parent=55 // pred_check_branch
          %476 = sbr.rel (%p474) target = $region68
        $region67: #{tpu_custom_call.1} parent=55 // pred_region
          %s477 = smul.u32 2, %s35
          %p478 = scmp.lt.s32.totalorder %s34, 1
          %s479 = scalar_select %p478, %s34, 1
          %p480 = scmp.lt.s32.totalorder %s477, 1
          %s481 = scalar_select %p480, %s477, 1
          %s482 = smul.addr %s479, 2
          %s483 = sadd.s32 %s481, %s482
          %s484 = smul.addr %s483, 8
          %s485 = scalar_lea.vmem %s2, %s484
          %s486 = smul.u32 2, %s35
        $region68: #{tpu_custom_call.1} parent=55 // pred_fallthru
          _
      $region56: #{tpu_custom_call.1} parent=5 // pred_fallthru
        _
      %p487 = scmp.le.s32.totalorder 1, %s27
      %p488 = scmp.lt.s32.totalorder %s27, 3
      %p489 = pnand %p487, %p488
      %p490 = pneg %p489
      // Predicated region
      $region69: #{tpu_custom_call.1} parent=5 // pred_check
        _
      $region70: #{tpu_custom_call.1} parent=5 // pred_check_branch
        %492 = sbr.rel (%p489) target = $region72
      $region71: #{tpu_custom_call.1} parent=5 // pred_region
        %s493 = ssub.s32 %s27, 1
        %s494 = sand.u32 %s54, 1
        %s495 = scalar_lea.sflag [#allocation4], %s494
        %s496 = sand.u32 %s54, 1
        %s497 = smul.addr %s496, 256
        %s498 = scalar_lea.vmem [#allocation3], %s497
        // Predicated region
        $region73: #{tpu_custom_call.1} parent=71 // pred_check
          %p499 = pneg %p67
        $region74: #{tpu_custom_call.1} parent=71 // pred_check_branch
          %501 = sbr.rel (%p499) target = $region76
        $region75: #{tpu_custom_call.1} parent=71 // pred_region
          %503 = dma.done %s495, 4096
        $region76: #{tpu_custom_call.1} parent=71 // pred_fallthru
          _
        // Predicated region
        $region77: #{tpu_custom_call.1} parent=71 // pred_check
          %p504 = pneg %p184
        $region78: #{tpu_custom_call.1} parent=71 // pred_check_branch
          %506 = sbr.rel (%p504) target = $region80
        $region79: #{tpu_custom_call.1} parent=71 // pred_region
          %508 = dma.done [#allocation7], 512
        $region80: #{tpu_custom_call.1} parent=71 // pred_fallthru
          _
        // Predicated region
        $region81: #{tpu_custom_call.1} parent=71 // pred_check
          %p509 = pneg %p205
        $region82: #{tpu_custom_call.1} parent=71 // pred_check_branch
          %511 = sbr.rel (%p509) target = $region84
        $region83: #{tpu_custom_call.1} parent=71 // pred_region
          %513 = dma.done [#allocation7], 512
        $region84: #{tpu_custom_call.1} parent=71 // pred_fallthru
          _
        // Predicated region
        $region85: #{tpu_custom_call.1} parent=71 // pred_check
          %p514 = pneg %p226
        $region86: #{tpu_custom_call.1} parent=71 // pred_check_branch
          %516 = sbr.rel (%p514) target = $region88
        $region87: #{tpu_custom_call.1} parent=71 // pred_region
          %518 = dma.done [#allocation10], 512
        $region88: #{tpu_custom_call.1} parent=71 // pred_fallthru
          _
        %s519 = sand.u32 %s54, 1
        %s520 = scalar_lea.sflag [#allocation4], %s519
        %s521 = sand.u32 %s54, 1
        %s522 = smul.addr %s521, 256
        %s523 = scalar_lea.vmem [#allocation3], %s522
        %p524 = pneg %p67
        %p525 = pneg %p64
        %p526 = scmp.lt.s32.totalorder %s36, 1
        %s527 = scalar_select %p526, %s36, 1
        %s528 = smul.addr %s527, 2
        %s529 = smul.addr %s528, 8
        %s530 = scalar_lea.vmem %s1, %s529
        %p531 = pneg %p93
        %p532 = pneg %p90
        %s533 = smul.u32 2, %s37
        %p534 = scmp.lt.s32.totalorder %s36, 1
        %s535 = scalar_select %p534, %s36, 1
        %p536 = scmp.lt.s32.totalorder %s533, 1
        %s537 = scalar_select %p536, %s533, 1
        %s538 = smul.addr %s535, 2
        %s539 = sadd.s32 %s537, %s538
        %s540 = smul.addr %s539, 8
        %s541 = scalar_lea.vmem %s2, %s540
        %p542 = pneg %p121
        %p543 = pneg %p118
        %p544 = pneg %p142
        %p545 = pneg %p139
        %p546 = pneg %p163
        %p547 = pneg %p160
        %p548 = pneg %p184
        %p549 = pneg %p181
        %p550 = pneg %p205
        %p551 = pneg %p202
        %p552 = pneg %p226
        %p553 = pneg %p223
        %p554 = pneg %p247
        %p555 = pneg %p244
        %p556 = pneg %p268
        %p557 = pneg %p265
        %p558 = pneg %p289
        %p559 = pneg %p286
        %p560 = pneg %p310
        %p561 = pneg %p307
        %p562 = pneg %p331
        %p563 = pneg %p328
        %p564 = pneg %p359
        %p565 = pneg %p356
        %s566 = sand.u32 %s346, 1
        %s567 = scalar_lea.sflag [#allocation5], %s566
        %s568 = sand.u32 %s346, 1
        %s569 = smul.addr %s568, 16
        %s570 = scalar_lea.vmem [#allocation11], %s569
        %s571 = smul.u32 16, %s37
        %p572 = scmp.lt.s32.totalorder %s36, 1
        %s573 = scalar_select %p572, %s36, 1
        %s574 = smul.addr %s573, 2
        %s575 = smul.addr %s574, 8
        %s576 = scalar_lea.vmem %s1, %s575
        %s577 = smul.u32 2, %s37
        %p578 = scmp.lt.s32.totalorder %s36, 1
        %s579 = scalar_select %p578, %s36, 1
        %p580 = scmp.lt.s32.totalorder %s577, 1
        %s581 = scalar_select %p580, %s577, 1
        %s582 = smul.addr %s579, 2
        %s583 = sadd.s32 %s581, %s582
        %s584 = smul.addr %s583, 8
        %s585 = scalar_lea.vmem %s2, %s584
        %s586 = smul.u32 2, %s37
        %s587 = smul.u32 2, %s37
        %v588 = vld [vmem:[%s576] sm:$0xff]
        %v589 = vld [vmem:[%s576 + $0x8] sm:$0xff]
        %v590 = vld [vmem:[%s585] sm:$0xff]
        %v591 = vld [vmem:[%s585 + $0x8] sm:$0xff]
        %v592 = vld [vmem:[%s3] sm:$0xff]
        %v593 = vld [vmem:[%s3 + $0x8] sm:$0xff]
        %v594 = vld [vmem:[%s3 + $0x10] sm:$0xff]
        %v595 = vld [vmem:[%s3 + $0x18] sm:$0xff]
        %vm596 = vcmask 261120
        %v598 = vsel %vm596, %v588, 0
        %v601 = vsel %vm596, %v589, 0
        %603 = vmatpush.msra.mxu0 0.0
        %604 = vmatpush.msra.mxu0 0.0
        %605 = vmatpush.msra.mxu0 0.0
        %606 = vmatpush.msra.mxu0 0.0
        %607 = vmatpush.msra.mxu0 0.0
        %608 = vmatpush.msra.mxu0 0.0
        %609 = vmatpush.msra.mxu0 0.0
        %610 = vmatpush.msra.mxu0 0.0
        %611 = vmatpush.msra.mxu0 0.0
        %612 = vmatpush.msra.mxu0 0.0
        %613 = vmatpush.msra.mxu0 0.0
        %614 = vmatpush.msra.mxu0 0.0
        %615 = vmatpush.msra.mxu0 %v595
        %616 = vmatpush.msra.mxu0 %v594
        %617 = vmatpush.msra.mxu0 %v593
        %618 = vmatpush.msra.mxu0 %v592
        %619 = vmatmul.f32.gmra.mxu0 %v598
        %v620 = vpop.f32.mrf.mxu0
        %v621 = vadd.f32 0.0, %v620
        %622 = vmatmul.f32.gmra.mxu0 %v601
        %v623 = vpop.f32.mrf.mxu0
        %v624 = vadd.f32 0.0, %v623
        %625 = vdwg.mxu0
        %v626 = vld [vmem:[%s498] sm:$0xff]
        %v627 = vld [vmem:[%s498 + $0x8] sm:$0xff]
        %v628 = vld [vmem:[%s498 + $0x10] sm:$0xff]
        %v629 = vld [vmem:[%s498 + $0x18] sm:$0xff]
        %v630 = vld [vmem:[%s498 + $0x20] sm:$0xff]
        %v631 = vld [vmem:[%s498 + $0x28] sm:$0xff]
        %v632 = vld [vmem:[%s498 + $0x30] sm:$0xff]
        %v633 = vld [vmem:[%s498 + $0x38] sm:$0xff]
        %v634 = vld [vmem:[%s498 + $0x40] sm:$0xff]
        %v635 = vld [vmem:[%s498 + $0x48] sm:$0xff]
        %v636 = vld [vmem:[%s498 + $0x50] sm:$0xff]
        %v637 = vld [vmem:[%s498 + $0x58] sm:$0xff]
        %v638 = vld [vmem:[%s498 + $0x60] sm:$0xff]
        %v639 = vld [vmem:[%s498 + $0x68] sm:$0xff]
        %v640 = vld [vmem:[%s498 + $0x70] sm:$0xff]
        %v641 = vld [vmem:[%s498 + $0x78] sm:$0xff]
        %v642 = vld [vmem:[%s498 + $0x80] sm:$0xff]
        %v643 = vld [vmem:[%s498 + $0x88] sm:$0xff]
        %v644 = vld [vmem:[%s498 + $0x90] sm:$0xff]
        %v645 = vld [vmem:[%s498 + $0x98] sm:$0xff]
        %v646 = vld [vmem:[%s498 + $0xa0] sm:$0xff]
        %v647 = vld [vmem:[%s498 + $0xa8] sm:$0xff]
        %v648 = vld [vmem:[%s498 + $0xb0] sm:$0xff]
        %v649 = vld [vmem:[%s498 + $0xb8] sm:$0xff]
        %v650 = vld [vmem:[%s498 + $0xc0] sm:$0xff]
        %v651 = vld [vmem:[%s498 + $0xc8] sm:$0xff]
        %v652 = vld [vmem:[%s498 + $0xd0] sm:$0xff]
        %v653 = vld [vmem:[%s498 + $0xd8] sm:$0xff]
        %v654 = vld [vmem:[%s498 + $0xe0] sm:$0xff]
        %v655 = vld [vmem:[%s498 + $0xe8] sm:$0xff]
        %v656 = vld [vmem:[%s498 + $0xf0] sm:$0xff]
        %v657 = vld [vmem:[%s498 + $0xf8] sm:$0xff]
        %v658 = vld [vmem:[%s4] sm:$0xff]
        %v659 = vld [vmem:[%s4 + $0x8] sm:$0xff]
        %v660 = vld [vmem:[%s4 + $0x10] sm:$0xff]
        %v661 = vld [vmem:[%s4 + $0x18] sm:$0xff]
        %v663 = vsel %vm596, %v626, 0
        %v666 = vsel %vm596, %v627, 0
        %v669 = vsel %vm596, %v628, 0
        %v672 = vsel %vm596, %v629, 0
        %v675 = vsel %vm596, %v630, 0
        %v678 = vsel %vm596, %v631, 0
        %v681 = vsel %vm596, %v632, 0
        %v684 = vsel %vm596, %v633, 0
        %v687 = vsel %vm596, %v634, 0
        %v690 = vsel %vm596, %v635, 0
        %v693 = vsel %vm596, %v636, 0
        %v696 = vsel %vm596, %v637, 0
        %v699 = vsel %vm596, %v638, 0
        %v702 = vsel %vm596, %v639, 0
        %v705 = vsel %vm596, %v640, 0
        %v708 = vsel %vm596, %v641, 0
        %v711 = vsel %vm596, %v642, 0
        %v714 = vsel %vm596, %v643, 0
        %v717 = vsel %vm596, %v644, 0
        %v720 = vsel %vm596, %v645, 0
        %v723 = vsel %vm596, %v646, 0
        %v726 = vsel %vm596, %v647, 0
        %v729 = vsel %vm596, %v648, 0
        %v732 = vsel %vm596, %v649, 0
        %v735 = vsel %vm596, %v650, 0
        %v738 = vsel %vm596, %v651, 0
        %v741 = vsel %vm596, %v652, 0
        %v744 = vsel %vm596, %v653, 0
        %v747 = vsel %vm596, %v654, 0
        %v750 = vsel %vm596, %v655, 0
        %v753 = vsel %vm596, %v656, 0
        %v756 = vsel %vm596, %v657, 0
        %758 = vmatpush.msra.mxu0 0.0
        %759 = vmatpush.msra.mxu0 0.0
        %760 = vmatpush.msra.mxu0 0.0
        %761 = vmatpush.msra.mxu0 0.0
        %762 = vmatpush.msra.mxu0 0.0
        %763 = vmatpush.msra.mxu0 0.0
        %764 = vmatpush.msra.mxu0 0.0
        %765 = vmatpush.msra.mxu0 0.0
        %766 = vmatpush.msra.mxu0 0.0
        %767 = vmatpush.msra.mxu0 0.0
        %768 = vmatpush.msra.mxu0 0.0
        %769 = vmatpush.msra.mxu0 0.0
        %770 = vmatpush.msra.mxu0 %v661
        %771 = vmatpush.msra.mxu0 %v660
        %772 = vmatpush.msra.mxu0 %v659
        %773 = vmatpush.msra.mxu0 %v658
        %774 = vmatmul.f32.gmra.mxu0 %v663
        %v775 = vpop.f32.mrf.mxu0
        %v776 = vadd.f32 0.0, %v775
        %777 = vmatmul.f32.gmra.mxu0 %v666
        %v778 = vpop.f32.mrf.mxu0
        %v779 = vadd.f32 0.0, %v778
        %780 = vmatmul.f32.gmra.mxu0 %v669
        %v781 = vpop.f32.mrf.mxu0
        %v782 = vadd.f32 0.0, %v781
        %783 = vmatmul.f32.gmra.mxu0 %v672
        %v784 = vpop.f32.mrf.mxu0
        %v785 = vadd.f32 0.0, %v784
        %786 = vmatmul.f32.gmra.mxu0 %v675
        %v787 = vpop.f32.mrf.mxu0
        %v788 = vadd.f32 0.0, %v787
        %789 = vmatmul.f32.gmra.mxu0 %v678
        %v790 = vpop.f32.mrf.mxu0
        %v791 = vadd.f32 0.0, %v790
        %792 = vmatmul.f32.gmra.mxu0 %v681
        %v793 = vpop.f32.mrf.mxu0
        %v794 = vadd.f32 0.0, %v793
        %795 = vmatmul.f32.gmra.mxu0 %v684
        %v796 = vpop.f32.mrf.mxu0
        %v797 = vadd.f32 0.0, %v796
        %798 = vmatmul.f32.gmra.mxu0 %v687
        %v799 = vpop.f32.mrf.mxu0
        %v800 = vadd.f32 0.0, %v799
        %801 = vmatmul.f32.gmra.mxu0 %v690
        %v802 = vpop.f32.mrf.mxu0
        %v803 = vadd.f32 0.0, %v802
        %804 = vmatmul.f32.gmra.mxu0 %v693
        %v805 = vpop.f32.mrf.mxu0
        %v806 = vadd.f32 0.0, %v805
        %807 = vmatmul.f32.gmra.mxu0 %v696
        %v808 = vpop.f32.mrf.mxu0
        %v809 = vadd.f32 0.0, %v808
        %810 = vmatmul.f32.gmra.mxu0 %v699
        %v811 = vpop.f32.mrf.mxu0
        %v812 = vadd.f32 0.0, %v811
        %813 = vmatmul.f32.gmra.mxu0 %v702
        %v814 = vpop.f32.mrf.mxu0
        %v815 = vadd.f32 0.0, %v814
        %816 = vmatmul.f32.gmra.mxu0 %v705
        %v817 = vpop.f32.mrf.mxu0
        %v818 = vadd.f32 0.0, %v817
        %819 = vmatmul.f32.gmra.mxu0 %v708
        %v820 = vpop.f32.mrf.mxu0
        %v821 = vadd.f32 0.0, %v820
        %822 = vmatmul.f32.gmra.mxu0 %v711
        %v823 = vpop.f32.mrf.mxu0
        %v824 = vadd.f32 0.0, %v823
        %825 = vmatmul.f32.gmra.mxu0 %v714
        %v826 = vpop.f32.mrf.mxu0
        %v827 = vadd.f32 0.0, %v826
        %828 = vmatmul.f32.gmra.mxu0 %v717
        %v829 = vpop.f32.mrf.mxu0
        %v830 = vadd.f32 0.0, %v829
        %831 = vmatmul.f32.gmra.mxu0 %v720
        %v832 = vpop.f32.mrf.mxu0
        %v833 = vadd.f32 0.0, %v832
        %834 = vmatmul.f32.gmra.mxu0 %v723
        %v835 = vpop.f32.mrf.mxu0
        %v836 = vadd.f32 0.0, %v835
        %837 = vmatmul.f32.gmra.mxu0 %v726
        %v838 = vpop.f32.mrf.mxu0
        %v839 = vadd.f32 0.0, %v838
        %840 = vmatmul.f32.gmra.mxu0 %v729
        %v841 = vpop.f32.mrf.mxu0
        %v842 = vadd.f32 0.0, %v841
        %843 = vmatmul.f32.gmra.mxu0 %v732
        %v844 = vpop.f32.mrf.mxu0
        %v845 = vadd.f32 0.0, %v844
        %846 = vmatmul.f32.gmra.mxu0 %v735
        %v847 = vpop.f32.mrf.mxu0
        %v848 = vadd.f32 0.0, %v847
        %849 = vmatmul.f32.gmra.mxu0 %v738
        %v850 = vpop.f32.mrf.mxu0
        %v851 = vadd.f32 0.0, %v850
        %852 = vmatmul.f32.gmra.mxu0 %v741
        %v853 = vpop.f32.mrf.mxu0
        %v854 = vadd.f32 0.0, %v853
        %855 = vmatmul.f32.gmra.mxu0 %v744
        %v856 = vpop.f32.mrf.mxu0
        %v857 = vadd.f32 0.0, %v856
        %858 = vmatmul.f32.gmra.mxu0 %v747
        %v859 = vpop.f32.mrf.mxu0
        %v860 = vadd.f32 0.0, %v859
        %861 = vmatmul.f32.gmra.mxu0 %v750
        %v862 = vpop.f32.mrf.mxu0
        %v863 = vadd.f32 0.0, %v862
        %864 = vmatmul.f32.gmra.mxu0 %v753
        %v865 = vpop.f32.mrf.mxu0
        %v866 = vadd.f32 0.0, %v865
        %867 = vmatmul.f32.gmra.mxu0 %v756
        %v868 = vpop.f32.mrf.mxu0
        %v869 = vadd.f32 0.0, %v868
        %870 = vdwg.mxu0
        %903 = vset.pattern.permute.xlu0 0
        %904 = vperm.xlu0 %903, %v776
        %v905 = vpop.permute.xlu0 %904
        %906 = vset.pattern.permute.xlu0 0
        %907 = vperm.xlu0 %906, %v779
        %v908 = vpop.permute.xlu0 %907
        %909 = vset.pattern.permute.xlu0 0
        %910 = vperm.xlu0 %909, %v782
        %v911 = vpop.permute.xlu0 %910
        %912 = vset.pattern.permute.xlu0 0
        %913 = vperm.xlu0 %912, %v785
        %v914 = vpop.permute.xlu0 %913
        %915 = vset.pattern.permute.xlu0 0
        %916 = vperm.xlu0 %915, %v788
        %v917 = vpop.permute.xlu0 %916
        %918 = vset.pattern.permute.xlu0 0
        %919 = vperm.xlu0 %918, %v791
        %v920 = vpop.permute.xlu0 %919
        %921 = vset.pattern.permute.xlu0 0
        %922 = vperm.xlu0 %921, %v794
        %v923 = vpop.permute.xlu0 %922
        %924 = vset.pattern.permute.xlu0 0
        %925 = vperm.xlu0 %924, %v797
        %v926 = vpop.permute.xlu0 %925
        %927 = vset.pattern.permute.xlu0 0
        %928 = vperm.xlu0 %927, %v800
        %v929 = vpop.permute.xlu0 %928
        %930 = vset.pattern.permute.xlu0 0
        %931 = vperm.xlu0 %930, %v803
        %v932 = vpop.permute.xlu0 %931
        %933 = vset.pattern.permute.xlu0 0
        %934 = vperm.xlu0 %933, %v806
        %v935 = vpop.permute.xlu0 %934
        %936 = vset.pattern.permute.xlu0 0
        %937 = vperm.xlu0 %936, %v809
        %v938 = vpop.permute.xlu0 %937
        %939 = vset.pattern.permute.xlu0 0
        %940 = vperm.xlu0 %939, %v812
        %v941 = vpop.permute.xlu0 %940
        %942 = vset.pattern.permute.xlu0 0
        %943 = vperm.xlu0 %942, %v815
        %v944 = vpop.permute.xlu0 %943
        %945 = vset.pattern.permute.xlu0 0
        %946 = vperm.xlu0 %945, %v818
        %v947 = vpop.permute.xlu0 %946
        %948 = vset.pattern.permute.xlu0 0
        %949 = vperm.xlu0 %948, %v821
        %v950 = vpop.permute.xlu0 %949
        %951 = vset.pattern.permute.xlu0 0
        %952 = vperm.xlu0 %951, %v824
        %v953 = vpop.permute.xlu0 %952
        %954 = vset.pattern.permute.xlu0 0
        %955 = vperm.xlu0 %954, %v827
        %v956 = vpop.permute.xlu0 %955
        %957 = vset.pattern.permute.xlu0 0
        %958 = vperm.xlu0 %957, %v830
        %v959 = vpop.permute.xlu0 %958
        %960 = vset.pattern.permute.xlu0 0
        %961 = vperm.xlu0 %960, %v833
        %v962 = vpop.permute.xlu0 %961
        %963 = vset.pattern.permute.xlu0 0
        %964 = vperm.xlu0 %963, %v836
        %v965 = vpop.permute.xlu0 %964
        %966 = vset.pattern.permute.xlu0 0
        %967 = vperm.xlu0 %966, %v839
        %v968 = vpop.permute.xlu0 %967
        %969 = vset.pattern.permute.xlu0 0
        %970 = vperm.xlu0 %969, %v842
        %v971 = vpop.permute.xlu0 %970
        %972 = vset.pattern.permute.xlu0 0
        %973 = vperm.xlu0 %972, %v845
        %v974 = vpop.permute.xlu0 %973
        %975 = vset.pattern.permute.xlu0 0
        %976 = vperm.xlu0 %975, %v848
        %v977 = vpop.permute.xlu0 %976
        %978 = vset.pattern.permute.xlu0 0
        %979 = vperm.xlu0 %978, %v851
        %v980 = vpop.permute.xlu0 %979
        %981 = vset.pattern.permute.xlu0 0
        %982 = vperm.xlu0 %981, %v854
        %v983 = vpop.permute.xlu0 %982
        %984 = vset.pattern.permute.xlu0 0
        %985 = vperm.xlu0 %984, %v857
        %v986 = vpop.permute.xlu0 %985
        %987 = vset.pattern.permute.xlu0 0
        %988 = vperm.xlu0 %987, %v860
        %v989 = vpop.permute.xlu0 %988
        %990 = vset.pattern.permute.xlu0 0
        %991 = vperm.xlu0 %990, %v863
        %v992 = vpop.permute.xlu0 %991
        %993 = vset.pattern.permute.xlu0 0
        %994 = vperm.xlu0 %993, %v866
        %v995 = vpop.permute.xlu0 %994
        %996 = vset.pattern.permute.xlu0 0
        %997 = vperm.xlu0 %996, %v869
        %v998 = vpop.permute.xlu0 %997
        %v999 = vlaneseq
        %v1000 = vand.u32 %v999, 127
        %v1001 = vperm.slane %v905, %v1000
        %v1002 = vadd.s32 %v1000, 4294967288
        %v1003 = vperm.slane %v908, %v1002
        %vm1004 = vcmask 130112
        %v1005 = vsel %vm1004, %v1003, %v1001
        %v1006 = vperm.slane %v911, %v1000
        %v1007 = vperm.slane %v914, %v1002
        %v1008 = vsel %vm1004, %v1007, %v1006
        %v1009 = vperm.slane %v917, %v1000
        %v1010 = vperm.slane %v920, %v1002
        %v1011 = vsel %vm1004, %v1010, %v1009
        %v1012 = vperm.slane %v923, %v1000
        %v1013 = vperm.slane %v926, %v1002
        %v1014 = vsel %vm1004, %v1013, %v1012
        %v1015 = vperm.slane %v929, %v1000
        %v1016 = vperm.slane %v932, %v1002
        %v1017 = vsel %vm1004, %v1016, %v1015
        %v1018 = vperm.slane %v935, %v1000
        %v1019 = vperm.slane %v938, %v1002
        %v1020 = vsel %vm1004, %v1019, %v1018
        %v1021 = vperm.slane %v941, %v1000
        %v1022 = vperm.slane %v944, %v1002
        %v1023 = vsel %vm1004, %v1022, %v1021
        %v1024 = vperm.slane %v947, %v1000
        %v1025 = vperm.slane %v950, %v1002
        %v1026 = vsel %vm1004, %v1025, %v1024
        %v1027 = vperm.slane %v953, %v1000
        %v1028 = vperm.slane %v956, %v1002
        %v1029 = vsel %vm1004, %v1028, %v1027
        %v1030 = vperm.slane %v959, %v1000
        %v1031 = vperm.slane %v962, %v1002
        %v1032 = vsel %vm1004, %v1031, %v1030
        %v1033 = vperm.slane %v965, %v1000
        %v1034 = vperm.slane %v968, %v1002
        %v1035 = vsel %vm1004, %v1034, %v1033
        %v1036 = vperm.slane %v971, %v1000
        %v1037 = vperm.slane %v974, %v1002
        %v1038 = vsel %vm1004, %v1037, %v1036
        %v1039 = vperm.slane %v977, %v1000
        %v1040 = vperm.slane %v980, %v1002
        %v1041 = vsel %vm1004, %v1040, %v1039
        %v1042 = vperm.slane %v983, %v1000
        %v1043 = vperm.slane %v986, %v1002
        %v1044 = vsel %vm1004, %v1043, %v1042
        %v1045 = vperm.slane %v989, %v1000
        %v1046 = vperm.slane %v992, %v1002
        %v1047 = vsel %vm1004, %v1046, %v1045
        %v1048 = vperm.slane %v995, %v1000
        %v1049 = vperm.slane %v998, %v1002
        %v1050 = vsel %vm1004, %v1049, %v1048
        %vm1051 = vcmask 1041409
        %v1052 = vsel %vm1051, %v1008, %v1005
        %vm1053 = vcmask 1042434
        %v1054 = vsel %vm1053, %v1011, %v1052
        %vm1055 = vcmask 1043459
        %v1056 = vsel %vm1055, %v1014, %v1054
        %vm1057 = vcmask 1044484
        %v1058 = vsel %vm1057, %v1017, %v1056
        %vm1059 = vcmask 1045509
        %v1060 = vsel %vm1059, %v1020, %v1058
        %vm1061 = vcmask 1046534
        %v1062 = vsel %vm1061, %v1023, %v1060
        %vm1063 = vcmask 1047559
        %v1064 = vsel %vm1063, %v1026, %v1062
        %v1065 = vsel %vm1051, %v1032, %v1029
        %v1066 = vsel %vm1053, %v1035, %v1065
        %v1067 = vsel %vm1055, %v1038, %v1066
        %v1068 = vsel %vm1057, %v1041, %v1067
        %v1069 = vsel %vm1059, %v1044, %v1068
        %v1070 = vsel %vm1061, %v1047, %v1069
        %v1071 = vsel %vm1063, %v1050, %v1070
        %vm1074 = vcmask 130048
        %v1075 = vsel %vm1074, %v1064, -inf
        %1076 = vmax.xlane.f32.xlu0 %v1075
        %v1077 = vpop.xlane.xlu0 %1076
        %v1078 = vsel %vm1074, %v1071, -inf
        %1079 = vmax.xlane.f32.xlu0 %v1078
        %v1080 = vpop.xlane.xlu0 %1079
        %v1083 = vperm.slane %v1077, 0
        %v1084 = vperm.slane %v1077, 1
        %v1085 = vperm.slane %v1077, 2
        %v1086 = vperm.slane %v1077, 3
        %v1087 = vperm.slane %v1077, 4
        %v1088 = vperm.slane %v1077, 5
        %v1089 = vperm.slane %v1077, 6
        %v1090 = vperm.slane %v1077, 7
        %v1091 = vperm.slane %v1080, 0
        %v1092 = vperm.slane %v1080, 1
        %v1093 = vperm.slane %v1080, 2
        %v1094 = vperm.slane %v1080, 3
        %v1095 = vperm.slane %v1080, 4
        %v1096 = vperm.slane %v1080, 5
        %v1097 = vperm.slane %v1080, 6
        %v1098 = vperm.slane %v1080, 7
        %v1115 = vsub.f32 %v776, %v1083
        %v1116 = vsub.f32 %v779, %v1083
        %v1117 = vsub.f32 %v782, %v1084
        %v1118 = vsub.f32 %v785, %v1084
        %v1119 = vsub.f32 %v788, %v1085
        %v1120 = vsub.f32 %v791, %v1085
        %v1121 = vsub.f32 %v794, %v1086
        %v1122 = vsub.f32 %v797, %v1086
        %v1123 = vsub.f32 %v800, %v1087
        %v1124 = vsub.f32 %v803, %v1087
        %v1125 = vsub.f32 %v806, %v1088
        %v1126 = vsub.f32 %v809, %v1088
        %v1127 = vsub.f32 %v812, %v1089
        %v1128 = vsub.f32 %v815, %v1089
        %v1129 = vsub.f32 %v818, %v1090
        %v1130 = vsub.f32 %v821, %v1090
        %v1131 = vsub.f32 %v824, %v1091
        %v1132 = vsub.f32 %v827, %v1091
        %v1133 = vsub.f32 %v830, %v1092
        %v1134 = vsub.f32 %v833, %v1092
        %v1135 = vsub.f32 %v836, %v1093
        %v1136 = vsub.f32 %v839, %v1093
        %v1137 = vsub.f32 %v842, %v1094
        %v1138 = vsub.f32 %v845, %v1094
        %v1139 = vsub.f32 %v848, %v1095
        %v1140 = vsub.f32 %v851, %v1095
        %v1141 = vsub.f32 %v854, %v1096
        %v1142 = vsub.f32 %v857, %v1096
        %v1143 = vsub.f32 %v860, %v1097
        %v1144 = vsub.f32 %v863, %v1097
        %v1145 = vsub.f32 %v866, %v1098
        %v1146 = vsub.f32 %v869, %v1098
        %v1147 = vmul.f32 %v1115, 1.442695
        %v1148 = vpow.pop %v1147
        %v1149 = vmul.f32 %v1116, 1.442695
        %v1150 = vpow.pop %v1149
        %v1151 = vmul.f32 %v1117, 1.442695
        %v1152 = vpow.pop %v1151
        %v1153 = vmul.f32 %v1118, 1.442695
        %v1154 = vpow.pop %v1153
        %v1155 = vmul.f32 %v1119, 1.442695
        %v1156 = vpow.pop %v1155
        %v1157 = vmul.f32 %v1120, 1.442695
        %v1158 = vpow.pop %v1157
        %v1159 = vmul.f32 %v1121, 1.442695
        %v1160 = vpow.pop %v1159
        %v1161 = vmul.f32 %v1122, 1.442695
        %v1162 = vpow.pop %v1161
        %v1163 = vmul.f32 %v1123, 1.442695
        %v1164 = vpow.pop %v1163
        %v1165 = vmul.f32 %v1124, 1.442695
        %v1166 = vpow.pop %v1165
        %v1167 = vmul.f32 %v1125, 1.442695
        %v1168 = vpow.pop %v1167
        %v1169 = vmul.f32 %v1126, 1.442695
        %v1170 = vpow.pop %v1169
        %v1171 = vmul.f32 %v1127, 1.442695
        %v1172 = vpow.pop %v1171
        %v1173 = vmul.f32 %v1128, 1.442695
        %v1174 = vpow.pop %v1173
        %v1175 = vmul.f32 %v1129, 1.442695
        %v1176 = vpow.pop %v1175
        %v1177 = vmul.f32 %v1130, 1.442695
        %v1178 = vpow.pop %v1177
        %v1179 = vmul.f32 %v1131, 1.442695
        %v1180 = vpow.pop %v1179
        %v1181 = vmul.f32 %v1132, 1.442695
        %v1182 = vpow.pop %v1181
        %v1183 = vmul.f32 %v1133, 1.442695
        %v1184 = vpow.pop %v1183
        %v1185 = vmul.f32 %v1134, 1.442695
        %v1186 = vpow.pop %v1185
        %v1187 = vmul.f32 %v1135, 1.442695
        %v1188 = vpow.pop %v1187
        %v1189 = vmul.f32 %v1136, 1.442695
        %v1190 = vpow.pop %v1189
        %v1191 = vmul.f32 %v1137, 1.442695
        %v1192 = vpow.pop %v1191
        %v1193 = vmul.f32 %v1138, 1.442695
        %v1194 = vpow.pop %v1193
        %v1195 = vmul.f32 %v1139, 1.442695
        %v1196 = vpow.pop %v1195
        %v1197 = vmul.f32 %v1140, 1.442695
        %v1198 = vpow.pop %v1197
        %v1199 = vmul.f32 %v1141, 1.442695
        %v1200 = vpow.pop %v1199
        %v1201 = vmul.f32 %v1142, 1.442695
        %v1202 = vpow.pop %v1201
        %v1203 = vmul.f32 %v1143, 1.442695
        %v1204 = vpow.pop %v1203
        %v1205 = vmul.f32 %v1144, 1.442695
        %v1206 = vpow.pop %v1205
        %v1207 = vmul.f32 %v1145, 1.442695
        %v1208 = vpow.pop %v1207
        %v1209 = vmul.f32 %v1146, 1.442695
        %v1210 = vpow.pop %v1209
        %1243 = vset.pattern.permute.xlu0 0
        %1244 = vperm.xlu0 %1243, %v1148
        %v1245 = vpop.permute.xlu0 %1244
        %1246 = vset.pattern.permute.xlu0 0
        %1247 = vperm.xlu0 %1246, %v1150
        %v1248 = vpop.permute.xlu0 %1247
        %1249 = vset.pattern.permute.xlu0 0
        %1250 = vperm.xlu0 %1249, %v1152
        %v1251 = vpop.permute.xlu0 %1250
        %1252 = vset.pattern.permute.xlu0 0
        %1253 = vperm.xlu0 %1252, %v1154
        %v1254 = vpop.permute.xlu0 %1253
        %1255 = vset.pattern.permute.xlu0 0
        %1256 = vperm.xlu0 %1255, %v1156
        %v1257 = vpop.permute.xlu0 %1256
        %1258 = vset.pattern.permute.xlu0 0
        %1259 = vperm.xlu0 %1258, %v1158
        %v1260 = vpop.permute.xlu0 %1259
        %1261 = vset.pattern.permute.xlu0 0
        %1262 = vperm.xlu0 %1261, %v1160
        %v1263 = vpop.permute.xlu0 %1262
        %1264 = vset.pattern.permute.xlu0 0
        %1265 = vperm.xlu0 %1264, %v1162
        %v1266 = vpop.permute.xlu0 %1265
        %1267 = vset.pattern.permute.xlu0 0
        %1268 = vperm.xlu0 %1267, %v1164
        %v1269 = vpop.permute.xlu0 %1268
        %1270 = vset.pattern.permute.xlu0 0
        %1271 = vperm.xlu0 %1270, %v1166
        %v1272 = vpop.permute.xlu0 %1271
        %1273 = vset.pattern.permute.xlu0 0
        %1274 = vperm.xlu0 %1273, %v1168
        %v1275 = vpop.permute.xlu0 %1274
        %1276 = vset.pattern.permute.xlu0 0
        %1277 = vperm.xlu0 %1276, %v1170
        %v1278 = vpop.permute.xlu0 %1277
        %1279 = vset.pattern.permute.xlu0 0
        %1280 = vperm.xlu0 %1279, %v1172
        %v1281 = vpop.permute.xlu0 %1280
        %1282 = vset.pattern.permute.xlu0 0
        %1283 = vperm.xlu0 %1282, %v1174
        %v1284 = vpop.permute.xlu0 %1283
        %1285 = vset.pattern.permute.xlu0 0
        %1286 = vperm.xlu0 %1285, %v1176
        %v1287 = vpop.permute.xlu0 %1286
        %1288 = vset.pattern.permute.xlu0 0
        %1289 = vperm.xlu0 %1288, %v1178
        %v1290 = vpop.permute.xlu0 %1289
        %1291 = vset.pattern.permute.xlu0 0
        %1292 = vperm.xlu0 %1291, %v1180
        %v1293 = vpop.permute.xlu0 %1292
        %1294 = vset.pattern.permute.xlu0 0
        %1295 = vperm.xlu0 %1294, %v1182
        %v1296 = vpop.permute.xlu0 %1295
        %1297 = vset.pattern.permute.xlu0 0
        %1298 = vperm.xlu0 %1297, %v1184
        %v1299 = vpop.permute.xlu0 %1298
        %1300 = vset.pattern.permute.xlu0 0
        %1301 = vperm.xlu0 %1300, %v1186
        %v1302 = vpop.permute.xlu0 %1301
        %1303 = vset.pattern.permute.xlu0 0
        %1304 = vperm.xlu0 %1303, %v1188
        %v1305 = vpop.permute.xlu0 %1304
        %1306 = vset.pattern.permute.xlu0 0
        %1307 = vperm.xlu0 %1306, %v1190
        %v1308 = vpop.permute.xlu0 %1307
        %1309 = vset.pattern.permute.xlu0 0
        %1310 = vperm.xlu0 %1309, %v1192
        %v1311 = vpop.permute.xlu0 %1310
        %1312 = vset.pattern.permute.xlu0 0
        %1313 = vperm.xlu0 %1312, %v1194
        %v1314 = vpop.permute.xlu0 %1313
        %1315 = vset.pattern.permute.xlu0 0
        %1316 = vperm.xlu0 %1315, %v1196
        %v1317 = vpop.permute.xlu0 %1316
        %1318 = vset.pattern.permute.xlu0 0
        %1319 = vperm.xlu0 %1318, %v1198
        %v1320 = vpop.permute.xlu0 %1319
        %1321 = vset.pattern.permute.xlu0 0
        %1322 = vperm.xlu0 %1321, %v1200
        %v1323 = vpop.permute.xlu0 %1322
        %1324 = vset.pattern.permute.xlu0 0
        %1325 = vperm.xlu0 %1324, %v1202
        %v1326 = vpop.permute.xlu0 %1325
        %1327 = vset.pattern.permute.xlu0 0
        %1328 = vperm.xlu0 %1327, %v1204
        %v1329 = vpop.permute.xlu0 %1328
        %1330 = vset.pattern.permute.xlu0 0
        %1331 = vperm.xlu0 %1330, %v1206
        %v1332 = vpop.permute.xlu0 %1331
        %1333 = vset.pattern.permute.xlu0 0
        %1334 = vperm.xlu0 %1333, %v1208
        %v1335 = vpop.permute.xlu0 %1334
        %1336 = vset.pattern.permute.xlu0 0
        %1337 = vperm.xlu0 %1336, %v1210
        %v1338 = vpop.permute.xlu0 %1337
        %v1339 = vperm.slane %v1245, %v1000
        %v1340 = vperm.slane %v1248, %v1002
        %v1341 = vsel %vm1004, %v1340, %v1339
        %v1342 = vperm.slane %v1251, %v1000
        %v1343 = vperm.slane %v1254, %v1002
        %v1344 = vsel %vm1004, %v1343, %v1342
        %v1345 = vperm.slane %v1257, %v1000
        %v1346 = vperm.slane %v1260, %v1002
        %v1347 = vsel %vm1004, %v1346, %v1345
        %v1348 = vperm.slane %v1263, %v1000
        %v1349 = vperm.slane %v1266, %v1002
        %v1350 = vsel %vm1004, %v1349, %v1348
        %v1351 = vperm.slane %v1269, %v1000
        %v1352 = vperm.slane %v1272, %v1002
        %v1353 = vsel %vm1004, %v1352, %v1351
        %v1354 = vperm.slane %v1275, %v1000
        %v1355 = vperm.slane %v1278, %v1002
        %v1356 = vsel %vm1004, %v1355, %v1354
        %v1357 = vperm.slane %v1281, %v1000
        %v1358 = vperm.slane %v1284, %v1002
        %v1359 = vsel %vm1004, %v1358, %v1357
        %v1360 = vperm.slane %v1287, %v1000
        %v1361 = vperm.slane %v1290, %v1002
        %v1362 = vsel %vm1004, %v1361, %v1360
        %v1363 = vperm.slane %v1293, %v1000
        %v1364 = vperm.slane %v1296, %v1002
        %v1365 = vsel %vm1004, %v1364, %v1363
        %v1366 = vperm.slane %v1299, %v1000
        %v1367 = vperm.slane %v1302, %v1002
        %v1368 = vsel %vm1004, %v1367, %v1366
        %v1369 = vperm.slane %v1305, %v1000
        %v1370 = vperm.slane %v1308, %v1002
        %v1371 = vsel %vm1004, %v1370, %v1369
        %v1372 = vperm.slane %v1311, %v1000
        %v1373 = vperm.slane %v1314, %v1002
        %v1374 = vsel %vm1004, %v1373, %v1372
        %v1375 = vperm.slane %v1317, %v1000
        %v1376 = vperm.slane %v1320, %v1002
        %v1377 = vsel %vm1004, %v1376, %v1375
        %v1378 = vperm.slane %v1323, %v1000
        %v1379 = vperm.slane %v1326, %v1002
        %v1380 = vsel %vm1004, %v1379, %v1378
        %v1381 = vperm.slane %v1329, %v1000
        %v1382 = vperm.slane %v1332, %v1002
        %v1383 = vsel %vm1004, %v1382, %v1381
        %v1384 = vperm.slane %v1335, %v1000
        %v1385 = vperm.slane %v1338, %v1002
        %v1386 = vsel %vm1004, %v1385, %v1384
        %v1387 = vsel %vm1051, %v1344, %v1341
        %v1388 = vsel %vm1053, %v1347, %v1387
        %v1389 = vsel %vm1055, %v1350, %v1388
        %v1390 = vsel %vm1057, %v1353, %v1389
        %v1391 = vsel %vm1059, %v1356, %v1390
        %v1392 = vsel %vm1061, %v1359, %v1391
        %v1393 = vsel %vm1063, %v1362, %v1392
        %v1394 = vsel %vm1051, %v1368, %v1365
        %v1395 = vsel %vm1053, %v1371, %v1394
        %v1396 = vsel %vm1055, %v1374, %v1395
        %v1397 = vsel %vm1057, %v1377, %v1396
        %v1398 = vsel %vm1059, %v1380, %v1397
        %v1399 = vsel %vm1061, %v1383, %v1398
        %v1400 = vsel %vm1063, %v1386, %v1399
        %v1403 = vsel %vm1074, %v1393, 0.0
        %1404 = vadd.xlane.f32.xlu0 %v1403
        %v1405 = vpop.xlane.xlu0 %1404
        %v1406 = vsel %vm1074, %v1400, 0.0
        %1407 = vadd.xlane.f32.xlu0 %v1406
        %v1408 = vpop.xlane.xlu0 %1407
        %v1411 = vperm.slane %v1405, 0
        %v1412 = vperm.slane %v1405, 1
        %v1413 = vperm.slane %v1405, 2
        %v1414 = vperm.slane %v1405, 3
        %v1415 = vperm.slane %v1405, 4
        %v1416 = vperm.slane %v1405, 5
        %v1417 = vperm.slane %v1405, 6
        %v1418 = vperm.slane %v1405, 7
        %v1419 = vperm.slane %v1408, 0
        %v1420 = vperm.slane %v1408, 1
        %v1421 = vperm.slane %v1408, 2
        %v1422 = vperm.slane %v1408, 3
        %v1423 = vperm.slane %v1408, 4
        %v1424 = vperm.slane %v1408, 5
        %v1425 = vperm.slane %v1408, 6
        %v1426 = vperm.slane %v1408, 7
        %v1443 = vrcp.pop %v1411
        %v1444 = vmul.f32 %v1411, %v1443
        %v1445 = vsub.f32 1.0, %v1444
        %v1446 = vmul.f32 %v1443, %v1445
        %v1447 = vadd.f32 %v1443, %v1446
        %vm1448 = vweird.f32 %v1411
        %vm1449 = vweird.f32 %v1443
        %vm1450 = vmor %vm1448, %vm1449
        %v1451 = vsel %vm1450, %v1443, %v1447
        %v1452 = vand.u32 2147483647, %v1411
        %vm1453 = vcmp.eq.f32.partialorder %v1452, 8.507059e+37
        %v1454 = vand.u32 %v1411, 2147483648
        %v1455 = vor.u32 1.1754944e-38, %v1454
        %v1456 = vsel %vm1453, %v1455, %v1451
        %v1457 = vmul.f32 %v1148, %v1456
        %v1458 = vmul.f32 %v1150, %v1456
        %v1459 = vrcp.pop %v1412
        %v1460 = vmul.f32 %v1412, %v1459
        %v1461 = vsub.f32 1.0, %v1460
        %v1462 = vmul.f32 %v1459, %v1461
        %v1463 = vadd.f32 %v1459, %v1462
        %vm1464 = vweird.f32 %v1412
        %vm1465 = vweird.f32 %v1459
        %vm1466 = vmor %vm1464, %vm1465
        %v1467 = vsel %vm1466, %v1459, %v1463
        %v1468 = vand.u32 2147483647, %v1412
        %vm1469 = vcmp.eq.f32.partialorder %v1468, 8.507059e+37
        %v1470 = vand.u32 %v1412, 2147483648
        %v1471 = vor.u32 1.1754944e-38, %v1470
        %v1472 = vsel %vm1469, %v1471, %v1467
        %v1473 = vmul.f32 %v1152, %v1472
        %v1474 = vmul.f32 %v1154, %v1472
        %v1475 = vrcp.pop %v1413
        %v1476 = vmul.f32 %v1413, %v1475
        %v1477 = vsub.f32 1.0, %v1476
        %v1478 = vmul.f32 %v1475, %v1477
        %v1479 = vadd.f32 %v1475, %v1478
        %vm1480 = vweird.f32 %v1413
        %vm1481 = vweird.f32 %v1475
        %vm1482 = vmor %vm1480, %vm1481
        %v1483 = vsel %vm1482, %v1475, %v1479
        %v1484 = vand.u32 2147483647, %v1413
        %vm1485 = vcmp.eq.f32.partialorder %v1484, 8.507059e+37
        %v1486 = vand.u32 %v1413, 2147483648
        %v1487 = vor.u32 1.1754944e-38, %v1486
        %v1488 = vsel %vm1485, %v1487, %v1483
        %v1489 = vmul.f32 %v1156, %v1488
        %v1490 = vmul.f32 %v1158, %v1488
        %v1491 = vrcp.pop %v1414
        %v1492 = vmul.f32 %v1414, %v1491
        %v1493 = vsub.f32 1.0, %v1492
        %v1494 = vmul.f32 %v1491, %v1493
        %v1495 = vadd.f32 %v1491, %v1494
        %vm1496 = vweird.f32 %v1414
        %vm1497 = vweird.f32 %v1491
        %vm1498 = vmor %vm1496, %vm1497
        %v1499 = vsel %vm1498, %v1491, %v1495
        %v1500 = vand.u32 2147483647, %v1414
        %vm1501 = vcmp.eq.f32.partialorder %v1500, 8.507059e+37
        %v1502 = vand.u32 %v1414, 2147483648
        %v1503 = vor.u32 1.1754944e-38, %v1502
        %v1504 = vsel %vm1501, %v1503, %v1499
        %v1505 = vmul.f32 %v1160, %v1504
        %v1506 = vmul.f32 %v1162, %v1504
        %v1507 = vrcp.pop %v1415
        %v1508 = vmul.f32 %v1415, %v1507
        %v1509 = vsub.f32 1.0, %v1508
        %v1510 = vmul.f32 %v1507, %v1509
        %v1511 = vadd.f32 %v1507, %v1510
        %vm1512 = vweird.f32 %v1415
        %vm1513 = vweird.f32 %v1507
        %vm1514 = vmor %vm1512, %vm1513
        %v1515 = vsel %vm1514, %v1507, %v1511
        %v1516 = vand.u32 2147483647, %v1415
        %vm1517 = vcmp.eq.f32.partialorder %v1516, 8.507059e+37
        %v1518 = vand.u32 %v1415, 2147483648
        %v1519 = vor.u32 1.1754944e-38, %v1518
        %v1520 = vsel %vm1517, %v1519, %v1515
        %v1521 = vmul.f32 %v1164, %v1520
        %v1522 = vmul.f32 %v1166, %v1520
        %v1523 = vrcp.pop %v1416
        %v1524 = vmul.f32 %v1416, %v1523
        %v1525 = vsub.f32 1.0, %v1524
        %v1526 = vmul.f32 %v1523, %v1525
        %v1527 = vadd.f32 %v1523, %v1526
        %vm1528 = vweird.f32 %v1416
        %vm1529 = vweird.f32 %v1523
        %vm1530 = vmor %vm1528, %vm1529
        %v1531 = vsel %vm1530, %v1523, %v1527
        %v1532 = vand.u32 2147483647, %v1416
        %vm1533 = vcmp.eq.f32.partialorder %v1532, 8.507059e+37
        %v1534 = vand.u32 %v1416, 2147483648
        %v1535 = vor.u32 1.1754944e-38, %v1534
        %v1536 = vsel %vm1533, %v1535, %v1531
        %v1537 = vmul.f32 %v1168, %v1536
        %v1538 = vmul.f32 %v1170, %v1536
        %v1539 = vrcp.pop %v1417
        %v1540 = vmul.f32 %v1417, %v1539
        %v1541 = vsub.f32 1.0, %v1540
        %v1542 = vmul.f32 %v1539, %v1541
        %v1543 = vadd.f32 %v1539, %v1542
        %vm1544 = vweird.f32 %v1417
        %vm1545 = vweird.f32 %v1539
        %vm1546 = vmor %vm1544, %vm1545
        %v1547 = vsel %vm1546, %v1539, %v1543
        %v1548 = vand.u32 2147483647, %v1417
        %vm1549 = vcmp.eq.f32.partialorder %v1548, 8.507059e+37
        %v1550 = vand.u32 %v1417, 2147483648
        %v1551 = vor.u32 1.1754944e-38, %v1550
        %v1552 = vsel %vm1549, %v1551, %v1547
        %v1553 = vmul.f32 %v1172, %v1552
        %v1554 = vmul.f32 %v1174, %v1552
        %v1555 = vrcp.pop %v1418
        %v1556 = vmul.f32 %v1418, %v1555
        %v1557 = vsub.f32 1.0, %v1556
        %v1558 = vmul.f32 %v1555, %v1557
        %v1559 = vadd.f32 %v1555, %v1558
        %vm1560 = vweird.f32 %v1418
        %vm1561 = vweird.f32 %v1555
        %vm1562 = vmor %vm1560, %vm1561
        %v1563 = vsel %vm1562, %v1555, %v1559
        %v1564 = vand.u32 2147483647, %v1418
        %vm1565 = vcmp.eq.f32.partialorder %v1564, 8.507059e+37
        %v1566 = vand.u32 %v1418, 2147483648
        %v1567 = vor.u32 1.1754944e-38, %v1566
        %v1568 = vsel %vm1565, %v1567, %v1563
        %v1569 = vmul.f32 %v1176, %v1568
        %v1570 = vmul.f32 %v1178, %v1568
        %v1571 = vrcp.pop %v1419
        %v1572 = vmul.f32 %v1419, %v1571
        %v1573 = vsub.f32 1.0, %v1572
        %v1574 = vmul.f32 %v1571, %v1573
        %v1575 = vadd.f32 %v1571, %v1574
        %vm1576 = vweird.f32 %v1419
        %vm1577 = vweird.f32 %v1571
        %vm1578 = vmor %vm1576, %vm1577
        %v1579 = vsel %vm1578, %v1571, %v1575
        %v1580 = vand.u32 2147483647, %v1419
        %vm1581 = vcmp.eq.f32.partialorder %v1580, 8.507059e+37
        %v1582 = vand.u32 %v1419, 2147483648
        %v1583 = vor.u32 1.1754944e-38, %v1582
        %v1584 = vsel %vm1581, %v1583, %v1579
        %v1585 = vmul.f32 %v1180, %v1584
        %v1586 = vmul.f32 %v1182, %v1584
        %v1587 = vrcp.pop %v1420
        %v1588 = vmul.f32 %v1420, %v1587
        %v1589 = vsub.f32 1.0, %v1588
        %v1590 = vmul.f32 %v1587, %v1589
        %v1591 = vadd.f32 %v1587, %v1590
        %vm1592 = vweird.f32 %v1420
        %vm1593 = vweird.f32 %v1587
        %vm1594 = vmor %vm1592, %vm1593
        %v1595 = vsel %vm1594, %v1587, %v1591
        %v1596 = vand.u32 2147483647, %v1420
        %vm1597 = vcmp.eq.f32.partialorder %v1596, 8.507059e+37
        %v1598 = vand.u32 %v1420, 2147483648
        %v1599 = vor.u32 1.1754944e-38, %v1598
        %v1600 = vsel %vm1597, %v1599, %v1595
        %v1601 = vmul.f32 %v1184, %v1600
        %v1602 = vmul.f32 %v1186, %v1600
        %v1603 = vrcp.pop %v1421
        %v1604 = vmul.f32 %v1421, %v1603
        %v1605 = vsub.f32 1.0, %v1604
        %v1606 = vmul.f32 %v1603, %v1605
        %v1607 = vadd.f32 %v1603, %v1606
        %vm1608 = vweird.f32 %v1421
        %vm1609 = vweird.f32 %v1603
        %vm1610 = vmor %vm1608, %vm1609
        %v1611 = vsel %vm1610, %v1603, %v1607
        %v1612 = vand.u32 2147483647, %v1421
        %vm1613 = vcmp.eq.f32.partialorder %v1612, 8.507059e+37
        %v1614 = vand.u32 %v1421, 2147483648
        %v1615 = vor.u32 1.1754944e-38, %v1614
        %v1616 = vsel %vm1613, %v1615, %v1611
        %v1617 = vmul.f32 %v1188, %v1616
        %v1618 = vmul.f32 %v1190, %v1616
        %v1619 = vrcp.pop %v1422
        %v1620 = vmul.f32 %v1422, %v1619
        %v1621 = vsub.f32 1.0, %v1620
        %v1622 = vmul.f32 %v1619, %v1621
        %v1623 = vadd.f32 %v1619, %v1622
        %vm1624 = vweird.f32 %v1422
        %vm1625 = vweird.f32 %v1619
        %vm1626 = vmor %vm1624, %vm1625
        %v1627 = vsel %vm1626, %v1619, %v1623
        %v1628 = vand.u32 2147483647, %v1422
        %vm1629 = vcmp.eq.f32.partialorder %v1628, 8.507059e+37
        %v1630 = vand.u32 %v1422, 2147483648
        %v1631 = vor.u32 1.1754944e-38, %v1630
        %v1632 = vsel %vm1629, %v1631, %v1627
        %v1633 = vmul.f32 %v1192, %v1632
        %v1634 = vmul.f32 %v1194, %v1632
        %v1635 = vrcp.pop %v1423
        %v1636 = vmul.f32 %v1423, %v1635
        %v1637 = vsub.f32 1.0, %v1636
        %v1638 = vmul.f32 %v1635, %v1637
        %v1639 = vadd.f32 %v1635, %v1638
        %vm1640 = vweird.f32 %v1423
        %vm1641 = vweird.f32 %v1635
        %vm1642 = vmor %vm1640, %vm1641
        %v1643 = vsel %vm1642, %v1635, %v1639
        %v1644 = vand.u32 2147483647, %v1423
        %vm1645 = vcmp.eq.f32.partialorder %v1644, 8.507059e+37
        %v1646 = vand.u32 %v1423, 2147483648
        %v1647 = vor.u32 1.1754944e-38, %v1646
        %v1648 = vsel %vm1645, %v1647, %v1643
        %v1649 = vmul.f32 %v1196, %v1648
        %v1650 = vmul.f32 %v1198, %v1648
        %v1651 = vrcp.pop %v1424
        %v1652 = vmul.f32 %v1424, %v1651
        %v1653 = vsub.f32 1.0, %v1652
        %v1654 = vmul.f32 %v1651, %v1653
        %v1655 = vadd.f32 %v1651, %v1654
        %vm1656 = vweird.f32 %v1424
        %vm1657 = vweird.f32 %v1651
        %vm1658 = vmor %vm1656, %vm1657
        %v1659 = vsel %vm1658, %v1651, %v1655
        %v1660 = vand.u32 2147483647, %v1424
        %vm1661 = vcmp.eq.f32.partialorder %v1660, 8.507059e+37
        %v1662 = vand.u32 %v1424, 2147483648
        %v1663 = vor.u32 1.1754944e-38, %v1662
        %v1664 = vsel %vm1661, %v1663, %v1659
        %v1665 = vmul.f32 %v1200, %v1664
        %v1666 = vmul.f32 %v1202, %v1664
        %v1667 = vrcp.pop %v1425
        %v1668 = vmul.f32 %v1425, %v1667
        %v1669 = vsub.f32 1.0, %v1668
        %v1670 = vmul.f32 %v1667, %v1669
        %v1671 = vadd.f32 %v1667, %v1670
        %vm1672 = vweird.f32 %v1425
        %vm1673 = vweird.f32 %v1667
        %vm1674 = vmor %vm1672, %vm1673
        %v1675 = vsel %vm1674, %v1667, %v1671
        %v1676 = vand.u32 2147483647, %v1425
        %vm1677 = vcmp.eq.f32.partialorder %v1676, 8.507059e+37
        %v1678 = vand.u32 %v1425, 2147483648
        %v1679 = vor.u32 1.1754944e-38, %v1678
        %v1680 = vsel %vm1677, %v1679, %v1675
        %v1681 = vmul.f32 %v1204, %v1680
        %v1682 = vmul.f32 %v1206, %v1680
        %v1683 = vrcp.pop %v1426
        %v1684 = vmul.f32 %v1426, %v1683
        %v1685 = vsub.f32 1.0, %v1684
        %v1686 = vmul.f32 %v1683, %v1685
        %v1687 = vadd.f32 %v1683, %v1686
        %vm1688 = vweird.f32 %v1426
        %vm1689 = vweird.f32 %v1683
        %vm1690 = vmor %vm1688, %vm1689
        %v1691 = vsel %vm1690, %v1683, %v1687
        %v1692 = vand.u32 2147483647, %v1426
        %vm1693 = vcmp.eq.f32.partialorder %v1692, 8.507059e+37
        %v1694 = vand.u32 %v1426, 2147483648
        %v1695 = vor.u32 1.1754944e-38, %v1694
        %v1696 = vsel %vm1693, %v1695, %v1691
        %v1697 = vmul.f32 %v1208, %v1696
        %v1698 = vmul.f32 %v1210, %v1696
        %1731 = vset.pattern.permute.xlu0 0
        %1732 = vperm.xlu0 %1731, %v1457
        %v1733 = vpop.permute.xlu0 %1732
        %1734 = vset.pattern.permute.xlu0 0
        %1735 = vperm.xlu0 %1734, %v1458
        %v1736 = vpop.permute.xlu0 %1735
        %1737 = vset.pattern.permute.xlu0 0
        %1738 = vperm.xlu0 %1737, %v1473
        %v1739 = vpop.permute.xlu0 %1738
        %1740 = vset.pattern.permute.xlu0 0
        %1741 = vperm.xlu0 %1740, %v1474
        %v1742 = vpop.permute.xlu0 %1741
        %1743 = vset.pattern.permute.xlu0 0
        %1744 = vperm.xlu0 %1743, %v1489
        %v1745 = vpop.permute.xlu0 %1744
        %1746 = vset.pattern.permute.xlu0 0
        %1747 = vperm.xlu0 %1746, %v1490
        %v1748 = vpop.permute.xlu0 %1747
        %1749 = vset.pattern.permute.xlu0 0
        %1750 = vperm.xlu0 %1749, %v1505
        %v1751 = vpop.permute.xlu0 %1750
        %1752 = vset.pattern.permute.xlu0 0
        %1753 = vperm.xlu0 %1752, %v1506
        %v1754 = vpop.permute.xlu0 %1753
        %1755 = vset.pattern.permute.xlu0 0
        %1756 = vperm.xlu0 %1755, %v1521
        %v1757 = vpop.permute.xlu0 %1756
        %1758 = vset.pattern.permute.xlu0 0
        %1759 = vperm.xlu0 %1758, %v1522
        %v1760 = vpop.permute.xlu0 %1759
        %1761 = vset.pattern.permute.xlu0 0
        %1762 = vperm.xlu0 %1761, %v1537
        %v1763 = vpop.permute.xlu0 %1762
        %1764 = vset.pattern.permute.xlu0 0
        %1765 = vperm.xlu0 %1764, %v1538
        %v1766 = vpop.permute.xlu0 %1765
        %1767 = vset.pattern.permute.xlu0 0
        %1768 = vperm.xlu0 %1767, %v1553
        %v1769 = vpop.permute.xlu0 %1768
        %1770 = vset.pattern.permute.xlu0 0
        %1771 = vperm.xlu0 %1770, %v1554
        %v1772 = vpop.permute.xlu0 %1771
        %1773 = vset.pattern.permute.xlu0 0
        %1774 = vperm.xlu0 %1773, %v1569
        %v1775 = vpop.permute.xlu0 %1774
        %1776 = vset.pattern.permute.xlu0 0
        %1777 = vperm.xlu0 %1776, %v1570
        %v1778 = vpop.permute.xlu0 %1777
        %1779 = vset.pattern.permute.xlu0 0
        %1780 = vperm.xlu0 %1779, %v1585
        %v1781 = vpop.permute.xlu0 %1780
        %1782 = vset.pattern.permute.xlu0 0
        %1783 = vperm.xlu0 %1782, %v1586
        %v1784 = vpop.permute.xlu0 %1783
        %1785 = vset.pattern.permute.xlu0 0
        %1786 = vperm.xlu0 %1785, %v1601
        %v1787 = vpop.permute.xlu0 %1786
        %1788 = vset.pattern.permute.xlu0 0
        %1789 = vperm.xlu0 %1788, %v1602
        %v1790 = vpop.permute.xlu0 %1789
        %1791 = vset.pattern.permute.xlu0 0
        %1792 = vperm.xlu0 %1791, %v1617
        %v1793 = vpop.permute.xlu0 %1792
        %1794 = vset.pattern.permute.xlu0 0
        %1795 = vperm.xlu0 %1794, %v1618
        %v1796 = vpop.permute.xlu0 %1795
        %1797 = vset.pattern.permute.xlu0 0
        %1798 = vperm.xlu0 %1797, %v1633
        %v1799 = vpop.permute.xlu0 %1798
        %1800 = vset.pattern.permute.xlu0 0
        %1801 = vperm.xlu0 %1800, %v1634
        %v1802 = vpop.permute.xlu0 %1801
        %1803 = vset.pattern.permute.xlu0 0
        %1804 = vperm.xlu0 %1803, %v1649
        %v1805 = vpop.permute.xlu0 %1804
        %1806 = vset.pattern.permute.xlu0 0
        %1807 = vperm.xlu0 %1806, %v1650
        %v1808 = vpop.permute.xlu0 %1807
        %1809 = vset.pattern.permute.xlu0 0
        %1810 = vperm.xlu0 %1809, %v1665
        %v1811 = vpop.permute.xlu0 %1810
        %1812 = vset.pattern.permute.xlu0 0
        %1813 = vperm.xlu0 %1812, %v1666
        %v1814 = vpop.permute.xlu0 %1813
        %1815 = vset.pattern.permute.xlu0 0
        %1816 = vperm.xlu0 %1815, %v1681
        %v1817 = vpop.permute.xlu0 %1816
        %1818 = vset.pattern.permute.xlu0 0
        %1819 = vperm.xlu0 %1818, %v1682
        %v1820 = vpop.permute.xlu0 %1819
        %1821 = vset.pattern.permute.xlu0 0
        %1822 = vperm.xlu0 %1821, %v1697
        %v1823 = vpop.permute.xlu0 %1822
        %1824 = vset.pattern.permute.xlu0 0
        %1825 = vperm.xlu0 %1824, %v1698
        %v1826 = vpop.permute.xlu0 %1825
        %v1827 = vperm.slane %v1733, %v1000
        %v1828 = vperm.slane %v1736, %v1002
        %v1829 = vsel %vm1004, %v1828, %v1827
        %v1830 = vperm.slane %v1739, %v1000
        %v1831 = vperm.slane %v1742, %v1002
        %v1832 = vsel %vm1004, %v1831, %v1830
        %v1833 = vperm.slane %v1745, %v1000
        %v1834 = vperm.slane %v1748, %v1002
        %v1835 = vsel %vm1004, %v1834, %v1833
        %v1836 = vperm.slane %v1751, %v1000
        %v1837 = vperm.slane %v1754, %v1002
        %v1838 = vsel %vm1004, %v1837, %v1836
        %v1839 = vperm.slane %v1757, %v1000
        %v1840 = vperm.slane %v1760, %v1002
        %v1841 = vsel %vm1004, %v1840, %v1839
        %v1842 = vperm.slane %v1763, %v1000
        %v1843 = vperm.slane %v1766, %v1002
        %v1844 = vsel %vm1004, %v1843, %v1842
        %v1845 = vperm.slane %v1769, %v1000
        %v1846 = vperm.slane %v1772, %v1002
        %v1847 = vsel %vm1004, %v1846, %v1845
        %v1848 = vperm.slane %v1775, %v1000
        %v1849 = vperm.slane %v1778, %v1002
        %v1850 = vsel %vm1004, %v1849, %v1848
        %v1851 = vperm.slane %v1781, %v1000
        %v1852 = vperm.slane %v1784, %v1002
        %v1853 = vsel %vm1004, %v1852, %v1851
        %v1854 = vperm.slane %v1787, %v1000
        %v1855 = vperm.slane %v1790, %v1002
        %v1856 = vsel %vm1004, %v1855, %v1854
        %v1857 = vperm.slane %v1793, %v1000
        %v1858 = vperm.slane %v1796, %v1002
        %v1859 = vsel %vm1004, %v1858, %v1857
        %v1860 = vperm.slane %v1799, %v1000
        %v1861 = vperm.slane %v1802, %v1002
        %v1862 = vsel %vm1004, %v1861, %v1860
        %v1863 = vperm.slane %v1805, %v1000
        %v1864 = vperm.slane %v1808, %v1002
        %v1865 = vsel %vm1004, %v1864, %v1863
        %v1866 = vperm.slane %v1811, %v1000
        %v1867 = vperm.slane %v1814, %v1002
        %v1868 = vsel %vm1004, %v1867, %v1866
        %v1869 = vperm.slane %v1817, %v1000
        %v1870 = vperm.slane %v1820, %v1002
        %v1871 = vsel %vm1004, %v1870, %v1869
        %v1872 = vperm.slane %v1823, %v1000
        %v1873 = vperm.slane %v1826, %v1002
        %v1874 = vsel %vm1004, %v1873, %v1872
        %v1875 = vsel %vm1051, %v1832, %v1829
        %v1876 = vsel %vm1053, %v1835, %v1875
        %v1877 = vsel %vm1055, %v1838, %v1876
        %v1878 = vsel %vm1057, %v1841, %v1877
        %v1879 = vsel %vm1059, %v1844, %v1878
        %v1880 = vsel %vm1061, %v1847, %v1879
        %v1881 = vsel %vm1063, %v1850, %v1880
        %v1882 = vsel %vm1051, %v1856, %v1853
        %v1883 = vsel %vm1053, %v1859, %v1882
        %v1884 = vsel %vm1055, %v1862, %v1883
        %v1885 = vsel %vm1057, %v1865, %v1884
        %v1886 = vsel %vm1059, %v1868, %v1885
        %v1887 = vsel %vm1061, %v1871, %v1886
        %v1888 = vsel %vm1063, %v1874, %v1887
        %v1889 = vsel %vm1074, %v1881, 0
        %v1891 = vsel %vm1074, %v1888, 0
        %1893 = vmatpush.msra.mxu0 0.0
        %1894 = vmatpush.msra.mxu0 0.0
        %1895 = vmatpush.msra.mxu0 0.0
        %1896 = vmatpush.msra.mxu0 0.0
        %1897 = vmatpush.msra.mxu0 0.0
        %1898 = vmatpush.msra.mxu0 0.0
        %1899 = vmatpush.msra.mxu0 0.0
        %1900 = vmatpush.msra.mxu0 0.0
        %1901 = vmatpush.msra.mxu0 0.0
        %1902 = vmatpush.msra.mxu0 0.0
        %1903 = vmatpush.msra.mxu0 0.0
        %1904 = vmatpush.msra.mxu0 0.0
        %1905 = vmatpush.msra.mxu0 0.0
        %1906 = vmatpush.msra.mxu0 0.0
        %1907 = vmatpush.msra.mxu0 %v624
        %1908 = vmatpush.msra.mxu0 %v621
        %1909 = vmatmul.f32.gmra.mxu0 %v1889
        %v1910 = vpop.f32.mrf.mxu0
        %v1911 = vadd.f32 0.0, %v1910
        %1912 = vmatmul.f32.gmra.mxu0 %v1891
        %v1913 = vpop.f32.mrf.mxu0
        %v1914 = vadd.f32 0.0, %v1913
        %1915 = vdwg.mxu0
        %vm1916 = vcmask 64512
        %1917 = vst.msk [vmem:[#allocation2] sm:$0xff] %vm1916, %v1911
        %1918 = vst.msk [vmem:[#allocation2 + $0x8] sm:$0xff] %vm1916, %v1914
        %1919 = vset.pattern.permute.xlu0 1
        %1920 = vperm.xlu0 %1919, %v776
        %v1921 = vpop.permute.xlu0 %1920
        %1922 = vset.pattern.permute.xlu0 1
        %1923 = vperm.xlu0 %1922, %v779
        %v1924 = vpop.permute.xlu0 %1923
        %1925 = vset.pattern.permute.xlu0 1
        %1926 = vperm.xlu0 %1925, %v782
        %v1927 = vpop.permute.xlu0 %1926
        %1928 = vset.pattern.permute.xlu0 1
        %1929 = vperm.xlu0 %1928, %v785
        %v1930 = vpop.permute.xlu0 %1929
        %1931 = vset.pattern.permute.xlu0 1
        %1932 = vperm.xlu0 %1931, %v788
        %v1933 = vpop.permute.xlu0 %1932
        %1934 = vset.pattern.permute.xlu0 1
        %1935 = vperm.xlu0 %1934, %v791
        %v1936 = vpop.permute.xlu0 %1935
        %1937 = vset.pattern.permute.xlu0 1
        %1938 = vperm.xlu0 %1937, %v794
        %v1939 = vpop.permute.xlu0 %1938
        %1940 = vset.pattern.permute.xlu0 1
        %1941 = vperm.xlu0 %1940, %v797
        %v1942 = vpop.permute.xlu0 %1941
        %1943 = vset.pattern.permute.xlu0 1
        %1944 = vperm.xlu0 %1943, %v800
        %v1945 = vpop.permute.xlu0 %1944
        %1946 = vset.pattern.permute.xlu0 1
        %1947 = vperm.xlu0 %1946, %v803
        %v1948 = vpop.permute.xlu0 %1947
        %1949 = vset.pattern.permute.xlu0 1
        %1950 = vperm.xlu0 %1949, %v806
        %v1951 = vpop.permute.xlu0 %1950
        %1952 = vset.pattern.permute.xlu0 1
        %1953 = vperm.xlu0 %1952, %v809
        %v1954 = vpop.permute.xlu0 %1953
        %1955 = vset.pattern.permute.xlu0 1
        %1956 = vperm.xlu0 %1955, %v812
        %v1957 = vpop.permute.xlu0 %1956
        %1958 = vset.pattern.permute.xlu0 1
        %1959 = vperm.xlu0 %1958, %v815
        %v1960 = vpop.permute.xlu0 %1959
        %1961 = vset.pattern.permute.xlu0 1
        %1962 = vperm.xlu0 %1961, %v818
        %v1963 = vpop.permute.xlu0 %1962
        %1964 = vset.pattern.permute.xlu0 1
        %1965 = vperm.xlu0 %1964, %v821
        %v1966 = vpop.permute.xlu0 %1965
        %1967 = vset.pattern.permute.xlu0 1
        %1968 = vperm.xlu0 %1967, %v824
        %v1969 = vpop.permute.xlu0 %1968
        %1970 = vset.pattern.permute.xlu0 1
        %1971 = vperm.xlu0 %1970, %v827
        %v1972 = vpop.permute.xlu0 %1971
        %1973 = vset.pattern.permute.xlu0 1
        %1974 = vperm.xlu0 %1973, %v830
        %v1975 = vpop.permute.xlu0 %1974
        %1976 = vset.pattern.permute.xlu0 1
        %1977 = vperm.xlu0 %1976, %v833
        %v1978 = vpop.permute.xlu0 %1977
        %1979 = vset.pattern.permute.xlu0 1
        %1980 = vperm.xlu0 %1979, %v836
        %v1981 = vpop.permute.xlu0 %1980
        %1982 = vset.pattern.permute.xlu0 1
        %1983 = vperm.xlu0 %1982, %v839
        %v1984 = vpop.permute.xlu0 %1983
        %1985 = vset.pattern.permute.xlu0 1
        %1986 = vperm.xlu0 %1985, %v842
        %v1987 = vpop.permute.xlu0 %1986
        %1988 = vset.pattern.permute.xlu0 1
        %1989 = vperm.xlu0 %1988, %v845
        %v1990 = vpop.permute.xlu0 %1989
        %1991 = vset.pattern.permute.xlu0 1
        %1992 = vperm.xlu0 %1991, %v848
        %v1993 = vpop.permute.xlu0 %1992
        %1994 = vset.pattern.permute.xlu0 1
        %1995 = vperm.xlu0 %1994, %v851
        %v1996 = vpop.permute.xlu0 %1995
        %1997 = vset.pattern.permute.xlu0 1
        %1998 = vperm.xlu0 %1997, %v854
        %v1999 = vpop.permute.xlu0 %1998
        %2000 = vset.pattern.permute.xlu0 1
        %2001 = vperm.xlu0 %2000, %v857
        %v2002 = vpop.permute.xlu0 %2001
        %2003 = vset.pattern.permute.xlu0 1
        %2004 = vperm.xlu0 %2003, %v860
        %v2005 = vpop.permute.xlu0 %2004
        %2006 = vset.pattern.permute.xlu0 1
        %2007 = vperm.xlu0 %2006, %v863
        %v2008 = vpop.permute.xlu0 %2007
        %2009 = vset.pattern.permute.xlu0 1
        %2010 = vperm.xlu0 %2009, %v866
        %v2011 = vpop.permute.xlu0 %2010
        %2012 = vset.pattern.permute.xlu0 1
        %2013 = vperm.xlu0 %2012, %v869
        %v2014 = vpop.permute.xlu0 %2013
        %v2015 = vperm.slane %v1921, %v1000
        %v2016 = vperm.slane %v1924, %v1002
        %v2017 = vsel %vm1004, %v2016, %v2015
        %v2018 = vperm.slane %v1927, %v1000
        %v2019 = vperm.slane %v1930, %v1002
        %v2020 = vsel %vm1004, %v2019, %v2018
        %v2021 = vperm.slane %v1933, %v1000
        %v2022 = vperm.slane %v1936, %v1002
        %v2023 = vsel %vm1004, %v2022, %v2021
        %v2024 = vperm.slane %v1939, %v1000
        %v2025 = vperm.slane %v1942, %v1002
        %v2026 = vsel %vm1004, %v2025, %v2024
        %v2027 = vperm.slane %v1945, %v1000
        %v2028 = vperm.slane %v1948, %v1002
        %v2029 = vsel %vm1004, %v2028, %v2027
        %v2030 = vperm.slane %v1951, %v1000
        %v2031 = vperm.slane %v1954, %v1002
        %v2032 = vsel %vm1004, %v2031, %v2030
        %v2033 = vperm.slane %v1957, %v1000
        %v2034 = vperm.slane %v1960, %v1002
        %v2035 = vsel %vm1004, %v2034, %v2033
        %v2036 = vperm.slane %v1963, %v1000
        %v2037 = vperm.slane %v1966, %v1002
        %v2038 = vsel %vm1004, %v2037, %v2036
        %v2039 = vperm.slane %v1969, %v1000
        %v2040 = vperm.slane %v1972, %v1002
        %v2041 = vsel %vm1004, %v2040, %v2039
        %v2042 = vperm.slane %v1975, %v1000
        %v2043 = vperm.slane %v1978, %v1002
        %v2044 = vsel %vm1004, %v2043, %v2042
        %v2045 = vperm.slane %v1981, %v1000
        %v2046 = vperm.slane %v1984, %v1002
        %v2047 = vsel %vm1004, %v2046, %v2045
        %v2048 = vperm.slane %v1987, %v1000
        %v2049 = vperm.slane %v1990, %v1002
        %v2050 = vsel %vm1004, %v2049, %v2048
        %v2051 = vperm.slane %v1993, %v1000
        %v2052 = vperm.slane %v1996, %v1002
        %v2053 = vsel %vm1004, %v2052, %v2051
        %v2054 = vperm.slane %v1999, %v1000
        %v2055 = vperm.slane %v2002, %v1002
        %v2056 = vsel %vm1004, %v2055, %v2054
        %v2057 = vperm.slane %v2005, %v1000
        %v2058 = vperm.slane %v2008, %v1002
        %v2059 = vsel %vm1004, %v2058, %v2057
        %v2060 = vperm.slane %v2011, %v1000
        %v2061 = vperm.slane %v2014, %v1002
        %v2062 = vsel %vm1004, %v2061, %v2060
        %v2063 = vsel %vm1051, %v2020, %v2017
        %v2064 = vsel %vm1053, %v2023, %v2063
        %v2065 = vsel %vm1055, %v2026, %v2064
        %v2066 = vsel %vm1057, %v2029, %v2065
        %v2067 = vsel %vm1059, %v2032, %v2066
        %v2068 = vsel %vm1061, %v2035, %v2067
        %v2069 = vsel %vm1063, %v2038, %v2068
        %v2070 = vsel %vm1051, %v2044, %v2041
        %v2071 = vsel %vm1053, %v2047, %v2070
        %v2072 = vsel %vm1055, %v2050, %v2071
        %v2073 = vsel %vm1057, %v2053, %v2072
        %v2074 = vsel %vm1059, %v2056, %v2073
        %v2075 = vsel %vm1061, %v2059, %v2074
        %v2076 = vsel %vm1063, %v2062, %v2075
        %v2079 = vsel %vm1074, %v2069, -inf
        %2080 = vmax.xlane.f32.xlu0 %v2079
        %v2081 = vpop.xlane.xlu0 %2080
        %v2082 = vsel %vm1074, %v2076, -inf
        %2083 = vmax.xlane.f32.xlu0 %v2082
        %v2084 = vpop.xlane.xlu0 %2083
        %v2087 = vperm.slane %v2081, 0
        %v2088 = vperm.slane %v2081, 1
        %v2089 = vperm.slane %v2081, 2
        %v2090 = vperm.slane %v2081, 3
        %v2091 = vperm.slane %v2081, 4
        %v2092 = vperm.slane %v2081, 5
        %v2093 = vperm.slane %v2081, 6
        %v2094 = vperm.slane %v2081, 7
        %v2095 = vperm.slane %v2084, 0
        %v2096 = vperm.slane %v2084, 1
        %v2097 = vperm.slane %v2084, 2
        %v2098 = vperm.slane %v2084, 3
        %v2099 = vperm.slane %v2084, 4
        %v2100 = vperm.slane %v2084, 5
        %v2101 = vperm.slane %v2084, 6
        %v2102 = vperm.slane %v2084, 7
        %v2119 = vsub.f32 %v776, %v2087
        %v2120 = vsub.f32 %v779, %v2087
        %v2121 = vsub.f32 %v782, %v2088
        %v2122 = vsub.f32 %v785, %v2088
        %v2123 = vsub.f32 %v788, %v2089
        %v2124 = vsub.f32 %v791, %v2089
        %v2125 = vsub.f32 %v794, %v2090
        %v2126 = vsub.f32 %v797, %v2090
        %v2127 = vsub.f32 %v800, %v2091
        %v2128 = vsub.f32 %v803, %v2091
        %v2129 = vsub.f32 %v806, %v2092
        %v2130 = vsub.f32 %v809, %v2092
        %v2131 = vsub.f32 %v812, %v2093
        %v2132 = vsub.f32 %v815, %v2093
        %v2133 = vsub.f32 %v818, %v2094
        %v2134 = vsub.f32 %v821, %v2094
        %v2135 = vsub.f32 %v824, %v2095
        %v2136 = vsub.f32 %v827, %v2095
        %v2137 = vsub.f32 %v830, %v2096
        %v2138 = vsub.f32 %v833, %v2096
        %v2139 = vsub.f32 %v836, %v2097
        %v2140 = vsub.f32 %v839, %v2097
        %v2141 = vsub.f32 %v842, %v2098
        %v2142 = vsub.f32 %v845, %v2098
        %v2143 = vsub.f32 %v848, %v2099
        %v2144 = vsub.f32 %v851, %v2099
        %v2145 = vsub.f32 %v854, %v2100
        %v2146 = vsub.f32 %v857, %v2100
        %v2147 = vsub.f32 %v860, %v2101
        %v2148 = vsub.f32 %v863, %v2101
        %v2149 = vsub.f32 %v866, %v2102
        %v2150 = vsub.f32 %v869, %v2102
        %v2151 = vmul.f32 %v2119, 1.442695
        %v2152 = vpow.pop %v2151
        %v2153 = vmul.f32 %v2120, 1.442695
        %v2154 = vpow.pop %v2153
        %v2155 = vmul.f32 %v2121, 1.442695
        %v2156 = vpow.pop %v2155
        %v2157 = vmul.f32 %v2122, 1.442695
        %v2158 = vpow.pop %v2157
        %v2159 = vmul.f32 %v2123, 1.442695
        %v2160 = vpow.pop %v2159
        %v2161 = vmul.f32 %v2124, 1.442695
        %v2162 = vpow.pop %v2161
        %v2163 = vmul.f32 %v2125, 1.442695
        %v2164 = vpow.pop %v2163
        %v2165 = vmul.f32 %v2126, 1.442695
        %v2166 = vpow.pop %v2165
        %v2167 = vmul.f32 %v2127, 1.442695
        %v2168 = vpow.pop %v2167
        %v2169 = vmul.f32 %v2128, 1.442695
        %v2170 = vpow.pop %v2169
        %v2171 = vmul.f32 %v2129, 1.442695
        %v2172 = vpow.pop %v2171
        %v2173 = vmul.f32 %v2130, 1.442695
        %v2174 = vpow.pop %v2173
        %v2175 = vmul.f32 %v2131, 1.442695
        %v2176 = vpow.pop %v2175
        %v2177 = vmul.f32 %v2132, 1.442695
        %v2178 = vpow.pop %v2177
        %v2179 = vmul.f32 %v2133, 1.442695
        %v2180 = vpow.pop %v2179
        %v2181 = vmul.f32 %v2134, 1.442695
        %v2182 = vpow.pop %v2181
        %v2183 = vmul.f32 %v2135, 1.442695
        %v2184 = vpow.pop %v2183
        %v2185 = vmul.f32 %v2136, 1.442695
        %v2186 = vpow.pop %v2185
        %v2187 = vmul.f32 %v2137, 1.442695
        %v2188 = vpow.pop %v2187
        %v2189 = vmul.f32 %v2138, 1.442695
        %v2190 = vpow.pop %v2189
        %v2191 = vmul.f32 %v2139, 1.442695
        %v2192 = vpow.pop %v2191
        %v2193 = vmul.f32 %v2140, 1.442695
        %v2194 = vpow.pop %v2193
        %v2195 = vmul.f32 %v2141, 1.442695
        %v2196 = vpow.pop %v2195
        %v2197 = vmul.f32 %v2142, 1.442695
        %v2198 = vpow.pop %v2197
        %v2199 = vmul.f32 %v2143, 1.442695
        %v2200 = vpow.pop %v2199
        %v2201 = vmul.f32 %v2144, 1.442695
        %v2202 = vpow.pop %v2201
        %v2203 = vmul.f32 %v2145, 1.442695
        %v2204 = vpow.pop %v2203
        %v2205 = vmul.f32 %v2146, 1.442695
        %v2206 = vpow.pop %v2205
        %v2207 = vmul.f32 %v2147, 1.442695
        %v2208 = vpow.pop %v2207
        %v2209 = vmul.f32 %v2148, 1.442695
        %v2210 = vpow.pop %v2209
        %v2211 = vmul.f32 %v2149, 1.442695
        %v2212 = vpow.pop %v2211
        %v2213 = vmul.f32 %v2150, 1.442695
        %v2214 = vpow.pop %v2213
        %2247 = vset.pattern.permute.xlu0 1
        %2248 = vperm.xlu0 %2247, %v2152
        %v2249 = vpop.permute.xlu0 %2248
        %2250 = vset.pattern.permute.xlu0 1
        %2251 = vperm.xlu0 %2250, %v2154
        %v2252 = vpop.permute.xlu0 %2251
        %2253 = vset.pattern.permute.xlu0 1
        %2254 = vperm.xlu0 %2253, %v2156
        %v2255 = vpop.permute.xlu0 %2254
        %2256 = vset.pattern.permute.xlu0 1
        %2257 = vperm.xlu0 %2256, %v2158
        %v2258 = vpop.permute.xlu0 %2257
        %2259 = vset.pattern.permute.xlu0 1
        %2260 = vperm.xlu0 %2259, %v2160
        %v2261 = vpop.permute.xlu0 %2260
        %2262 = vset.pattern.permute.xlu0 1
        %2263 = vperm.xlu0 %2262, %v2162
        %v2264 = vpop.permute.xlu0 %2263
        %2265 = vset.pattern.permute.xlu0 1
        %2266 = vperm.xlu0 %2265, %v2164
        %v2267 = vpop.permute.xlu0 %2266
        %2268 = vset.pattern.permute.xlu0 1
        %2269 = vperm.xlu0 %2268, %v2166
        %v2270 = vpop.permute.xlu0 %2269
        %2271 = vset.pattern.permute.xlu0 1
        %2272 = vperm.xlu0 %2271, %v2168
        %v2273 = vpop.permute.xlu0 %2272
        %2274 = vset.pattern.permute.xlu0 1
        %2275 = vperm.xlu0 %2274, %v2170
        %v2276 = vpop.permute.xlu0 %2275
        %2277 = vset.pattern.permute.xlu0 1
        %2278 = vperm.xlu0 %2277, %v2172
        %v2279 = vpop.permute.xlu0 %2278
        %2280 = vset.pattern.permute.xlu0 1
        %2281 = vperm.xlu0 %2280, %v2174
        %v2282 = vpop.permute.xlu0 %2281
        %2283 = vset.pattern.permute.xlu0 1
        %2284 = vperm.xlu0 %2283, %v2176
        %v2285 = vpop.permute.xlu0 %2284
        %2286 = vset.pattern.permute.xlu0 1
        %2287 = vperm.xlu0 %2286, %v2178
        %v2288 = vpop.permute.xlu0 %2287
        %2289 = vset.pattern.permute.xlu0 1
        %2290 = vperm.xlu0 %2289, %v2180
        %v2291 = vpop.permute.xlu0 %2290
        %2292 = vset.pattern.permute.xlu0 1
        %2293 = vperm.xlu0 %2292, %v2182
        %v2294 = vpop.permute.xlu0 %2293
        %2295 = vset.pattern.permute.xlu0 1
        %2296 = vperm.xlu0 %2295, %v2184
        %v2297 = vpop.permute.xlu0 %2296
        %2298 = vset.pattern.permute.xlu0 1
        %2299 = vperm.xlu0 %2298, %v2186
        %v2300 = vpop.permute.xlu0 %2299
        %2301 = vset.pattern.permute.xlu0 1
        %2302 = vperm.xlu0 %2301, %v2188
        %v2303 = vpop.permute.xlu0 %2302
        %2304 = vset.pattern.permute.xlu0 1
        %2305 = vperm.xlu0 %2304, %v2190
        %v2306 = vpop.permute.xlu0 %2305
        %2307 = vset.pattern.permute.xlu0 1
        %2308 = vperm.xlu0 %2307, %v2192
        %v2309 = vpop.permute.xlu0 %2308
        %2310 = vset.pattern.permute.xlu0 1
        %2311 = vperm.xlu0 %2310, %v2194
        %v2312 = vpop.permute.xlu0 %2311
        %2313 = vset.pattern.permute.xlu0 1
        %2314 = vperm.xlu0 %2313, %v2196
        %v2315 = vpop.permute.xlu0 %2314
        %2316 = vset.pattern.permute.xlu0 1
        %2317 = vperm.xlu0 %2316, %v2198
        %v2318 = vpop.permute.xlu0 %2317
        %2319 = vset.pattern.permute.xlu0 1
        %2320 = vperm.xlu0 %2319, %v2200
        %v2321 = vpop.permute.xlu0 %2320
        %2322 = vset.pattern.permute.xlu0 1
        %2323 = vperm.xlu0 %2322, %v2202
        %v2324 = vpop.permute.xlu0 %2323
        %2325 = vset.pattern.permute.xlu0 1
        %2326 = vperm.xlu0 %2325, %v2204
        %v2327 = vpop.permute.xlu0 %2326
        %2328 = vset.pattern.permute.xlu0 1
        %2329 = vperm.xlu0 %2328, %v2206
        %v2330 = vpop.permute.xlu0 %2329
        %2331 = vset.pattern.permute.xlu0 1
        %2332 = vperm.xlu0 %2331, %v2208
        %v2333 = vpop.permute.xlu0 %2332
        %2334 = vset.pattern.permute.xlu0 1
        %2335 = vperm.xlu0 %2334, %v2210
        %v2336 = vpop.permute.xlu0 %2335
        %2337 = vset.pattern.permute.xlu0 1
        %2338 = vperm.xlu0 %2337, %v2212
        %v2339 = vpop.permute.xlu0 %2338
        %2340 = vset.pattern.permute.xlu0 1
        %2341 = vperm.xlu0 %2340, %v2214
        %v2342 = vpop.permute.xlu0 %2341
        %v2343 = vperm.slane %v2249, %v1000
        %v2344 = vperm.slane %v2252, %v1002
        %v2345 = vsel %vm1004, %v2344, %v2343
        %v2346 = vperm.slane %v2255, %v1000
        %v2347 = vperm.slane %v2258, %v1002
        %v2348 = vsel %vm1004, %v2347, %v2346
        %v2349 = vperm.slane %v2261, %v1000
        %v2350 = vperm.slane %v2264, %v1002
        %v2351 = vsel %vm1004, %v2350, %v2349
        %v2352 = vperm.slane %v2267, %v1000
        %v2353 = vperm.slane %v2270, %v1002
        %v2354 = vsel %vm1004, %v2353, %v2352
        %v2355 = vperm.slane %v2273, %v1000
        %v2356 = vperm.slane %v2276, %v1002
        %v2357 = vsel %vm1004, %v2356, %v2355
        %v2358 = vperm.slane %v2279, %v1000
        %v2359 = vperm.slane %v2282, %v1002
        %v2360 = vsel %vm1004, %v2359, %v2358
        %v2361 = vperm.slane %v2285, %v1000
        %v2362 = vperm.slane %v2288, %v1002
        %v2363 = vsel %vm1004, %v2362, %v2361
        %v2364 = vperm.slane %v2291, %v1000
        %v2365 = vperm.slane %v2294, %v1002
        %v2366 = vsel %vm1004, %v2365, %v2364
        %v2367 = vperm.slane %v2297, %v1000
        %v2368 = vperm.slane %v2300, %v1002
        %v2369 = vsel %vm1004, %v2368, %v2367
        %v2370 = vperm.slane %v2303, %v1000
        %v2371 = vperm.slane %v2306, %v1002
        %v2372 = vsel %vm1004, %v2371, %v2370
        %v2373 = vperm.slane %v2309, %v1000
        %v2374 = vperm.slane %v2312, %v1002
        %v2375 = vsel %vm1004, %v2374, %v2373
        %v2376 = vperm.slane %v2315, %v1000
        %v2377 = vperm.slane %v2318, %v1002
        %v2378 = vsel %vm1004, %v2377, %v2376
        %v2379 = vperm.slane %v2321, %v1000
        %v2380 = vperm.slane %v2324, %v1002
        %v2381 = vsel %vm1004, %v2380, %v2379
        %v2382 = vperm.slane %v2327, %v1000
        %v2383 = vperm.slane %v2330, %v1002
        %v2384 = vsel %vm1004, %v2383, %v2382
        %v2385 = vperm.slane %v2333, %v1000
        %v2386 = vperm.slane %v2336, %v1002
        %v2387 = vsel %vm1004, %v2386, %v2385
        %v2388 = vperm.slane %v2339, %v1000
        %v2389 = vperm.slane %v2342, %v1002
        %v2390 = vsel %vm1004, %v2389, %v2388
        %v2391 = vsel %vm1051, %v2348, %v2345
        %v2392 = vsel %vm1053, %v2351, %v2391
        %v2393 = vsel %vm1055, %v2354, %v2392
        %v2394 = vsel %vm1057, %v2357, %v2393
        %v2395 = vsel %vm1059, %v2360, %v2394
        %v2396 = vsel %vm1061, %v2363, %v2395
        %v2397 = vsel %vm1063, %v2366, %v2396
        %v2398 = vsel %vm1051, %v2372, %v2369
        %v2399 = vsel %vm1053, %v2375, %v2398
        %v2400 = vsel %vm1055, %v2378, %v2399
        %v2401 = vsel %vm1057, %v2381, %v2400
        %v2402 = vsel %vm1059, %v2384, %v2401
        %v2403 = vsel %vm1061, %v2387, %v2402
        %v2404 = vsel %vm1063, %v2390, %v2403
        %v2407 = vsel %vm1074, %v2397, 0.0
        %2408 = vadd.xlane.f32.xlu0 %v2407
        %v2409 = vpop.xlane.xlu0 %2408
        %v2410 = vsel %vm1074, %v2404, 0.0
        %2411 = vadd.xlane.f32.xlu0 %v2410
        %v2412 = vpop.xlane.xlu0 %2411
        %v2415 = vperm.slane %v2409, 0
        %v2416 = vperm.slane %v2409, 1
        %v2417 = vperm.slane %v2409, 2
        %v2418 = vperm.slane %v2409, 3
        %v2419 = vperm.slane %v2409, 4
        %v2420 = vperm.slane %v2409, 5
        %v2421 = vperm.slane %v2409, 6
        %v2422 = vperm.slane %v2409, 7
        %v2423 = vperm.slane %v2412, 0
        %v2424 = vperm.slane %v2412, 1
        %v2425 = vperm.slane %v2412, 2
        %v2426 = vperm.slane %v2412, 3
        %v2427 = vperm.slane %v2412, 4
        %v2428 = vperm.slane %v2412, 5
        %v2429 = vperm.slane %v2412, 6
        %v2430 = vperm.slane %v2412, 7
        %v2447 = vrcp.pop %v2415
        %v2448 = vmul.f32 %v2415, %v2447
        %v2449 = vsub.f32 1.0, %v2448
        %v2450 = vmul.f32 %v2447, %v2449
        %v2451 = vadd.f32 %v2447, %v2450
        %vm2452 = vweird.f32 %v2415
        %vm2453 = vweird.f32 %v2447
        %vm2454 = vmor %vm2452, %vm2453
        %v2455 = vsel %vm2454, %v2447, %v2451
        %v2456 = vand.u32 2147483647, %v2415
        %vm2457 = vcmp.eq.f32.partialorder %v2456, 8.507059e+37
        %v2458 = vand.u32 %v2415, 2147483648
        %v2459 = vor.u32 1.1754944e-38, %v2458
        %v2460 = vsel %vm2457, %v2459, %v2455
        %v2461 = vmul.f32 %v2152, %v2460
        %v2462 = vmul.f32 %v2154, %v2460
        %v2463 = vrcp.pop %v2416
        %v2464 = vmul.f32 %v2416, %v2463
        %v2465 = vsub.f32 1.0, %v2464
        %v2466 = vmul.f32 %v2463, %v2465
        %v2467 = vadd.f32 %v2463, %v2466
        %vm2468 = vweird.f32 %v2416
        %vm2469 = vweird.f32 %v2463
        %vm2470 = vmor %vm2468, %vm2469
        %v2471 = vsel %vm2470, %v2463, %v2467
        %v2472 = vand.u32 2147483647, %v2416
        %vm2473 = vcmp.eq.f32.partialorder %v2472, 8.507059e+37
        %v2474 = vand.u32 %v2416, 2147483648
        %v2475 = vor.u32 1.1754944e-38, %v2474
        %v2476 = vsel %vm2473, %v2475, %v2471
        %v2477 = vmul.f32 %v2156, %v2476
        %v2478 = vmul.f32 %v2158, %v2476
        %v2479 = vrcp.pop %v2417
        %v2480 = vmul.f32 %v2417, %v2479
        %v2481 = vsub.f32 1.0, %v2480
        %v2482 = vmul.f32 %v2479, %v2481
        %v2483 = vadd.f32 %v2479, %v2482
        %vm2484 = vweird.f32 %v2417
        %vm2485 = vweird.f32 %v2479
        %vm2486 = vmor %vm2484, %vm2485
        %v2487 = vsel %vm2486, %v2479, %v2483
        %v2488 = vand.u32 2147483647, %v2417
        %vm2489 = vcmp.eq.f32.partialorder %v2488, 8.507059e+37
        %v2490 = vand.u32 %v2417, 2147483648
        %v2491 = vor.u32 1.1754944e-38, %v2490
        %v2492 = vsel %vm2489, %v2491, %v2487
        %v2493 = vmul.f32 %v2160, %v2492
        %v2494 = vmul.f32 %v2162, %v2492
        %v2495 = vrcp.pop %v2418
        %v2496 = vmul.f32 %v2418, %v2495
        %v2497 = vsub.f32 1.0, %v2496
        %v2498 = vmul.f32 %v2495, %v2497
        %v2499 = vadd.f32 %v2495, %v2498
        %vm2500 = vweird.f32 %v2418
        %vm2501 = vweird.f32 %v2495
        %vm2502 = vmor %vm2500, %vm2501
        %v2503 = vsel %vm2502, %v2495, %v2499
        %v2504 = vand.u32 2147483647, %v2418
        %vm2505 = vcmp.eq.f32.partialorder %v2504, 8.507059e+37
        %v2506 = vand.u32 %v2418, 2147483648
        %v2507 = vor.u32 1.1754944e-38, %v2506
        %v2508 = vsel %vm2505, %v2507, %v2503
        %v2509 = vmul.f32 %v2164, %v2508
        %v2510 = vmul.f32 %v2166, %v2508
        %v2511 = vrcp.pop %v2419
        %v2512 = vmul.f32 %v2419, %v2511
        %v2513 = vsub.f32 1.0, %v2512
        %v2514 = vmul.f32 %v2511, %v2513
        %v2515 = vadd.f32 %v2511, %v2514
        %vm2516 = vweird.f32 %v2419
        %vm2517 = vweird.f32 %v2511
        %vm2518 = vmor %vm2516, %vm2517
        %v2519 = vsel %vm2518, %v2511, %v2515
        %v2520 = vand.u32 2147483647, %v2419
        %vm2521 = vcmp.eq.f32.partialorder %v2520, 8.507059e+37
        %v2522 = vand.u32 %v2419, 2147483648
        %v2523 = vor.u32 1.1754944e-38, %v2522
        %v2524 = vsel %vm2521, %v2523, %v2519
        %v2525 = vmul.f32 %v2168, %v2524
        %v2526 = vmul.f32 %v2170, %v2524
        %v2527 = vrcp.pop %v2420
        %v2528 = vmul.f32 %v2420, %v2527
        %v2529 = vsub.f32 1.0, %v2528
        %v2530 = vmul.f32 %v2527, %v2529
        %v2531 = vadd.f32 %v2527, %v2530
        %vm2532 = vweird.f32 %v2420
        %vm2533 = vweird.f32 %v2527
        %vm2534 = vmor %vm2532, %vm2533
        %v2535 = vsel %vm2534, %v2527, %v2531
        %v2536 = vand.u32 2147483647, %v2420
        %vm2537 = vcmp.eq.f32.partialorder %v2536, 8.507059e+37
        %v2538 = vand.u32 %v2420, 2147483648
        %v2539 = vor.u32 1.1754944e-38, %v2538
        %v2540 = vsel %vm2537, %v2539, %v2535
        %v2541 = vmul.f32 %v2172, %v2540
        %v2542 = vmul.f32 %v2174, %v2540
        %v2543 = vrcp.pop %v2421
        %v2544 = vmul.f32 %v2421, %v2543
        %v2545 = vsub.f32 1.0, %v2544
        %v2546 = vmul.f32 %v2543, %v2545
        %v2547 = vadd.f32 %v2543, %v2546
        %vm2548 = vweird.f32 %v2421
        %vm2549 = vweird.f32 %v2543
        %vm2550 = vmor %vm2548, %vm2549
        %v2551 = vsel %vm2550, %v2543, %v2547
        %v2552 = vand.u32 2147483647, %v2421
        %vm2553 = vcmp.eq.f32.partialorder %v2552, 8.507059e+37
        %v2554 = vand.u32 %v2421, 2147483648
        %v2555 = vor.u32 1.1754944e-38, %v2554
        %v2556 = vsel %vm2553, %v2555, %v2551
        %v2557 = vmul.f32 %v2176, %v2556
        %v2558 = vmul.f32 %v2178, %v2556
        %v2559 = vrcp.pop %v2422
        %v2560 = vmul.f32 %v2422, %v2559
        %v2561 = vsub.f32 1.0, %v2560
        %v2562 = vmul.f32 %v2559, %v2561
        %v2563 = vadd.f32 %v2559, %v2562
        %vm2564 = vweird.f32 %v2422
        %vm2565 = vweird.f32 %v2559
        %vm2566 = vmor %vm2564, %vm2565
        %v2567 = vsel %vm2566, %v2559, %v2563
        %v2568 = vand.u32 2147483647, %v2422
        %vm2569 = vcmp.eq.f32.partialorder %v2568, 8.507059e+37
        %v2570 = vand.u32 %v2422, 2147483648
        %v2571 = vor.u32 1.1754944e-38, %v2570
        %v2572 = vsel %vm2569, %v2571, %v2567
        %v2573 = vmul.f32 %v2180, %v2572
        %v2574 = vmul.f32 %v2182, %v2572
        %v2575 = vrcp.pop %v2423
        %v2576 = vmul.f32 %v2423, %v2575
        %v2577 = vsub.f32 1.0, %v2576
        %v2578 = vmul.f32 %v2575, %v2577
        %v2579 = vadd.f32 %v2575, %v2578
        %vm2580 = vweird.f32 %v2423
        %vm2581 = vweird.f32 %v2575
        %vm2582 = vmor %vm2580, %vm2581
        %v2583 = vsel %vm2582, %v2575, %v2579
        %v2584 = vand.u32 2147483647, %v2423
        %vm2585 = vcmp.eq.f32.partialorder %v2584, 8.507059e+37
        %v2586 = vand.u32 %v2423, 2147483648
        %v2587 = vor.u32 1.1754944e-38, %v2586
        %v2588 = vsel %vm2585, %v2587, %v2583
        %v2589 = vmul.f32 %v2184, %v2588
        %v2590 = vmul.f32 %v2186, %v2588
        %v2591 = vrcp.pop %v2424
        %v2592 = vmul.f32 %v2424, %v2591
        %v2593 = vsub.f32 1.0, %v2592
        %v2594 = vmul.f32 %v2591, %v2593
        %v2595 = vadd.f32 %v2591, %v2594
        %vm2596 = vweird.f32 %v2424
        %vm2597 = vweird.f32 %v2591
        %vm2598 = vmor %vm2596, %vm2597
        %v2599 = vsel %vm2598, %v2591, %v2595
        %v2600 = vand.u32 2147483647, %v2424
        %vm2601 = vcmp.eq.f32.partialorder %v2600, 8.507059e+37
        %v2602 = vand.u32 %v2424, 2147483648
        %v2603 = vor.u32 1.1754944e-38, %v2602
        %v2604 = vsel %vm2601, %v2603, %v2599
        %v2605 = vmul.f32 %v2188, %v2604
        %v2606 = vmul.f32 %v2190, %v2604
        %v2607 = vrcp.pop %v2425
        %v2608 = vmul.f32 %v2425, %v2607
        %v2609 = vsub.f32 1.0, %v2608
        %v2610 = vmul.f32 %v2607, %v2609
        %v2611 = vadd.f32 %v2607, %v2610
        %vm2612 = vweird.f32 %v2425
        %vm2613 = vweird.f32 %v2607
        %vm2614 = vmor %vm2612, %vm2613
        %v2615 = vsel %vm2614, %v2607, %v2611
        %v2616 = vand.u32 2147483647, %v2425
        %vm2617 = vcmp.eq.f32.partialorder %v2616, 8.507059e+37
        %v2618 = vand.u32 %v2425, 2147483648
        %v2619 = vor.u32 1.1754944e-38, %v2618
        %v2620 = vsel %vm2617, %v2619, %v2615
        %v2621 = vmul.f32 %v2192, %v2620
        %v2622 = vmul.f32 %v2194, %v2620
        %v2623 = vrcp.pop %v2426
        %v2624 = vmul.f32 %v2426, %v2623
        %v2625 = vsub.f32 1.0, %v2624
        %v2626 = vmul.f32 %v2623, %v2625
        %v2627 = vadd.f32 %v2623, %v2626
        %vm2628 = vweird.f32 %v2426
        %vm2629 = vweird.f32 %v2623
        %vm2630 = vmor %vm2628, %vm2629
        %v2631 = vsel %vm2630, %v2623, %v2627
        %v2632 = vand.u32 2147483647, %v2426
        %vm2633 = vcmp.eq.f32.partialorder %v2632, 8.507059e+37
        %v2634 = vand.u32 %v2426, 2147483648
        %v2635 = vor.u32 1.1754944e-38, %v2634
        %v2636 = vsel %vm2633, %v2635, %v2631
        %v2637 = vmul.f32 %v2196, %v2636
        %v2638 = vmul.f32 %v2198, %v2636
        %v2639 = vrcp.pop %v2427
        %v2640 = vmul.f32 %v2427, %v2639
        %v2641 = vsub.f32 1.0, %v2640
        %v2642 = vmul.f32 %v2639, %v2641
        %v2643 = vadd.f32 %v2639, %v2642
        %vm2644 = vweird.f32 %v2427
        %vm2645 = vweird.f32 %v2639
        %vm2646 = vmor %vm2644, %vm2645
        %v2647 = vsel %vm2646, %v2639, %v2643
        %v2648 = vand.u32 2147483647, %v2427
        %vm2649 = vcmp.eq.f32.partialorder %v2648, 8.507059e+37
        %v2650 = vand.u32 %v2427, 2147483648
        %v2651 = vor.u32 1.1754944e-38, %v2650
        %v2652 = vsel %vm2649, %v2651, %v2647
        %v2653 = vmul.f32 %v2200, %v2652
        %v2654 = vmul.f32 %v2202, %v2652
        %v2655 = vrcp.pop %v2428
        %v2656 = vmul.f32 %v2428, %v2655
        %v2657 = vsub.f32 1.0, %v2656
        %v2658 = vmul.f32 %v2655, %v2657
        %v2659 = vadd.f32 %v2655, %v2658
        %vm2660 = vweird.f32 %v2428
        %vm2661 = vweird.f32 %v2655
        %vm2662 = vmor %vm2660, %vm2661
        %v2663 = vsel %vm2662, %v2655, %v2659
        %v2664 = vand.u32 2147483647, %v2428
        %vm2665 = vcmp.eq.f32.partialorder %v2664, 8.507059e+37
        %v2666 = vand.u32 %v2428, 2147483648
        %v2667 = vor.u32 1.1754944e-38, %v2666
        %v2668 = vsel %vm2665, %v2667, %v2663
        %v2669 = vmul.f32 %v2204, %v2668
        %v2670 = vmul.f32 %v2206, %v2668
        %v2671 = vrcp.pop %v2429
        %v2672 = vmul.f32 %v2429, %v2671
        %v2673 = vsub.f32 1.0, %v2672
        %v2674 = vmul.f32 %v2671, %v2673
        %v2675 = vadd.f32 %v2671, %v2674
        %vm2676 = vweird.f32 %v2429
        %vm2677 = vweird.f32 %v2671
        %vm2678 = vmor %vm2676, %vm2677
        %v2679 = vsel %vm2678, %v2671, %v2675
        %v2680 = vand.u32 2147483647, %v2429
        %vm2681 = vcmp.eq.f32.partialorder %v2680, 8.507059e+37
        %v2682 = vand.u32 %v2429, 2147483648
        %v2683 = vor.u32 1.1754944e-38, %v2682
        %v2684 = vsel %vm2681, %v2683, %v2679
        %v2685 = vmul.f32 %v2208, %v2684
        %v2686 = vmul.f32 %v2210, %v2684
        %v2687 = vrcp.pop %v2430
        %v2688 = vmul.f32 %v2430, %v2687
        %v2689 = vsub.f32 1.0, %v2688
        %v2690 = vmul.f32 %v2687, %v2689
        %v2691 = vadd.f32 %v2687, %v2690
        %vm2692 = vweird.f32 %v2430
        %vm2693 = vweird.f32 %v2687
        %vm2694 = vmor %vm2692, %vm2693
        %v2695 = vsel %vm2694, %v2687, %v2691
        %v2696 = vand.u32 2147483647, %v2430
        %vm2697 = vcmp.eq.f32.partialorder %v2696, 8.507059e+37
        %v2698 = vand.u32 %v2430, 2147483648
        %v2699 = vor.u32 1.1754944e-38, %v2698
        %v2700 = vsel %vm2697, %v2699, %v2695
        %v2701 = vmul.f32 %v2212, %v2700
        %v2702 = vmul.f32 %v2214, %v2700
        %2735 = vset.pattern.permute.xlu0 1
        %2736 = vperm.xlu0 %2735, %v2461
        %v2737 = vpop.permute.xlu0 %2736
        %2738 = vset.pattern.permute.xlu0 1
        %2739 = vperm.xlu0 %2738, %v2462
        %v2740 = vpop.permute.xlu0 %2739
        %2741 = vset.pattern.permute.xlu0 1
        %2742 = vperm.xlu0 %2741, %v2477
        %v2743 = vpop.permute.xlu0 %2742
        %2744 = vset.pattern.permute.xlu0 1
        %2745 = vperm.xlu0 %2744, %v2478
        %v2746 = vpop.permute.xlu0 %2745
        %2747 = vset.pattern.permute.xlu0 1
        %2748 = vperm.xlu0 %2747, %v2493
        %v2749 = vpop.permute.xlu0 %2748
        %2750 = vset.pattern.permute.xlu0 1
        %2751 = vperm.xlu0 %2750, %v2494
        %v2752 = vpop.permute.xlu0 %2751
        %2753 = vset.pattern.permute.xlu0 1
        %2754 = vperm.xlu0 %2753, %v2509
        %v2755 = vpop.permute.xlu0 %2754
        %2756 = vset.pattern.permute.xlu0 1
        %2757 = vperm.xlu0 %2756, %v2510
        %v2758 = vpop.permute.xlu0 %2757
        %2759 = vset.pattern.permute.xlu0 1
        %2760 = vperm.xlu0 %2759, %v2525
        %v2761 = vpop.permute.xlu0 %2760
        %2762 = vset.pattern.permute.xlu0 1
        %2763 = vperm.xlu0 %2762, %v2526
        %v2764 = vpop.permute.xlu0 %2763
        %2765 = vset.pattern.permute.xlu0 1
        %2766 = vperm.xlu0 %2765, %v2541
        %v2767 = vpop.permute.xlu0 %2766
        %2768 = vset.pattern.permute.xlu0 1
        %2769 = vperm.xlu0 %2768, %v2542
        %v2770 = vpop.permute.xlu0 %2769
        %2771 = vset.pattern.permute.xlu0 1
        %2772 = vperm.xlu0 %2771, %v2557
        %v2773 = vpop.permute.xlu0 %2772
        %2774 = vset.pattern.permute.xlu0 1
        %2775 = vperm.xlu0 %2774, %v2558
        %v2776 = vpop.permute.xlu0 %2775
        %2777 = vset.pattern.permute.xlu0 1
        %2778 = vperm.xlu0 %2777, %v2573
        %v2779 = vpop.permute.xlu0 %2778
        %2780 = vset.pattern.permute.xlu0 1
        %2781 = vperm.xlu0 %2780, %v2574
        %v2782 = vpop.permute.xlu0 %2781
        %2783 = vset.pattern.permute.xlu0 1
        %2784 = vperm.xlu0 %2783, %v2589
        %v2785 = vpop.permute.xlu0 %2784
        %2786 = vset.pattern.permute.xlu0 1
        %2787 = vperm.xlu0 %2786, %v2590
        %v2788 = vpop.permute.xlu0 %2787
        %2789 = vset.pattern.permute.xlu0 1
        %2790 = vperm.xlu0 %2789, %v2605
        %v2791 = vpop.permute.xlu0 %2790
        %2792 = vset.pattern.permute.xlu0 1
        %2793 = vperm.xlu0 %2792, %v2606
        %v2794 = vpop.permute.xlu0 %2793
        %2795 = vset.pattern.permute.xlu0 1
        %2796 = vperm.xlu0 %2795, %v2621
        %v2797 = vpop.permute.xlu0 %2796
        %2798 = vset.pattern.permute.xlu0 1
        %2799 = vperm.xlu0 %2798, %v2622
        %v2800 = vpop.permute.xlu0 %2799
        %2801 = vset.pattern.permute.xlu0 1
        %2802 = vperm.xlu0 %2801, %v2637
        %v2803 = vpop.permute.xlu0 %2802
        %2804 = vset.pattern.permute.xlu0 1
        %2805 = vperm.xlu0 %2804, %v2638
        %v2806 = vpop.permute.xlu0 %2805
        %2807 = vset.pattern.permute.xlu0 1
        %2808 = vperm.xlu0 %2807, %v2653
        %v2809 = vpop.permute.xlu0 %2808
        %2810 = vset.pattern.permute.xlu0 1
        %2811 = vperm.xlu0 %2810, %v2654
        %v2812 = vpop.permute.xlu0 %2811
        %2813 = vset.pattern.permute.xlu0 1
        %2814 = vperm.xlu0 %2813, %v2669
        %v2815 = vpop.permute.xlu0 %2814
        %2816 = vset.pattern.permute.xlu0 1
        %2817 = vperm.xlu0 %2816, %v2670
        %v2818 = vpop.permute.xlu0 %2817
        %2819 = vset.pattern.permute.xlu0 1
        %2820 = vperm.xlu0 %2819, %v2685
        %v2821 = vpop.permute.xlu0 %2820
        %2822 = vset.pattern.permute.xlu0 1
        %2823 = vperm.xlu0 %2822, %v2686
        %v2824 = vpop.permute.xlu0 %2823
        %2825 = vset.pattern.permute.xlu0 1
        %2826 = vperm.xlu0 %2825, %v2701
        %v2827 = vpop.permute.xlu0 %2826
        %2828 = vset.pattern.permute.xlu0 1
        %2829 = vperm.xlu0 %2828, %v2702
        %v2830 = vpop.permute.xlu0 %2829
        %v2831 = vperm.slane %v2737, %v1000
        %v2832 = vperm.slane %v2740, %v1002
        %v2833 = vsel %vm1004, %v2832, %v2831
        %v2834 = vperm.slane %v2743, %v1000
        %v2835 = vperm.slane %v2746, %v1002
        %v2836 = vsel %vm1004, %v2835, %v2834
        %v2837 = vperm.slane %v2749, %v1000
        %v2838 = vperm.slane %v2752, %v1002
        %v2839 = vsel %vm1004, %v2838, %v2837
        %v2840 = vperm.slane %v2755, %v1000
        %v2841 = vperm.slane %v2758, %v1002
        %v2842 = vsel %vm1004, %v2841, %v2840
        %v2843 = vperm.slane %v2761, %v1000
        %v2844 = vperm.slane %v2764, %v1002
        %v2845 = vsel %vm1004, %v2844, %v2843
        %v2846 = vperm.slane %v2767, %v1000
        %v2847 = vperm.slane %v2770, %v1002
        %v2848 = vsel %vm1004, %v2847, %v2846
        %v2849 = vperm.slane %v2773, %v1000
        %v2850 = vperm.slane %v2776, %v1002
        %v2851 = vsel %vm1004, %v2850, %v2849
        %v2852 = vperm.slane %v2779, %v1000
        %v2853 = vperm.slane %v2782, %v1002
        %v2854 = vsel %vm1004, %v2853, %v2852
        %v2855 = vperm.slane %v2785, %v1000
        %v2856 = vperm.slane %v2788, %v1002
        %v2857 = vsel %vm1004, %v2856, %v2855
        %v2858 = vperm.slane %v2791, %v1000
        %v2859 = vperm.slane %v2794, %v1002
        %v2860 = vsel %vm1004, %v2859, %v2858
        %v2861 = vperm.slane %v2797, %v1000
        %v2862 = vperm.slane %v2800, %v1002
        %v2863 = vsel %vm1004, %v2862, %v2861
        %v2864 = vperm.slane %v2803, %v1000
        %v2865 = vperm.slane %v2806, %v1002
        %v2866 = vsel %vm1004, %v2865, %v2864
        %v2867 = vperm.slane %v2809, %v1000
        %v2868 = vperm.slane %v2812, %v1002
        %v2869 = vsel %vm1004, %v2868, %v2867
        %v2870 = vperm.slane %v2815, %v1000
        %v2871 = vperm.slane %v2818, %v1002
        %v2872 = vsel %vm1004, %v2871, %v2870
        %v2873 = vperm.slane %v2821, %v1000
        %v2874 = vperm.slane %v2824, %v1002
        %v2875 = vsel %vm1004, %v2874, %v2873
        %v2876 = vperm.slane %v2827, %v1000
        %v2877 = vperm.slane %v2830, %v1002
        %v2878 = vsel %vm1004, %v2877, %v2876
        %v2879 = vsel %vm1051, %v2836, %v2833
        %v2880 = vsel %vm1053, %v2839, %v2879
        %v2881 = vsel %vm1055, %v2842, %v2880
        %v2882 = vsel %vm1057, %v2845, %v2881
        %v2883 = vsel %vm1059, %v2848, %v2882
        %v2884 = vsel %vm1061, %v2851, %v2883
        %v2885 = vsel %vm1063, %v2854, %v2884
        %v2886 = vsel %vm1051, %v2860, %v2857
        %v2887 = vsel %vm1053, %v2863, %v2886
        %v2888 = vsel %vm1055, %v2866, %v2887
        %v2889 = vsel %vm1057, %v2869, %v2888
        %v2890 = vsel %vm1059, %v2872, %v2889
        %v2891 = vsel %vm1061, %v2875, %v2890
        %v2892 = vsel %vm1063, %v2878, %v2891
        %2895 = vrot.lane.b32.xlu0 %v621, 120
        %v2896 = vpop.permute.xlu0 %2895
        %2897 = vrot.lane.b32.xlu0 %v624, 120
        %v2898 = vpop.permute.xlu0 %2897
        %v2901 = vsel %vm1074, %v2885, 0
        %v2903 = vsel %vm1074, %v2892, 0
        %2905 = vmatpush.msra.mxu0 0.0
        %2906 = vmatpush.msra.mxu0 0.0
        %2907 = vmatpush.msra.mxu0 0.0
        %2908 = vmatpush.msra.mxu0 0.0
        %2909 = vmatpush.msra.mxu0 0.0
        %2910 = vmatpush.msra.mxu0 0.0
        %2911 = vmatpush.msra.mxu0 0.0
        %2912 = vmatpush.msra.mxu0 0.0
        %2913 = vmatpush.msra.mxu0 0.0
        %2914 = vmatpush.msra.mxu0 0.0
        %2915 = vmatpush.msra.mxu0 0.0
        %2916 = vmatpush.msra.mxu0 0.0
        %2917 = vmatpush.msra.mxu0 0.0
        %2918 = vmatpush.msra.mxu0 0.0
        %2919 = vmatpush.msra.mxu0 %v2898
        %2920 = vmatpush.msra.mxu0 %v2896
        %2921 = vmatmul.f32.gmra.mxu0 %v2901
        %v2922 = vpop.f32.mrf.mxu0
        %v2923 = vadd.f32 0.0, %v2922
        %2924 = vmatmul.f32.gmra.mxu0 %v2903
        %v2925 = vpop.f32.mrf.mxu0
        %v2926 = vadd.f32 0.0, %v2925
        %2927 = vdwg.mxu0
        %2930 = vrot.lane.b32.xlu0 %v2923, 8
        %v2931 = vpop.permute.xlu0 %2930
        %2932 = vrot.lane.b32.xlu0 %v2926, 8
        %v2933 = vpop.permute.xlu0 %2932
        %2936 = vst.msk [vmem:[#allocation2] sm:$0xff] %vm1004, %v2931
        %2937 = vst.msk [vmem:[#allocation2 + $0x8] sm:$0xff] %vm1004, %v2933
        %2938 = vset.pattern.permute.xlu0 2
        %2939 = vperm.xlu0 %2938, %v776
        %v2940 = vpop.permute.xlu0 %2939
        %2941 = vset.pattern.permute.xlu0 2
        %2942 = vperm.xlu0 %2941, %v779
        %v2943 = vpop.permute.xlu0 %2942
        %2944 = vset.pattern.permute.xlu0 2
        %2945 = vperm.xlu0 %2944, %v782
        %v2946 = vpop.permute.xlu0 %2945
        %2947 = vset.pattern.permute.xlu0 2
        %2948 = vperm.xlu0 %2947, %v785
        %v2949 = vpop.permute.xlu0 %2948
        %2950 = vset.pattern.permute.xlu0 2
        %2951 = vperm.xlu0 %2950, %v788
        %v2952 = vpop.permute.xlu0 %2951
        %2953 = vset.pattern.permute.xlu0 2
        %2954 = vperm.xlu0 %2953, %v791
        %v2955 = vpop.permute.xlu0 %2954
        %2956 = vset.pattern.permute.xlu0 2
        %2957 = vperm.xlu0 %2956, %v794
        %v2958 = vpop.permute.xlu0 %2957
        %2959 = vset.pattern.permute.xlu0 2
        %2960 = vperm.xlu0 %2959, %v797
        %v2961 = vpop.permute.xlu0 %2960
        %2962 = vset.pattern.permute.xlu0 2
        %2963 = vperm.xlu0 %2962, %v800
        %v2964 = vpop.permute.xlu0 %2963
        %2965 = vset.pattern.permute.xlu0 2
        %2966 = vperm.xlu0 %2965, %v803
        %v2967 = vpop.permute.xlu0 %2966
        %2968 = vset.pattern.permute.xlu0 2
        %2969 = vperm.xlu0 %2968, %v806
        %v2970 = vpop.permute.xlu0 %2969
        %2971 = vset.pattern.permute.xlu0 2
        %2972 = vperm.xlu0 %2971, %v809
        %v2973 = vpop.permute.xlu0 %2972
        %2974 = vset.pattern.permute.xlu0 2
        %2975 = vperm.xlu0 %2974, %v812
        %v2976 = vpop.permute.xlu0 %2975
        %2977 = vset.pattern.permute.xlu0 2
        %2978 = vperm.xlu0 %2977, %v815
        %v2979 = vpop.permute.xlu0 %2978
        %2980 = vset.pattern.permute.xlu0 2
        %2981 = vperm.xlu0 %2980, %v818
        %v2982 = vpop.permute.xlu0 %2981
        %2983 = vset.pattern.permute.xlu0 2
        %2984 = vperm.xlu0 %2983, %v821
        %v2985 = vpop.permute.xlu0 %2984
        %2986 = vset.pattern.permute.xlu0 2
        %2987 = vperm.xlu0 %2986, %v824
        %v2988 = vpop.permute.xlu0 %2987
        %2989 = vset.pattern.permute.xlu0 2
        %2990 = vperm.xlu0 %2989, %v827
        %v2991 = vpop.permute.xlu0 %2990
        %2992 = vset.pattern.permute.xlu0 2
        %2993 = vperm.xlu0 %2992, %v830
        %v2994 = vpop.permute.xlu0 %2993
        %2995 = vset.pattern.permute.xlu0 2
        %2996 = vperm.xlu0 %2995, %v833
        %v2997 = vpop.permute.xlu0 %2996
        %2998 = vset.pattern.permute.xlu0 2
        %2999 = vperm.xlu0 %2998, %v836
        %v3000 = vpop.permute.xlu0 %2999
        %3001 = vset.pattern.permute.xlu0 2
        %3002 = vperm.xlu0 %3001, %v839
        %v3003 = vpop.permute.xlu0 %3002
        %3004 = vset.pattern.permute.xlu0 2
        %3005 = vperm.xlu0 %3004, %v842
        %v3006 = vpop.permute.xlu0 %3005
        %3007 = vset.pattern.permute.xlu0 2
        %3008 = vperm.xlu0 %3007, %v845
        %v3009 = vpop.permute.xlu0 %3008
        %3010 = vset.pattern.permute.xlu0 2
        %3011 = vperm.xlu0 %3010, %v848
        %v3012 = vpop.permute.xlu0 %3011
        %3013 = vset.pattern.permute.xlu0 2
        %3014 = vperm.xlu0 %3013, %v851
        %v3015 = vpop.permute.xlu0 %3014
        %3016 = vset.pattern.permute.xlu0 2
        %3017 = vperm.xlu0 %3016, %v854
        %v3018 = vpop.permute.xlu0 %3017
        %3019 = vset.pattern.permute.xlu0 2
        %3020 = vperm.xlu0 %3019, %v857
        %v3021 = vpop.permute.xlu0 %3020
        %3022 = vset.pattern.permute.xlu0 2
        %3023 = vperm.xlu0 %3022, %v860
        %v3024 = vpop.permute.xlu0 %3023
        %3025 = vset.pattern.permute.xlu0 2
        %3026 = vperm.xlu0 %3025, %v863
        %v3027 = vpop.permute.xlu0 %3026
        %3028 = vset.pattern.permute.xlu0 2
        %3029 = vperm.xlu0 %3028, %v866
        %v3030 = vpop.permute.xlu0 %3029
        %3031 = vset.pattern.permute.xlu0 2
        %3032 = vperm.xlu0 %3031, %v869
        %v3033 = vpop.permute.xlu0 %3032
        %v3034 = vperm.slane %v2940, %v1000
        %v3035 = vperm.slane %v2943, %v1002
        %v3036 = vsel %vm1004, %v3035, %v3034
        %v3037 = vperm.slane %v2946, %v1000
        %v3038 = vperm.slane %v2949, %v1002
        %v3039 = vsel %vm1004, %v3038, %v3037
        %v3040 = vperm.slane %v2952, %v1000
        %v3041 = vperm.slane %v2955, %v1002
        %v3042 = vsel %vm1004, %v3041, %v3040
        %v3043 = vperm.slane %v2958, %v1000
        %v3044 = vperm.slane %v2961, %v1002
        %v3045 = vsel %vm1004, %v3044, %v3043
        %v3046 = vperm.slane %v2964, %v1000
        %v3047 = vperm.slane %v2967, %v1002
        %v3048 = vsel %vm1004, %v3047, %v3046
        %v3049 = vperm.slane %v2970, %v1000
        %v3050 = vperm.slane %v2973, %v1002
        %v3051 = vsel %vm1004, %v3050, %v3049
        %v3052 = vperm.slane %v2976, %v1000
        %v3053 = vperm.slane %v2979, %v1002
        %v3054 = vsel %vm1004, %v3053, %v3052
        %v3055 = vperm.slane %v2982, %v1000
        %v3056 = vperm.slane %v2985, %v1002
        %v3057 = vsel %vm1004, %v3056, %v3055
        %v3058 = vperm.slane %v2988, %v1000
        %v3059 = vperm.slane %v2991, %v1002
        %v3060 = vsel %vm1004, %v3059, %v3058
        %v3061 = vperm.slane %v2994, %v1000
        %v3062 = vperm.slane %v2997, %v1002
        %v3063 = vsel %vm1004, %v3062, %v3061
        %v3064 = vperm.slane %v3000, %v1000
        %v3065 = vperm.slane %v3003, %v1002
        %v3066 = vsel %vm1004, %v3065, %v3064
        %v3067 = vperm.slane %v3006, %v1000
        %v3068 = vperm.slane %v3009, %v1002
        %v3069 = vsel %vm1004, %v3068, %v3067
        %v3070 = vperm.slane %v3012, %v1000
        %v3071 = vperm.slane %v3015, %v1002
        %v3072 = vsel %vm1004, %v3071, %v3070
        %v3073 = vperm.slane %v3018, %v1000
        %v3074 = vperm.slane %v3021, %v1002
        %v3075 = vsel %vm1004, %v3074, %v3073
        %v3076 = vperm.slane %v3024, %v1000
        %v3077 = vperm.slane %v3027, %v1002
        %v3078 = vsel %vm1004, %v3077, %v3076
        %v3079 = vperm.slane %v3030, %v1000
        %v3080 = vperm.slane %v3033, %v1002
        %v3081 = vsel %vm1004, %v3080, %v3079
        %v3082 = vsel %vm1051, %v3039, %v3036
        %v3083 = vsel %vm1053, %v3042, %v3082
        %v3084 = vsel %vm1055, %v3045, %v3083
        %v3085 = vsel %vm1057, %v3048, %v3084
        %v3086 = vsel %vm1059, %v3051, %v3085
        %v3087 = vsel %vm1061, %v3054, %v3086
        %v3088 = vsel %vm1063, %v3057, %v3087
        %v3089 = vsel %vm1051, %v3063, %v3060
        %v3090 = vsel %vm1053, %v3066, %v3089
        %v3091 = vsel %vm1055, %v3069, %v3090
        %v3092 = vsel %vm1057, %v3072, %v3091
        %v3093 = vsel %vm1059, %v3075, %v3092
        %v3094 = vsel %vm1061, %v3078, %v3093
        %v3095 = vsel %vm1063, %v3081, %v3094
        %v3098 = vsel %vm1074, %v3088, -inf
        %3099 = vmax.xlane.f32.xlu0 %v3098
        %v3100 = vpop.xlane.xlu0 %3099
        %v3101 = vsel %vm1074, %v3095, -inf
        %3102 = vmax.xlane.f32.xlu0 %v3101
        %v3103 = vpop.xlane.xlu0 %3102
        %v3106 = vperm.slane %v3100, 0
        %v3107 = vperm.slane %v3100, 1
        %v3108 = vperm.slane %v3100, 2
        %v3109 = vperm.slane %v3100, 3
        %v3110 = vperm.slane %v3100, 4
        %v3111 = vperm.slane %v3100, 5
        %v3112 = vperm.slane %v3100, 6
        %v3113 = vperm.slane %v3100, 7
        %v3114 = vperm.slane %v3103, 0
        %v3115 = vperm.slane %v3103, 1
        %v3116 = vperm.slane %v3103, 2
        %v3117 = vperm.slane %v3103, 3
        %v3118 = vperm.slane %v3103, 4
        %v3119 = vperm.slane %v3103, 5
        %v3120 = vperm.slane %v3103, 6
        %v3121 = vperm.slane %v3103, 7
        %v3138 = vsub.f32 %v776, %v3106
        %v3139 = vsub.f32 %v779, %v3106
        %v3140 = vsub.f32 %v782, %v3107
        %v3141 = vsub.f32 %v785, %v3107
        %v3142 = vsub.f32 %v788, %v3108
        %v3143 = vsub.f32 %v791, %v3108
        %v3144 = vsub.f32 %v794, %v3109
        %v3145 = vsub.f32 %v797, %v3109
        %v3146 = vsub.f32 %v800, %v3110
        %v3147 = vsub.f32 %v803, %v3110
        %v3148 = vsub.f32 %v806, %v3111
        %v3149 = vsub.f32 %v809, %v3111
        %v3150 = vsub.f32 %v812, %v3112
        %v3151 = vsub.f32 %v815, %v3112
        %v3152 = vsub.f32 %v818, %v3113
        %v3153 = vsub.f32 %v821, %v3113
        %v3154 = vsub.f32 %v824, %v3114
        %v3155 = vsub.f32 %v827, %v3114
        %v3156 = vsub.f32 %v830, %v3115
        %v3157 = vsub.f32 %v833, %v3115
        %v3158 = vsub.f32 %v836, %v3116
        %v3159 = vsub.f32 %v839, %v3116
        %v3160 = vsub.f32 %v842, %v3117
        %v3161 = vsub.f32 %v845, %v3117
        %v3162 = vsub.f32 %v848, %v3118
        %v3163 = vsub.f32 %v851, %v3118
        %v3164 = vsub.f32 %v854, %v3119
        %v3165 = vsub.f32 %v857, %v3119
        %v3166 = vsub.f32 %v860, %v3120
        %v3167 = vsub.f32 %v863, %v3120
        %v3168 = vsub.f32 %v866, %v3121
        %v3169 = vsub.f32 %v869, %v3121
        %v3170 = vmul.f32 %v3138, 1.442695
        %v3171 = vpow.pop %v3170
        %v3172 = vmul.f32 %v3139, 1.442695
        %v3173 = vpow.pop %v3172
        %v3174 = vmul.f32 %v3140, 1.442695
        %v3175 = vpow.pop %v3174
        %v3176 = vmul.f32 %v3141, 1.442695
        %v3177 = vpow.pop %v3176
        %v3178 = vmul.f32 %v3142, 1.442695
        %v3179 = vpow.pop %v3178
        %v3180 = vmul.f32 %v3143, 1.442695
        %v3181 = vpow.pop %v3180
        %v3182 = vmul.f32 %v3144, 1.442695
        %v3183 = vpow.pop %v3182
        %v3184 = vmul.f32 %v3145, 1.442695
        %v3185 = vpow.pop %v3184
        %v3186 = vmul.f32 %v3146, 1.442695
        %v3187 = vpow.pop %v3186
        %v3188 = vmul.f32 %v3147, 1.442695
        %v3189 = vpow.pop %v3188
        %v3190 = vmul.f32 %v3148, 1.442695
        %v3191 = vpow.pop %v3190
        %v3192 = vmul.f32 %v3149, 1.442695
        %v3193 = vpow.pop %v3192
        %v3194 = vmul.f32 %v3150, 1.442695
        %v3195 = vpow.pop %v3194
        %v3196 = vmul.f32 %v3151, 1.442695
        %v3197 = vpow.pop %v3196
        %v3198 = vmul.f32 %v3152, 1.442695
        %v3199 = vpow.pop %v3198
        %v3200 = vmul.f32 %v3153, 1.442695
        %v3201 = vpow.pop %v3200
        %v3202 = vmul.f32 %v3154, 1.442695
        %v3203 = vpow.pop %v3202
        %v3204 = vmul.f32 %v3155, 1.442695
        %v3205 = vpow.pop %v3204
        %v3206 = vmul.f32 %v3156, 1.442695
        %v3207 = vpow.pop %v3206
        %v3208 = vmul.f32 %v3157, 1.442695
        %v3209 = vpow.pop %v3208
        %v3210 = vmul.f32 %v3158, 1.442695
        %v3211 = vpow.pop %v3210
        %v3212 = vmul.f32 %v3159, 1.442695
        %v3213 = vpow.pop %v3212
        %v3214 = vmul.f32 %v3160, 1.442695
        %v3215 = vpow.pop %v3214
        %v3216 = vmul.f32 %v3161, 1.442695
        %v3217 = vpow.pop %v3216
        %v3218 = vmul.f32 %v3162, 1.442695
        %v3219 = vpow.pop %v3218
        %v3220 = vmul.f32 %v3163, 1.442695
        %v3221 = vpow.pop %v3220
        %v3222 = vmul.f32 %v3164, 1.442695
        %v3223 = vpow.pop %v3222
        %v3224 = vmul.f32 %v3165, 1.442695
        %v3225 = vpow.pop %v3224
        %v3226 = vmul.f32 %v3166, 1.442695
        %v3227 = vpow.pop %v3226
        %v3228 = vmul.f32 %v3167, 1.442695
        %v3229 = vpow.pop %v3228
        %v3230 = vmul.f32 %v3168, 1.442695
        %v3231 = vpow.pop %v3230
        %v3232 = vmul.f32 %v3169, 1.442695
        %v3233 = vpow.pop %v3232
        %3266 = vset.pattern.permute.xlu0 2
        %3267 = vperm.xlu0 %3266, %v3171
        %v3268 = vpop.permute.xlu0 %3267
        %3269 = vset.pattern.permute.xlu0 2
        %3270 = vperm.xlu0 %3269, %v3173
        %v3271 = vpop.permute.xlu0 %3270
        %3272 = vset.pattern.permute.xlu0 2
        %3273 = vperm.xlu0 %3272, %v3175
        %v3274 = vpop.permute.xlu0 %3273
        %3275 = vset.pattern.permute.xlu0 2
        %3276 = vperm.xlu0 %3275, %v3177
        %v3277 = vpop.permute.xlu0 %3276
        %3278 = vset.pattern.permute.xlu0 2
        %3279 = vperm.xlu0 %3278, %v3179
        %v3280 = vpop.permute.xlu0 %3279
        %3281 = vset.pattern.permute.xlu0 2
        %3282 = vperm.xlu0 %3281, %v3181
        %v3283 = vpop.permute.xlu0 %3282
        %3284 = vset.pattern.permute.xlu0 2
        %3285 = vperm.xlu0 %3284, %v3183
        %v3286 = vpop.permute.xlu0 %3285
        %3287 = vset.pattern.permute.xlu0 2
        %3288 = vperm.xlu0 %3287, %v3185
        %v3289 = vpop.permute.xlu0 %3288
        %3290 = vset.pattern.permute.xlu0 2
        %3291 = vperm.xlu0 %3290, %v3187
        %v3292 = vpop.permute.xlu0 %3291
        %3293 = vset.pattern.permute.xlu0 2
        %3294 = vperm.xlu0 %3293, %v3189
        %v3295 = vpop.permute.xlu0 %3294
        %3296 = vset.pattern.permute.xlu0 2
        %3297 = vperm.xlu0 %3296, %v3191
        %v3298 = vpop.permute.xlu0 %3297
        %3299 = vset.pattern.permute.xlu0 2
        %3300 = vperm.xlu0 %3299, %v3193
        %v3301 = vpop.permute.xlu0 %3300
        %3302 = vset.pattern.permute.xlu0 2
        %3303 = vperm.xlu0 %3302, %v3195
        %v3304 = vpop.permute.xlu0 %3303
        %3305 = vset.pattern.permute.xlu0 2
        %3306 = vperm.xlu0 %3305, %v3197
        %v3307 = vpop.permute.xlu0 %3306
        %3308 = vset.pattern.permute.xlu0 2
        %3309 = vperm.xlu0 %3308, %v3199
        %v3310 = vpop.permute.xlu0 %3309
        %3311 = vset.pattern.permute.xlu0 2
        %3312 = vperm.xlu0 %3311, %v3201
        %v3313 = vpop.permute.xlu0 %3312
        %3314 = vset.pattern.permute.xlu0 2
        %3315 = vperm.xlu0 %3314, %v3203
        %v3316 = vpop.permute.xlu0 %3315
        %3317 = vset.pattern.permute.xlu0 2
        %3318 = vperm.xlu0 %3317, %v3205
        %v3319 = vpop.permute.xlu0 %3318
        %3320 = vset.pattern.permute.xlu0 2
        %3321 = vperm.xlu0 %3320, %v3207
        %v3322 = vpop.permute.xlu0 %3321
        %3323 = vset.pattern.permute.xlu0 2
        %3324 = vperm.xlu0 %3323, %v3209
        %v3325 = vpop.permute.xlu0 %3324
        %3326 = vset.pattern.permute.xlu0 2
        %3327 = vperm.xlu0 %3326, %v3211
        %v3328 = vpop.permute.xlu0 %3327
        %3329 = vset.pattern.permute.xlu0 2
        %3330 = vperm.xlu0 %3329, %v3213
        %v3331 = vpop.permute.xlu0 %3330
        %3332 = vset.pattern.permute.xlu0 2
        %3333 = vperm.xlu0 %3332, %v3215
        %v3334 = vpop.permute.xlu0 %3333
        %3335 = vset.pattern.permute.xlu0 2
        %3336 = vperm.xlu0 %3335, %v3217
        %v3337 = vpop.permute.xlu0 %3336
        %3338 = vset.pattern.permute.xlu0 2
        %3339 = vperm.xlu0 %3338, %v3219
        %v3340 = vpop.permute.xlu0 %3339
        %3341 = vset.pattern.permute.xlu0 2
        %3342 = vperm.xlu0 %3341, %v3221
        %v3343 = vpop.permute.xlu0 %3342
        %3344 = vset.pattern.permute.xlu0 2
        %3345 = vperm.xlu0 %3344, %v3223
        %v3346 = vpop.permute.xlu0 %3345
        %3347 = vset.pattern.permute.xlu0 2
        %3348 = vperm.xlu0 %3347, %v3225
        %v3349 = vpop.permute.xlu0 %3348
        %3350 = vset.pattern.permute.xlu0 2
        %3351 = vperm.xlu0 %3350, %v3227
        %v3352 = vpop.permute.xlu0 %3351
        %3353 = vset.pattern.permute.xlu0 2
        %3354 = vperm.xlu0 %3353, %v3229
        %v3355 = vpop.permute.xlu0 %3354
        %3356 = vset.pattern.permute.xlu0 2
        %3357 = vperm.xlu0 %3356, %v3231
        %v3358 = vpop.permute.xlu0 %3357
        %3359 = vset.pattern.permute.xlu0 2
        %3360 = vperm.xlu0 %3359, %v3233
        %v3361 = vpop.permute.xlu0 %3360
        %v3362 = vperm.slane %v3268, %v1000
        %v3363 = vperm.slane %v3271, %v1002
        %v3364 = vsel %vm1004, %v3363, %v3362
        %v3365 = vperm.slane %v3274, %v1000
        %v3366 = vperm.slane %v3277, %v1002
        %v3367 = vsel %vm1004, %v3366, %v3365
        %v3368 = vperm.slane %v3280, %v1000
        %v3369 = vperm.slane %v3283, %v1002
        %v3370 = vsel %vm1004, %v3369, %v3368
        %v3371 = vperm.slane %v3286, %v1000
        %v3372 = vperm.slane %v3289, %v1002
        %v3373 = vsel %vm1004, %v3372, %v3371
        %v3374 = vperm.slane %v3292, %v1000
        %v3375 = vperm.slane %v3295, %v1002
        %v3376 = vsel %vm1004, %v3375, %v3374
        %v3377 = vperm.slane %v3298, %v1000
        %v3378 = vperm.slane %v3301, %v1002
        %v3379 = vsel %vm1004, %v3378, %v3377
        %v3380 = vperm.slane %v3304, %v1000
        %v3381 = vperm.slane %v3307, %v1002
        %v3382 = vsel %vm1004, %v3381, %v3380
        %v3383 = vperm.slane %v3310, %v1000
        %v3384 = vperm.slane %v3313, %v1002
        %v3385 = vsel %vm1004, %v3384, %v3383
        %v3386 = vperm.slane %v3316, %v1000
        %v3387 = vperm.slane %v3319, %v1002
        %v3388 = vsel %vm1004, %v3387, %v3386
        %v3389 = vperm.slane %v3322, %v1000
        %v3390 = vperm.slane %v3325, %v1002
        %v3391 = vsel %vm1004, %v3390, %v3389
        %v3392 = vperm.slane %v3328, %v1000
        %v3393 = vperm.slane %v3331, %v1002
        %v3394 = vsel %vm1004, %v3393, %v3392
        %v3395 = vperm.slane %v3334, %v1000
        %v3396 = vperm.slane %v3337, %v1002
        %v3397 = vsel %vm1004, %v3396, %v3395
        %v3398 = vperm.slane %v3340, %v1000
        %v3399 = vperm.slane %v3343, %v1002
        %v3400 = vsel %vm1004, %v3399, %v3398
        %v3401 = vperm.slane %v3346, %v1000
        %v3402 = vperm.slane %v3349, %v1002
        %v3403 = vsel %vm1004, %v3402, %v3401
        %v3404 = vperm.slane %v3352, %v1000
        %v3405 = vperm.slane %v3355, %v1002
        %v3406 = vsel %vm1004, %v3405, %v3404
        %v3407 = vperm.slane %v3358, %v1000
        %v3408 = vperm.slane %v3361, %v1002
        %v3409 = vsel %vm1004, %v3408, %v3407
        %v3410 = vsel %vm1051, %v3367, %v3364
        %v3411 = vsel %vm1053, %v3370, %v3410
        %v3412 = vsel %vm1055, %v3373, %v3411
        %v3413 = vsel %vm1057, %v3376, %v3412
        %v3414 = vsel %vm1059, %v3379, %v3413
        %v3415 = vsel %vm1061, %v3382, %v3414
        %v3416 = vsel %vm1063, %v3385, %v3415
        %v3417 = vsel %vm1051, %v3391, %v3388
        %v3418 = vsel %vm1053, %v3394, %v3417
        %v3419 = vsel %vm1055, %v3397, %v3418
        %v3420 = vsel %vm1057, %v3400, %v3419
        %v3421 = vsel %vm1059, %v3403, %v3420
        %v3422 = vsel %vm1061, %v3406, %v3421
        %v3423 = vsel %vm1063, %v3409, %v3422
        %v3426 = vsel %vm1074, %v3416, 0.0
        %3427 = vadd.xlane.f32.xlu0 %v3426
        %v3428 = vpop.xlane.xlu0 %3427
        %v3429 = vsel %vm1074, %v3423, 0.0
        %3430 = vadd.xlane.f32.xlu0 %v3429
        %v3431 = vpop.xlane.xlu0 %3430
        %v3434 = vperm.slane %v3428, 0
        %v3435 = vperm.slane %v3428, 1
        %v3436 = vperm.slane %v3428, 2
        %v3437 = vperm.slane %v3428, 3
        %v3438 = vperm.slane %v3428, 4
        %v3439 = vperm.slane %v3428, 5
        %v3440 = vperm.slane %v3428, 6
        %v3441 = vperm.slane %v3428, 7
        %v3442 = vperm.slane %v3431, 0
        %v3443 = vperm.slane %v3431, 1
        %v3444 = vperm.slane %v3431, 2
        %v3445 = vperm.slane %v3431, 3
        %v3446 = vperm.slane %v3431, 4
        %v3447 = vperm.slane %v3431, 5
        %v3448 = vperm.slane %v3431, 6
        %v3449 = vperm.slane %v3431, 7
        %v3466 = vrcp.pop %v3434
        %v3467 = vmul.f32 %v3434, %v3466
        %v3468 = vsub.f32 1.0, %v3467
        %v3469 = vmul.f32 %v3466, %v3468
        %v3470 = vadd.f32 %v3466, %v3469
        %vm3471 = vweird.f32 %v3434
        %vm3472 = vweird.f32 %v3466
        %vm3473 = vmor %vm3471, %vm3472
        %v3474 = vsel %vm3473, %v3466, %v3470
        %v3475 = vand.u32 2147483647, %v3434
        %vm3476 = vcmp.eq.f32.partialorder %v3475, 8.507059e+37
        %v3477 = vand.u32 %v3434, 2147483648
        %v3478 = vor.u32 1.1754944e-38, %v3477
        %v3479 = vsel %vm3476, %v3478, %v3474
        %v3480 = vmul.f32 %v3171, %v3479
        %v3481 = vmul.f32 %v3173, %v3479
        %v3482 = vrcp.pop %v3435
        %v3483 = vmul.f32 %v3435, %v3482
        %v3484 = vsub.f32 1.0, %v3483
        %v3485 = vmul.f32 %v3482, %v3484
        %v3486 = vadd.f32 %v3482, %v3485
        %vm3487 = vweird.f32 %v3435
        %vm3488 = vweird.f32 %v3482
        %vm3489 = vmor %vm3487, %vm3488
        %v3490 = vsel %vm3489, %v3482, %v3486
        %v3491 = vand.u32 2147483647, %v3435
        %vm3492 = vcmp.eq.f32.partialorder %v3491, 8.507059e+37
        %v3493 = vand.u32 %v3435, 2147483648
        %v3494 = vor.u32 1.1754944e-38, %v3493
        %v3495 = vsel %vm3492, %v3494, %v3490
        %v3496 = vmul.f32 %v3175, %v3495
        %v3497 = vmul.f32 %v3177, %v3495
        %v3498 = vrcp.pop %v3436
        %v3499 = vmul.f32 %v3436, %v3498
        %v3500 = vsub.f32 1.0, %v3499
        %v3501 = vmul.f32 %v3498, %v3500
        %v3502 = vadd.f32 %v3498, %v3501
        %vm3503 = vweird.f32 %v3436
        %vm3504 = vweird.f32 %v3498
        %vm3505 = vmor %vm3503, %vm3504
        %v3506 = vsel %vm3505, %v3498, %v3502
        %v3507 = vand.u32 2147483647, %v3436
        %vm3508 = vcmp.eq.f32.partialorder %v3507, 8.507059e+37
        %v3509 = vand.u32 %v3436, 2147483648
        %v3510 = vor.u32 1.1754944e-38, %v3509
        %v3511 = vsel %vm3508, %v3510, %v3506
        %v3512 = vmul.f32 %v3179, %v3511
        %v3513 = vmul.f32 %v3181, %v3511
        %v3514 = vrcp.pop %v3437
        %v3515 = vmul.f32 %v3437, %v3514
        %v3516 = vsub.f32 1.0, %v3515
        %v3517 = vmul.f32 %v3514, %v3516
        %v3518 = vadd.f32 %v3514, %v3517
        %vm3519 = vweird.f32 %v3437
        %vm3520 = vweird.f32 %v3514
        %vm3521 = vmor %vm3519, %vm3520
        %v3522 = vsel %vm3521, %v3514, %v3518
        %v3523 = vand.u32 2147483647, %v3437
        %vm3524 = vcmp.eq.f32.partialorder %v3523, 8.507059e+37
        %v3525 = vand.u32 %v3437, 2147483648
        %v3526 = vor.u32 1.1754944e-38, %v3525
        %v3527 = vsel %vm3524, %v3526, %v3522
        %v3528 = vmul.f32 %v3183, %v3527
        %v3529 = vmul.f32 %v3185, %v3527
        %v3530 = vrcp.pop %v3438
        %v3531 = vmul.f32 %v3438, %v3530
        %v3532 = vsub.f32 1.0, %v3531
        %v3533 = vmul.f32 %v3530, %v3532
        %v3534 = vadd.f32 %v3530, %v3533
        %vm3535 = vweird.f32 %v3438
        %vm3536 = vweird.f32 %v3530
        %vm3537 = vmor %vm3535, %vm3536
        %v3538 = vsel %vm3537, %v3530, %v3534
        %v3539 = vand.u32 2147483647, %v3438
        %vm3540 = vcmp.eq.f32.partialorder %v3539, 8.507059e+37
        %v3541 = vand.u32 %v3438, 2147483648
        %v3542 = vor.u32 1.1754944e-38, %v3541
        %v3543 = vsel %vm3540, %v3542, %v3538
        %v3544 = vmul.f32 %v3187, %v3543
        %v3545 = vmul.f32 %v3189, %v3543
        %v3546 = vrcp.pop %v3439
        %v3547 = vmul.f32 %v3439, %v3546
        %v3548 = vsub.f32 1.0, %v3547
        %v3549 = vmul.f32 %v3546, %v3548
        %v3550 = vadd.f32 %v3546, %v3549
        %vm3551 = vweird.f32 %v3439
        %vm3552 = vweird.f32 %v3546
        %vm3553 = vmor %vm3551, %vm3552
        %v3554 = vsel %vm3553, %v3546, %v3550
        %v3555 = vand.u32 2147483647, %v3439
        %vm3556 = vcmp.eq.f32.partialorder %v3555, 8.507059e+37
        %v3557 = vand.u32 %v3439, 2147483648
        %v3558 = vor.u32 1.1754944e-38, %v3557
        %v3559 = vsel %vm3556, %v3558, %v3554
        %v3560 = vmul.f32 %v3191, %v3559
        %v3561 = vmul.f32 %v3193, %v3559
        %v3562 = vrcp.pop %v3440
        %v3563 = vmul.f32 %v3440, %v3562
        %v3564 = vsub.f32 1.0, %v3563
        %v3565 = vmul.f32 %v3562, %v3564
        %v3566 = vadd.f32 %v3562, %v3565
        %vm3567 = vweird.f32 %v3440
        %vm3568 = vweird.f32 %v3562
        %vm3569 = vmor %vm3567, %vm3568
        %v3570 = vsel %vm3569, %v3562, %v3566
        %v3571 = vand.u32 2147483647, %v3440
        %vm3572 = vcmp.eq.f32.partialorder %v3571, 8.507059e+37
        %v3573 = vand.u32 %v3440, 2147483648
        %v3574 = vor.u32 1.1754944e-38, %v3573
        %v3575 = vsel %vm3572, %v3574, %v3570
        %v3576 = vmul.f32 %v3195, %v3575
        %v3577 = vmul.f32 %v3197, %v3575
        %v3578 = vrcp.pop %v3441
        %v3579 = vmul.f32 %v3441, %v3578
        %v3580 = vsub.f32 1.0, %v3579
        %v3581 = vmul.f32 %v3578, %v3580
        %v3582 = vadd.f32 %v3578, %v3581
        %vm3583 = vweird.f32 %v3441
        %vm3584 = vweird.f32 %v3578
        %vm3585 = vmor %vm3583, %vm3584
        %v3586 = vsel %vm3585, %v3578, %v3582
        %v3587 = vand.u32 2147483647, %v3441
        %vm3588 = vcmp.eq.f32.partialorder %v3587, 8.507059e+37
        %v3589 = vand.u32 %v3441, 2147483648
        %v3590 = vor.u32 1.1754944e-38, %v3589
        %v3591 = vsel %vm3588, %v3590, %v3586
        %v3592 = vmul.f32 %v3199, %v3591
        %v3593 = vmul.f32 %v3201, %v3591
        %v3594 = vrcp.pop %v3442
        %v3595 = vmul.f32 %v3442, %v3594
        %v3596 = vsub.f32 1.0, %v3595
        %v3597 = vmul.f32 %v3594, %v3596
        %v3598 = vadd.f32 %v3594, %v3597
        %vm3599 = vweird.f32 %v3442
        %vm3600 = vweird.f32 %v3594
        %vm3601 = vmor %vm3599, %vm3600
        %v3602 = vsel %vm3601, %v3594, %v3598
        %v3603 = vand.u32 2147483647, %v3442
        %vm3604 = vcmp.eq.f32.partialorder %v3603, 8.507059e+37
        %v3605 = vand.u32 %v3442, 2147483648
        %v3606 = vor.u32 1.1754944e-38, %v3605
        %v3607 = vsel %vm3604, %v3606, %v3602
        %v3608 = vmul.f32 %v3203, %v3607
        %v3609 = vmul.f32 %v3205, %v3607
        %v3610 = vrcp.pop %v3443
        %v3611 = vmul.f32 %v3443, %v3610
        %v3612 = vsub.f32 1.0, %v3611
        %v3613 = vmul.f32 %v3610, %v3612
        %v3614 = vadd.f32 %v3610, %v3613
        %vm3615 = vweird.f32 %v3443
        %vm3616 = vweird.f32 %v3610
        %vm3617 = vmor %vm3615, %vm3616
        %v3618 = vsel %vm3617, %v3610, %v3614
        %v3619 = vand.u32 2147483647, %v3443
        %vm3620 = vcmp.eq.f32.partialorder %v3619, 8.507059e+37
        %v3621 = vand.u32 %v3443, 2147483648
        %v3622 = vor.u32 1.1754944e-38, %v3621
        %v3623 = vsel %vm3620, %v3622, %v3618
        %v3624 = vmul.f32 %v3207, %v3623
        %v3625 = vmul.f32 %v3209, %v3623
        %v3626 = vrcp.pop %v3444
        %v3627 = vmul.f32 %v3444, %v3626
        %v3628 = vsub.f32 1.0, %v3627
        %v3629 = vmul.f32 %v3626, %v3628
        %v3630 = vadd.f32 %v3626, %v3629
        %vm3631 = vweird.f32 %v3444
        %vm3632 = vweird.f32 %v3626
        %vm3633 = vmor %vm3631, %vm3632
        %v3634 = vsel %vm3633, %v3626, %v3630
        %v3635 = vand.u32 2147483647, %v3444
        %vm3636 = vcmp.eq.f32.partialorder %v3635, 8.507059e+37
        %v3637 = vand.u32 %v3444, 2147483648
        %v3638 = vor.u32 1.1754944e-38, %v3637
        %v3639 = vsel %vm3636, %v3638, %v3634
        %v3640 = vmul.f32 %v3211, %v3639
        %v3641 = vmul.f32 %v3213, %v3639
        %v3642 = vrcp.pop %v3445
        %v3643 = vmul.f32 %v3445, %v3642
        %v3644 = vsub.f32 1.0, %v3643
        %v3645 = vmul.f32 %v3642, %v3644
        %v3646 = vadd.f32 %v3642, %v3645
        %vm3647 = vweird.f32 %v3445
        %vm3648 = vweird.f32 %v3642
        %vm3649 = vmor %vm3647, %vm3648
        %v3650 = vsel %vm3649, %v3642, %v3646
        %v3651 = vand.u32 2147483647, %v3445
        %vm3652 = vcmp.eq.f32.partialorder %v3651, 8.507059e+37
        %v3653 = vand.u32 %v3445, 2147483648
        %v3654 = vor.u32 1.1754944e-38, %v3653
        %v3655 = vsel %vm3652, %v3654, %v3650
        %v3656 = vmul.f32 %v3215, %v3655
        %v3657 = vmul.f32 %v3217, %v3655
        %v3658 = vrcp.pop %v3446
        %v3659 = vmul.f32 %v3446, %v3658
        %v3660 = vsub.f32 1.0, %v3659
        %v3661 = vmul.f32 %v3658, %v3660
        %v3662 = vadd.f32 %v3658, %v3661
        %vm3663 = vweird.f32 %v3446
        %vm3664 = vweird.f32 %v3658
        %vm3665 = vmor %vm3663, %vm3664
        %v3666 = vsel %vm3665, %v3658, %v3662
        %v3667 = vand.u32 2147483647, %v3446
        %vm3668 = vcmp.eq.f32.partialorder %v3667, 8.507059e+37
        %v3669 = vand.u32 %v3446, 2147483648
        %v3670 = vor.u32 1.1754944e-38, %v3669
        %v3671 = vsel %vm3668, %v3670, %v3666
        %v3672 = vmul.f32 %v3219, %v3671
        %v3673 = vmul.f32 %v3221, %v3671
        %v3674 = vrcp.pop %v3447
        %v3675 = vmul.f32 %v3447, %v3674
        %v3676 = vsub.f32 1.0, %v3675
        %v3677 = vmul.f32 %v3674, %v3676
        %v3678 = vadd.f32 %v3674, %v3677
        %vm3679 = vweird.f32 %v3447
        %vm3680 = vweird.f32 %v3674
        %vm3681 = vmor %vm3679, %vm3680
        %v3682 = vsel %vm3681, %v3674, %v3678
        %v3683 = vand.u32 2147483647, %v3447
        %vm3684 = vcmp.eq.f32.partialorder %v3683, 8.507059e+37
        %v3685 = vand.u32 %v3447, 2147483648
        %v3686 = vor.u32 1.1754944e-38, %v3685
        %v3687 = vsel %vm3684, %v3686, %v3682
        %v3688 = vmul.f32 %v3223, %v3687
        %v3689 = vmul.f32 %v3225, %v3687
        %v3690 = vrcp.pop %v3448
        %v3691 = vmul.f32 %v3448, %v3690
        %v3692 = vsub.f32 1.0, %v3691
        %v3693 = vmul.f32 %v3690, %v3692
        %v3694 = vadd.f32 %v3690, %v3693
        %vm3695 = vweird.f32 %v3448
        %vm3696 = vweird.f32 %v3690
        %vm3697 = vmor %vm3695, %vm3696
        %v3698 = vsel %vm3697, %v3690, %v3694
        %v3699 = vand.u32 2147483647, %v3448
        %vm3700 = vcmp.eq.f32.partialorder %v3699, 8.507059e+37
        %v3701 = vand.u32 %v3448, 2147483648
        %v3702 = vor.u32 1.1754944e-38, %v3701
        %v3703 = vsel %vm3700, %v3702, %v3698
        %v3704 = vmul.f32 %v3227, %v3703
        %v3705 = vmul.f32 %v3229, %v3703
        %v3706 = vrcp.pop %v3449
        %v3707 = vmul.f32 %v3449, %v3706
        %v3708 = vsub.f32 1.0, %v3707
        %v3709 = vmul.f32 %v3706, %v3708
        %v3710 = vadd.f32 %v3706, %v3709
        %vm3711 = vweird.f32 %v3449
        %vm3712 = vweird.f32 %v3706
        %vm3713 = vmor %vm3711, %vm3712
        %v3714 = vsel %vm3713, %v3706, %v3710
        %v3715 = vand.u32 2147483647, %v3449
        %vm3716 = vcmp.eq.f32.partialorder %v3715, 8.507059e+37
        %v3717 = vand.u32 %v3449, 2147483648
        %v3718 = vor.u32 1.1754944e-38, %v3717
        %v3719 = vsel %vm3716, %v3718, %v3714
        %v3720 = vmul.f32 %v3231, %v3719
        %v3721 = vmul.f32 %v3233, %v3719
        %3754 = vset.pattern.permute.xlu0 2
        %3755 = vperm.xlu0 %3754, %v3480
        %v3756 = vpop.permute.xlu0 %3755
        %3757 = vset.pattern.permute.xlu0 2
        %3758 = vperm.xlu0 %3757, %v3481
        %v3759 = vpop.permute.xlu0 %3758
        %3760 = vset.pattern.permute.xlu0 2
        %3761 = vperm.xlu0 %3760, %v3496
        %v3762 = vpop.permute.xlu0 %3761
        %3763 = vset.pattern.permute.xlu0 2
        %3764 = vperm.xlu0 %3763, %v3497
        %v3765 = vpop.permute.xlu0 %3764
        %3766 = vset.pattern.permute.xlu0 2
        %3767 = vperm.xlu0 %3766, %v3512
        %v3768 = vpop.permute.xlu0 %3767
        %3769 = vset.pattern.permute.xlu0 2
        %3770 = vperm.xlu0 %3769, %v3513
        %v3771 = vpop.permute.xlu0 %3770
        %3772 = vset.pattern.permute.xlu0 2
        %3773 = vperm.xlu0 %3772, %v3528
        %v3774 = vpop.permute.xlu0 %3773
        %3775 = vset.pattern.permute.xlu0 2
        %3776 = vperm.xlu0 %3775, %v3529
        %v3777 = vpop.permute.xlu0 %3776
        %3778 = vset.pattern.permute.xlu0 2
        %3779 = vperm.xlu0 %3778, %v3544
        %v3780 = vpop.permute.xlu0 %3779
        %3781 = vset.pattern.permute.xlu0 2
        %3782 = vperm.xlu0 %3781, %v3545
        %v3783 = vpop.permute.xlu0 %3782
        %3784 = vset.pattern.permute.xlu0 2
        %3785 = vperm.xlu0 %3784, %v3560
        %v3786 = vpop.permute.xlu0 %3785
        %3787 = vset.pattern.permute.xlu0 2
        %3788 = vperm.xlu0 %3787, %v3561
        %v3789 = vpop.permute.xlu0 %3788
        %3790 = vset.pattern.permute.xlu0 2
        %3791 = vperm.xlu0 %3790, %v3576
        %v3792 = vpop.permute.xlu0 %3791
        %3793 = vset.pattern.permute.xlu0 2
        %3794 = vperm.xlu0 %3793, %v3577
        %v3795 = vpop.permute.xlu0 %3794
        %3796 = vset.pattern.permute.xlu0 2
        %3797 = vperm.xlu0 %3796, %v3592
        %v3798 = vpop.permute.xlu0 %3797
        %3799 = vset.pattern.permute.xlu0 2
        %3800 = vperm.xlu0 %3799, %v3593
        %v3801 = vpop.permute.xlu0 %3800
        %3802 = vset.pattern.permute.xlu0 2
        %3803 = vperm.xlu0 %3802, %v3608
        %v3804 = vpop.permute.xlu0 %3803
        %3805 = vset.pattern.permute.xlu0 2
        %3806 = vperm.xlu0 %3805, %v3609
        %v3807 = vpop.permute.xlu0 %3806
        %3808 = vset.pattern.permute.xlu0 2
        %3809 = vperm.xlu0 %3808, %v3624
        %v3810 = vpop.permute.xlu0 %3809
        %3811 = vset.pattern.permute.xlu0 2
        %3812 = vperm.xlu0 %3811, %v3625
        %v3813 = vpop.permute.xlu0 %3812
        %3814 = vset.pattern.permute.xlu0 2
        %3815 = vperm.xlu0 %3814, %v3640
        %v3816 = vpop.permute.xlu0 %3815
        %3817 = vset.pattern.permute.xlu0 2
        %3818 = vperm.xlu0 %3817, %v3641
        %v3819 = vpop.permute.xlu0 %3818
        %3820 = vset.pattern.permute.xlu0 2
        %3821 = vperm.xlu0 %3820, %v3656
        %v3822 = vpop.permute.xlu0 %3821
        %3823 = vset.pattern.permute.xlu0 2
        %3824 = vperm.xlu0 %3823, %v3657
        %v3825 = vpop.permute.xlu0 %3824
        %3826 = vset.pattern.permute.xlu0 2
        %3827 = vperm.xlu0 %3826, %v3672
        %v3828 = vpop.permute.xlu0 %3827
        %3829 = vset.pattern.permute.xlu0 2
        %3830 = vperm.xlu0 %3829, %v3673
        %v3831 = vpop.permute.xlu0 %3830
        %3832 = vset.pattern.permute.xlu0 2
        %3833 = vperm.xlu0 %3832, %v3688
        %v3834 = vpop.permute.xlu0 %3833
        %3835 = vset.pattern.permute.xlu0 2
        %3836 = vperm.xlu0 %3835, %v3689
        %v3837 = vpop.permute.xlu0 %3836
        %3838 = vset.pattern.permute.xlu0 2
        %3839 = vperm.xlu0 %3838, %v3704
        %v3840 = vpop.permute.xlu0 %3839
        %3841 = vset.pattern.permute.xlu0 2
        %3842 = vperm.xlu0 %3841, %v3705
        %v3843 = vpop.permute.xlu0 %3842
        %3844 = vset.pattern.permute.xlu0 2
        %3845 = vperm.xlu0 %3844, %v3720
        %v3846 = vpop.permute.xlu0 %3845
        %3847 = vset.pattern.permute.xlu0 2
        %3848 = vperm.xlu0 %3847, %v3721
        %v3849 = vpop.permute.xlu0 %3848
        %v3850 = vperm.slane %v3756, %v1000
        %v3851 = vperm.slane %v3759, %v1002
        %v3852 = vsel %vm1004, %v3851, %v3850
        %v3853 = vperm.slane %v3762, %v1000
        %v3854 = vperm.slane %v3765, %v1002
        %v3855 = vsel %vm1004, %v3854, %v3853
        %v3856 = vperm.slane %v3768, %v1000
        %v3857 = vperm.slane %v3771, %v1002
        %v3858 = vsel %vm1004, %v3857, %v3856
        %v3859 = vperm.slane %v3774, %v1000
        %v3860 = vperm.slane %v3777, %v1002
        %v3861 = vsel %vm1004, %v3860, %v3859
        %v3862 = vperm.slane %v3780, %v1000
        %v3863 = vperm.slane %v3783, %v1002
        %v3864 = vsel %vm1004, %v3863, %v3862
        %v3865 = vperm.slane %v3786, %v1000
        %v3866 = vperm.slane %v3789, %v1002
        %v3867 = vsel %vm1004, %v3866, %v3865
        %v3868 = vperm.slane %v3792, %v1000
        %v3869 = vperm.slane %v3795, %v1002
        %v3870 = vsel %vm1004, %v3869, %v3868
        %v3871 = vperm.slane %v3798, %v1000
        %v3872 = vperm.slane %v3801, %v1002
        %v3873 = vsel %vm1004, %v3872, %v3871
        %v3874 = vperm.slane %v3804, %v1000
        %v3875 = vperm.slane %v3807, %v1002
        %v3876 = vsel %vm1004, %v3875, %v3874
        %v3877 = vperm.slane %v3810, %v1000
        %v3878 = vperm.slane %v3813, %v1002
        %v3879 = vsel %vm1004, %v3878, %v3877
        %v3880 = vperm.slane %v3816, %v1000
        %v3881 = vperm.slane %v3819, %v1002
        %v3882 = vsel %vm1004, %v3881, %v3880
        %v3883 = vperm.slane %v3822, %v1000
        %v3884 = vperm.slane %v3825, %v1002
        %v3885 = vsel %vm1004, %v3884, %v3883
        %v3886 = vperm.slane %v3828, %v1000
        %v3887 = vperm.slane %v3831, %v1002
        %v3888 = vsel %vm1004, %v3887, %v3886
        %v3889 = vperm.slane %v3834, %v1000
        %v3890 = vperm.slane %v3837, %v1002
        %v3891 = vsel %vm1004, %v3890, %v3889
        %v3892 = vperm.slane %v3840, %v1000
        %v3893 = vperm.slane %v3843, %v1002
        %v3894 = vsel %vm1004, %v3893, %v3892
        %v3895 = vperm.slane %v3846, %v1000
        %v3896 = vperm.slane %v3849, %v1002
        %v3897 = vsel %vm1004, %v3896, %v3895
        %v3898 = vsel %vm1051, %v3855, %v3852
        %v3899 = vsel %vm1053, %v3858, %v3898
        %v3900 = vsel %vm1055, %v3861, %v3899
        %v3901 = vsel %vm1057, %v3864, %v3900
        %v3902 = vsel %vm1059, %v3867, %v3901
        %v3903 = vsel %vm1061, %v3870, %v3902
        %v3904 = vsel %vm1063, %v3873, %v3903
        %v3905 = vsel %vm1051, %v3879, %v3876
        %v3906 = vsel %vm1053, %v3882, %v3905
        %v3907 = vsel %vm1055, %v3885, %v3906
        %v3908 = vsel %vm1057, %v3888, %v3907
        %v3909 = vsel %vm1059, %v3891, %v3908
        %v3910 = vsel %vm1061, %v3894, %v3909
        %v3911 = vsel %vm1063, %v3897, %v3910
        %3912 = vrot.lane.b32.xlu0 %v621, 112
        %v3913 = vpop.permute.xlu0 %3912
        %3914 = vrot.lane.b32.xlu0 %v624, 112
        %v3915 = vpop.permute.xlu0 %3914
        %v3918 = vsel %vm1074, %v3904, 0
        %v3920 = vsel %vm1074, %v3911, 0
        %3922 = vmatpush.msra.mxu0 0.0
        %3923 = vmatpush.msra.mxu0 0.0
        %3924 = vmatpush.msra.mxu0 0.0
        %3925 = vmatpush.msra.mxu0 0.0
        %3926 = vmatpush.msra.mxu0 0.0
        %3927 = vmatpush.msra.mxu0 0.0
        %3928 = vmatpush.msra.mxu0 0.0
        %3929 = vmatpush.msra.mxu0 0.0
        %3930 = vmatpush.msra.mxu0 0.0
        %3931 = vmatpush.msra.mxu0 0.0
        %3932 = vmatpush.msra.mxu0 0.0
        %3933 = vmatpush.msra.mxu0 0.0
        %3934 = vmatpush.msra.mxu0 0.0
        %3935 = vmatpush.msra.mxu0 0.0
        %3936 = vmatpush.msra.mxu0 %v3915
        %3937 = vmatpush.msra.mxu0 %v3913
        %3938 = vmatmul.f32.gmra.mxu0 %v3918
        %v3939 = vpop.f32.mrf.mxu0
        %v3940 = vadd.f32 0.0, %v3939
        %3941 = vmatmul.f32.gmra.mxu0 %v3920
        %v3942 = vpop.f32.mrf.mxu0
        %v3943 = vadd.f32 0.0, %v3942
        %3944 = vdwg.mxu0
        %3947 = vrot.lane.b32.xlu0 %v3940, 16
        %v3948 = vpop.permute.xlu0 %3947
        %3949 = vrot.lane.b32.xlu0 %v3943, 16
        %v3950 = vpop.permute.xlu0 %3949
        %vm3953 = vcmask 195712
        %3954 = vst.msk [vmem:[#allocation2] sm:$0xff] %vm3953, %v3948
        %3955 = vst.msk [vmem:[#allocation2 + $0x8] sm:$0xff] %vm3953, %v3950
        %3956 = vset.pattern.permute.xlu0 3
        %3957 = vperm.xlu0 %3956, %v776
        %v3958 = vpop.permute.xlu0 %3957
        %3959 = vset.pattern.permute.xlu0 3
        %3960 = vperm.xlu0 %3959, %v779
        %v3961 = vpop.permute.xlu0 %3960
        %3962 = vset.pattern.permute.xlu0 3
        %3963 = vperm.xlu0 %3962, %v782
        %v3964 = vpop.permute.xlu0 %3963
        %3965 = vset.pattern.permute.xlu0 3
        %3966 = vperm.xlu0 %3965, %v785
        %v3967 = vpop.permute.xlu0 %3966
        %3968 = vset.pattern.permute.xlu0 3
        %3969 = vperm.xlu0 %3968, %v788
        %v3970 = vpop.permute.xlu0 %3969
        %3971 = vset.pattern.permute.xlu0 3
        %3972 = vperm.xlu0 %3971, %v791
        %v3973 = vpop.permute.xlu0 %3972
        %3974 = vset.pattern.permute.xlu0 3
        %3975 = vperm.xlu0 %3974, %v794
        %v3976 = vpop.permute.xlu0 %3975
        %3977 = vset.pattern.permute.xlu0 3
        %3978 = vperm.xlu0 %3977, %v797
        %v3979 = vpop.permute.xlu0 %3978
        %3980 = vset.pattern.permute.xlu0 3
        %3981 = vperm.xlu0 %3980, %v800
        %v3982 = vpop.permute.xlu0 %3981
        %3983 = vset.pattern.permute.xlu0 3
        %3984 = vperm.xlu0 %3983, %v803
        %v3985 = vpop.permute.xlu0 %3984
        %3986 = vset.pattern.permute.xlu0 3
        %3987 = vperm.xlu0 %3986, %v806
        %v3988 = vpop.permute.xlu0 %3987
        %3989 = vset.pattern.permute.xlu0 3
        %3990 = vperm.xlu0 %3989, %v809
        %v3991 = vpop.permute.xlu0 %3990
        %3992 = vset.pattern.permute.xlu0 3
        %3993 = vperm.xlu0 %3992, %v812
        %v3994 = vpop.permute.xlu0 %3993
        %3995 = vset.pattern.permute.xlu0 3
        %3996 = vperm.xlu0 %3995, %v815
        %v3997 = vpop.permute.xlu0 %3996
        %3998 = vset.pattern.permute.xlu0 3
        %3999 = vperm.xlu0 %3998, %v818
        %v4000 = vpop.permute.xlu0 %3999
        %4001 = vset.pattern.permute.xlu0 3
        %4002 = vperm.xlu0 %4001, %v821
        %v4003 = vpop.permute.xlu0 %4002
        %4004 = vset.pattern.permute.xlu0 3
        %4005 = vperm.xlu0 %4004, %v824
        %v4006 = vpop.permute.xlu0 %4005
        %4007 = vset.pattern.permute.xlu0 3
        %4008 = vperm.xlu0 %4007, %v827
        %v4009 = vpop.permute.xlu0 %4008
        %4010 = vset.pattern.permute.xlu0 3
        %4011 = vperm.xlu0 %4010, %v830
        %v4012 = vpop.permute.xlu0 %4011
        %4013 = vset.pattern.permute.xlu0 3
        %4014 = vperm.xlu0 %4013, %v833
        %v4015 = vpop.permute.xlu0 %4014
        %4016 = vset.pattern.permute.xlu0 3
        %4017 = vperm.xlu0 %4016, %v836
        %v4018 = vpop.permute.xlu0 %4017
        %4019 = vset.pattern.permute.xlu0 3
        %4020 = vperm.xlu0 %4019, %v839
        %v4021 = vpop.permute.xlu0 %4020
        %4022 = vset.pattern.permute.xlu0 3
        %4023 = vperm.xlu0 %4022, %v842
        %v4024 = vpop.permute.xlu0 %4023
        %4025 = vset.pattern.permute.xlu0 3
        %4026 = vperm.xlu0 %4025, %v845
        %v4027 = vpop.permute.xlu0 %4026
        %4028 = vset.pattern.permute.xlu0 3
        %4029 = vperm.xlu0 %4028, %v848
        %v4030 = vpop.permute.xlu0 %4029
        %4031 = vset.pattern.permute.xlu0 3
        %4032 = vperm.xlu0 %4031, %v851
        %v4033 = vpop.permute.xlu0 %4032
        %4034 = vset.pattern.permute.xlu0 3
        %4035 = vperm.xlu0 %4034, %v854
        %v4036 = vpop.permute.xlu0 %4035
        %4037 = vset.pattern.permute.xlu0 3
        %4038 = vperm.xlu0 %4037, %v857
        %v4039 = vpop.permute.xlu0 %4038
        %4040 = vset.pattern.permute.xlu0 3
        %4041 = vperm.xlu0 %4040, %v860
        %v4042 = vpop.permute.xlu0 %4041
        %4043 = vset.pattern.permute.xlu0 3
        %4044 = vperm.xlu0 %4043, %v863
        %v4045 = vpop.permute.xlu0 %4044
        %4046 = vset.pattern.permute.xlu0 3
        %4047 = vperm.xlu0 %4046, %v866
        %v4048 = vpop.permute.xlu0 %4047
        %4049 = vset.pattern.permute.xlu0 3
        %4050 = vperm.xlu0 %4049, %v869
        %v4051 = vpop.permute.xlu0 %4050
        %v4052 = vperm.slane %v3958, %v1000
        %v4053 = vperm.slane %v3961, %v1002
        %v4054 = vsel %vm1004, %v4053, %v4052
        %v4055 = vperm.slane %v3964, %v1000
        %v4056 = vperm.slane %v3967, %v1002
        %v4057 = vsel %vm1004, %v4056, %v4055
        %v4058 = vperm.slane %v3970, %v1000
        %v4059 = vperm.slane %v3973, %v1002
        %v4060 = vsel %vm1004, %v4059, %v4058
        %v4061 = vperm.slane %v3976, %v1000
        %v4062 = vperm.slane %v3979, %v1002
        %v4063 = vsel %vm1004, %v4062, %v4061
        %v4064 = vperm.slane %v3982, %v1000
        %v4065 = vperm.slane %v3985, %v1002
        %v4066 = vsel %vm1004, %v4065, %v4064
        %v4067 = vperm.slane %v3988, %v1000
        %v4068 = vperm.slane %v3991, %v1002
        %v4069 = vsel %vm1004, %v4068, %v4067
        %v4070 = vperm.slane %v3994, %v1000
        %v4071 = vperm.slane %v3997, %v1002
        %v4072 = vsel %vm1004, %v4071, %v4070
        %v4073 = vperm.slane %v4000, %v1000
        %v4074 = vperm.slane %v4003, %v1002
        %v4075 = vsel %vm1004, %v4074, %v4073
        %v4076 = vperm.slane %v4006, %v1000
        %v4077 = vperm.slane %v4009, %v1002
        %v4078 = vsel %vm1004, %v4077, %v4076
        %v4079 = vperm.slane %v4012, %v1000
        %v4080 = vperm.slane %v4015, %v1002
        %v4081 = vsel %vm1004, %v4080, %v4079
        %v4082 = vperm.slane %v4018, %v1000
        %v4083 = vperm.slane %v4021, %v1002
        %v4084 = vsel %vm1004, %v4083, %v4082
        %v4085 = vperm.slane %v4024, %v1000
        %v4086 = vperm.slane %v4027, %v1002
        %v4087 = vsel %vm1004, %v4086, %v4085
        %v4088 = vperm.slane %v4030, %v1000
        %v4089 = vperm.slane %v4033, %v1002
        %v4090 = vsel %vm1004, %v4089, %v4088
        %v4091 = vperm.slane %v4036, %v1000
        %v4092 = vperm.slane %v4039, %v1002
        %v4093 = vsel %vm1004, %v4092, %v4091
        %v4094 = vperm.slane %v4042, %v1000
        %v4095 = vperm.slane %v4045, %v1002
        %v4096 = vsel %vm1004, %v4095, %v4094
        %v4097 = vperm.slane %v4048, %v1000
        %v4098 = vperm.slane %v4051, %v1002
        %v4099 = vsel %vm1004, %v4098, %v4097
        %v4100 = vsel %vm1051, %v4057, %v4054
        %v4101 = vsel %vm1053, %v4060, %v4100
        %v4102 = vsel %vm1055, %v4063, %v4101
        %v4103 = vsel %vm1057, %v4066, %v4102
        %v4104 = vsel %vm1059, %v4069, %v4103
        %v4105 = vsel %vm1061, %v4072, %v4104
        %v4106 = vsel %vm1063, %v4075, %v4105
        %v4107 = vsel %vm1051, %v4081, %v4078
        %v4108 = vsel %vm1053, %v4084, %v4107
        %v4109 = vsel %vm1055, %v4087, %v4108
        %v4110 = vsel %vm1057, %v4090, %v4109
        %v4111 = vsel %vm1059, %v4093, %v4110
        %v4112 = vsel %vm1061, %v4096, %v4111
        %v4113 = vsel %vm1063, %v4099, %v4112
        %v4116 = vsel %vm1074, %v4106, -inf
        %4117 = vmax.xlane.f32.xlu0 %v4116
        %v4118 = vpop.xlane.xlu0 %4117
        %v4119 = vsel %vm1074, %v4113, -inf
        %4120 = vmax.xlane.f32.xlu0 %v4119
        %v4121 = vpop.xlane.xlu0 %4120
        %v4124 = vperm.slane %v4118, 0
        %v4125 = vperm.slane %v4118, 1
        %v4126 = vperm.slane %v4118, 2
        %v4127 = vperm.slane %v4118, 3
        %v4128 = vperm.slane %v4118, 4
        %v4129 = vperm.slane %v4118, 5
        %v4130 = vperm.slane %v4118, 6
        %v4131 = vperm.slane %v4118, 7
        %v4132 = vperm.slane %v4121, 0
        %v4133 = vperm.slane %v4121, 1
        %v4134 = vperm.slane %v4121, 2
        %v4135 = vperm.slane %v4121, 3
        %v4136 = vperm.slane %v4121, 4
        %v4137 = vperm.slane %v4121, 5
        %v4138 = vperm.slane %v4121, 6
        %v4139 = vperm.slane %v4121, 7
        %v4156 = vsub.f32 %v776, %v4124
        %v4157 = vsub.f32 %v779, %v4124
        %v4158 = vsub.f32 %v782, %v4125
        %v4159 = vsub.f32 %v785, %v4125
        %v4160 = vsub.f32 %v788, %v4126
        %v4161 = vsub.f32 %v791, %v4126
        %v4162 = vsub.f32 %v794, %v4127
        %v4163 = vsub.f32 %v797, %v4127
        %v4164 = vsub.f32 %v800, %v4128
        %v4165 = vsub.f32 %v803, %v4128
        %v4166 = vsub.f32 %v806, %v4129
        %v4167 = vsub.f32 %v809, %v4129
        %v4168 = vsub.f32 %v812, %v4130
        %v4169 = vsub.f32 %v815, %v4130
        %v4170 = vsub.f32 %v818, %v4131
        %v4171 = vsub.f32 %v821, %v4131
        %v4172 = vsub.f32 %v824, %v4132
        %v4173 = vsub.f32 %v827, %v4132
        %v4174 = vsub.f32 %v830, %v4133
        %v4175 = vsub.f32 %v833, %v4133
        %v4176 = vsub.f32 %v836, %v4134
        %v4177 = vsub.f32 %v839, %v4134
        %v4178 = vsub.f32 %v842, %v4135
        %v4179 = vsub.f32 %v845, %v4135
        %v4180 = vsub.f32 %v848, %v4136
        %v4181 = vsub.f32 %v851, %v4136
        %v4182 = vsub.f32 %v854, %v4137
        %v4183 = vsub.f32 %v857, %v4137
        %v4184 = vsub.f32 %v860, %v4138
        %v4185 = vsub.f32 %v863, %v4138
        %v4186 = vsub.f32 %v866, %v4139
        %v4187 = vsub.f32 %v869, %v4139
        %v4188 = vmul.f32 %v4156, 1.442695
        %v4189 = vpow.pop %v4188
        %v4190 = vmul.f32 %v4157, 1.442695
        %v4191 = vpow.pop %v4190
        %v4192 = vmul.f32 %v4158, 1.442695
        %v4193 = vpow.pop %v4192
        %v4194 = vmul.f32 %v4159, 1.442695
        %v4195 = vpow.pop %v4194
        %v4196 = vmul.f32 %v4160, 1.442695
        %v4197 = vpow.pop %v4196
        %v4198 = vmul.f32 %v4161, 1.442695
        %v4199 = vpow.pop %v4198
        %v4200 = vmul.f32 %v4162, 1.442695
        %v4201 = vpow.pop %v4200
        %v4202 = vmul.f32 %v4163, 1.442695
        %v4203 = vpow.pop %v4202
        %v4204 = vmul.f32 %v4164, 1.442695
        %v4205 = vpow.pop %v4204
        %v4206 = vmul.f32 %v4165, 1.442695
        %v4207 = vpow.pop %v4206
        %v4208 = vmul.f32 %v4166, 1.442695
        %v4209 = vpow.pop %v4208
        %v4210 = vmul.f32 %v4167, 1.442695
        %v4211 = vpow.pop %v4210
        %v4212 = vmul.f32 %v4168, 1.442695
        %v4213 = vpow.pop %v4212
        %v4214 = vmul.f32 %v4169, 1.442695
        %v4215 = vpow.pop %v4214
        %v4216 = vmul.f32 %v4170, 1.442695
        %v4217 = vpow.pop %v4216
        %v4218 = vmul.f32 %v4171, 1.442695
        %v4219 = vpow.pop %v4218
        %v4220 = vmul.f32 %v4172, 1.442695
        %v4221 = vpow.pop %v4220
        %v4222 = vmul.f32 %v4173, 1.442695
        %v4223 = vpow.pop %v4222
        %v4224 = vmul.f32 %v4174, 1.442695
        %v4225 = vpow.pop %v4224
        %v4226 = vmul.f32 %v4175, 1.442695
        %v4227 = vpow.pop %v4226
        %v4228 = vmul.f32 %v4176, 1.442695
        %v4229 = vpow.pop %v4228
        %v4230 = vmul.f32 %v4177, 1.442695
        %v4231 = vpow.pop %v4230
        %v4232 = vmul.f32 %v4178, 1.442695
        %v4233 = vpow.pop %v4232
        %v4234 = vmul.f32 %v4179, 1.442695
        %v4235 = vpow.pop %v4234
        %v4236 = vmul.f32 %v4180, 1.442695
        %v4237 = vpow.pop %v4236
        %v4238 = vmul.f32 %v4181, 1.442695
        %v4239 = vpow.pop %v4238
        %v4240 = vmul.f32 %v4182, 1.442695
        %v4241 = vpow.pop %v4240
        %v4242 = vmul.f32 %v4183, 1.442695
        %v4243 = vpow.pop %v4242
        %v4244 = vmul.f32 %v4184, 1.442695
        %v4245 = vpow.pop %v4244
        %v4246 = vmul.f32 %v4185, 1.442695
        %v4247 = vpow.pop %v4246
        %v4248 = vmul.f32 %v4186, 1.442695
        %v4249 = vpow.pop %v4248
        %v4250 = vmul.f32 %v4187, 1.442695
        %v4251 = vpow.pop %v4250
        %4284 = vset.pattern.permute.xlu0 3
        %4285 = vperm.xlu0 %4284, %v4189
        %v4286 = vpop.permute.xlu0 %4285
        %4287 = vset.pattern.permute.xlu0 3
        %4288 = vperm.xlu0 %4287, %v4191
        %v4289 = vpop.permute.xlu0 %4288
        %4290 = vset.pattern.permute.xlu0 3
        %4291 = vperm.xlu0 %4290, %v4193
        %v4292 = vpop.permute.xlu0 %4291
        %4293 = vset.pattern.permute.xlu0 3
        %4294 = vperm.xlu0 %4293, %v4195
        %v4295 = vpop.permute.xlu0 %4294
        %4296 = vset.pattern.permute.xlu0 3
        %4297 = vperm.xlu0 %4296, %v4197
        %v4298 = vpop.permute.xlu0 %4297
        %4299 = vset.pattern.permute.xlu0 3
        %4300 = vperm.xlu0 %4299, %v4199
        %v4301 = vpop.permute.xlu0 %4300
        %4302 = vset.pattern.permute.xlu0 3
        %4303 = vperm.xlu0 %4302, %v4201
        %v4304 = vpop.permute.xlu0 %4303
        %4305 = vset.pattern.permute.xlu0 3
        %4306 = vperm.xlu0 %4305, %v4203
        %v4307 = vpop.permute.xlu0 %4306
        %4308 = vset.pattern.permute.xlu0 3
        %4309 = vperm.xlu0 %4308, %v4205
        %v4310 = vpop.permute.xlu0 %4309
        %4311 = vset.pattern.permute.xlu0 3
        %4312 = vperm.xlu0 %4311, %v4207
        %v4313 = vpop.permute.xlu0 %4312
        %4314 = vset.pattern.permute.xlu0 3
        %4315 = vperm.xlu0 %4314, %v4209
        %v4316 = vpop.permute.xlu0 %4315
        %4317 = vset.pattern.permute.xlu0 3
        %4318 = vperm.xlu0 %4317, %v4211
        %v4319 = vpop.permute.xlu0 %4318
        %4320 = vset.pattern.permute.xlu0 3
        %4321 = vperm.xlu0 %4320, %v4213
        %v4322 = vpop.permute.xlu0 %4321
        %4323 = vset.pattern.permute.xlu0 3
        %4324 = vperm.xlu0 %4323, %v4215
        %v4325 = vpop.permute.xlu0 %4324
        %4326 = vset.pattern.permute.xlu0 3
        %4327 = vperm.xlu0 %4326, %v4217
        %v4328 = vpop.permute.xlu0 %4327
        %4329 = vset.pattern.permute.xlu0 3
        %4330 = vperm.xlu0 %4329, %v4219
        %v4331 = vpop.permute.xlu0 %4330
        %4332 = vset.pattern.permute.xlu0 3
        %4333 = vperm.xlu0 %4332, %v4221
        %v4334 = vpop.permute.xlu0 %4333
        %4335 = vset.pattern.permute.xlu0 3
        %4336 = vperm.xlu0 %4335, %v4223
        %v4337 = vpop.permute.xlu0 %4336
        %4338 = vset.pattern.permute.xlu0 3
        %4339 = vperm.xlu0 %4338, %v4225
        %v4340 = vpop.permute.xlu0 %4339
        %4341 = vset.pattern.permute.xlu0 3
        %4342 = vperm.xlu0 %4341, %v4227
        %v4343 = vpop.permute.xlu0 %4342
        %4344 = vset.pattern.permute.xlu0 3
        %4345 = vperm.xlu0 %4344, %v4229
        %v4346 = vpop.permute.xlu0 %4345
        %4347 = vset.pattern.permute.xlu0 3
        %4348 = vperm.xlu0 %4347, %v4231
        %v4349 = vpop.permute.xlu0 %4348
        %4350 = vset.pattern.permute.xlu0 3
        %4351 = vperm.xlu0 %4350, %v4233
        %v4352 = vpop.permute.xlu0 %4351
        %4353 = vset.pattern.permute.xlu0 3
        %4354 = vperm.xlu0 %4353, %v4235
        %v4355 = vpop.permute.xlu0 %4354
        %4356 = vset.pattern.permute.xlu0 3
        %4357 = vperm.xlu0 %4356, %v4237
        %v4358 = vpop.permute.xlu0 %4357
        %4359 = vset.pattern.permute.xlu0 3
        %4360 = vperm.xlu0 %4359, %v4239
        %v4361 = vpop.permute.xlu0 %4360
        %4362 = vset.pattern.permute.xlu0 3
        %4363 = vperm.xlu0 %4362, %v4241
        %v4364 = vpop.permute.xlu0 %4363
        %4365 = vset.pattern.permute.xlu0 3
        %4366 = vperm.xlu0 %4365, %v4243
        %v4367 = vpop.permute.xlu0 %4366
        %4368 = vset.pattern.permute.xlu0 3
        %4369 = vperm.xlu0 %4368, %v4245
        %v4370 = vpop.permute.xlu0 %4369
        %4371 = vset.pattern.permute.xlu0 3
        %4372 = vperm.xlu0 %4371, %v4247
        %v4373 = vpop.permute.xlu0 %4372
        %4374 = vset.pattern.permute.xlu0 3
        %4375 = vperm.xlu0 %4374, %v4249
        %v4376 = vpop.permute.xlu0 %4375
        %4377 = vset.pattern.permute.xlu0 3
        %4378 = vperm.xlu0 %4377, %v4251
        %v4379 = vpop.permute.xlu0 %4378
        %v4380 = vperm.slane %v4286, %v1000
        %v4381 = vperm.slane %v4289, %v1002
        %v4382 = vsel %vm1004, %v4381, %v4380
        %v4383 = vperm.slane %v4292, %v1000
        %v4384 = vperm.slane %v4295, %v1002
        %v4385 = vsel %vm1004, %v4384, %v4383
        %v4386 = vperm.slane %v4298, %v1000
        %v4387 = vperm.slane %v4301, %v1002
        %v4388 = vsel %vm1004, %v4387, %v4386
        %v4389 = vperm.slane %v4304, %v1000
        %v4390 = vperm.slane %v4307, %v1002
        %v4391 = vsel %vm1004, %v4390, %v4389
        %v4392 = vperm.slane %v4310, %v1000
        %v4393 = vperm.slane %v4313, %v1002
        %v4394 = vsel %vm1004, %v4393, %v4392
        %v4395 = vperm.slane %v4316, %v1000
        %v4396 = vperm.slane %v4319, %v1002
        %v4397 = vsel %vm1004, %v4396, %v4395
        %v4398 = vperm.slane %v4322, %v1000
        %v4399 = vperm.slane %v4325, %v1002
        %v4400 = vsel %vm1004, %v4399, %v4398
        %v4401 = vperm.slane %v4328, %v1000
        %v4402 = vperm.slane %v4331, %v1002
        %v4403 = vsel %vm1004, %v4402, %v4401
        %v4404 = vperm.slane %v4334, %v1000
        %v4405 = vperm.slane %v4337, %v1002
        %v4406 = vsel %vm1004, %v4405, %v4404
        %v4407 = vperm.slane %v4340, %v1000
        %v4408 = vperm.slane %v4343, %v1002
        %v4409 = vsel %vm1004, %v4408, %v4407
        %v4410 = vperm.slane %v4346, %v1000
        %v4411 = vperm.slane %v4349, %v1002
        %v4412 = vsel %vm1004, %v4411, %v4410
        %v4413 = vperm.slane %v4352, %v1000
        %v4414 = vperm.slane %v4355, %v1002
        %v4415 = vsel %vm1004, %v4414, %v4413
        %v4416 = vperm.slane %v4358, %v1000
        %v4417 = vperm.slane %v4361, %v1002
        %v4418 = vsel %vm1004, %v4417, %v4416
        %v4419 = vperm.slane %v4364, %v1000
        %v4420 = vperm.slane %v4367, %v1002
        %v4421 = vsel %vm1004, %v4420, %v4419
        %v4422 = vperm.slane %v4370, %v1000
        %v4423 = vperm.slane %v4373, %v1002
        %v4424 = vsel %vm1004, %v4423, %v4422
        %v4425 = vperm.slane %v4376, %v1000
        %v4426 = vperm.slane %v4379, %v1002
        %v4427 = vsel %vm1004, %v4426, %v4425
        %v4428 = vsel %vm1051, %v4385, %v4382
        %v4429 = vsel %vm1053, %v4388, %v4428
        %v4430 = vsel %vm1055, %v4391, %v4429
        %v4431 = vsel %vm1057, %v4394, %v4430
        %v4432 = vsel %vm1059, %v4397, %v4431
        %v4433 = vsel %vm1061, %v4400, %v4432
        %v4434 = vsel %vm1063, %v4403, %v4433
        %v4435 = vsel %vm1051, %v4409, %v4406
        %v4436 = vsel %vm1053, %v4412, %v4435
        %v4437 = vsel %vm1055, %v4415, %v4436
        %v4438 = vsel %vm1057, %v4418, %v4437
        %v4439 = vsel %vm1059, %v4421, %v4438
        %v4440 = vsel %vm1061, %v4424, %v4439
        %v4441 = vsel %vm1063, %v4427, %v4440
        %v4444 = vsel %vm1074, %v4434, 0.0
        %4445 = vadd.xlane.f32.xlu0 %v4444
        %v4446 = vpop.xlane.xlu0 %4445
        %v4447 = vsel %vm1074, %v4441, 0.0
        %4448 = vadd.xlane.f32.xlu0 %v4447
        %v4449 = vpop.xlane.xlu0 %4448
        %v4452 = vperm.slane %v4446, 0
        %v4453 = vperm.slane %v4446, 1
        %v4454 = vperm.slane %v4446, 2
        %v4455 = vperm.slane %v4446, 3
        %v4456 = vperm.slane %v4446, 4
        %v4457 = vperm.slane %v4446, 5
        %v4458 = vperm.slane %v4446, 6
        %v4459 = vperm.slane %v4446, 7
        %v4460 = vperm.slane %v4449, 0
        %v4461 = vperm.slane %v4449, 1
        %v4462 = vperm.slane %v4449, 2
        %v4463 = vperm.slane %v4449, 3
        %v4464 = vperm.slane %v4449, 4
        %v4465 = vperm.slane %v4449, 5
        %v4466 = vperm.slane %v4449, 6
        %v4467 = vperm.slane %v4449, 7
        %v4484 = vrcp.pop %v4452
        %v4485 = vmul.f32 %v4452, %v4484
        %v4486 = vsub.f32 1.0, %v4485
        %v4487 = vmul.f32 %v4484, %v4486
        %v4488 = vadd.f32 %v4484, %v4487
        %vm4489 = vweird.f32 %v4452
        %vm4490 = vweird.f32 %v4484
        %vm4491 = vmor %vm4489, %vm4490
        %v4492 = vsel %vm4491, %v4484, %v4488
        %v4493 = vand.u32 2147483647, %v4452
        %vm4494 = vcmp.eq.f32.partialorder %v4493, 8.507059e+37
        %v4495 = vand.u32 %v4452, 2147483648
        %v4496 = vor.u32 1.1754944e-38, %v4495
        %v4497 = vsel %vm4494, %v4496, %v4492
        %v4498 = vmul.f32 %v4189, %v4497
        %v4499 = vmul.f32 %v4191, %v4497
        %v4500 = vrcp.pop %v4453
        %v4501 = vmul.f32 %v4453, %v4500
        %v4502 = vsub.f32 1.0, %v4501
        %v4503 = vmul.f32 %v4500, %v4502
        %v4504 = vadd.f32 %v4500, %v4503
        %vm4505 = vweird.f32 %v4453
        %vm4506 = vweird.f32 %v4500
        %vm4507 = vmor %vm4505, %vm4506
        %v4508 = vsel %vm4507, %v4500, %v4504
        %v4509 = vand.u32 2147483647, %v4453
        %vm4510 = vcmp.eq.f32.partialorder %v4509, 8.507059e+37
        %v4511 = vand.u32 %v4453, 2147483648
        %v4512 = vor.u32 1.1754944e-38, %v4511
        %v4513 = vsel %vm4510, %v4512, %v4508
        %v4514 = vmul.f32 %v4193, %v4513
        %v4515 = vmul.f32 %v4195, %v4513
        %v4516 = vrcp.pop %v4454
        %v4517 = vmul.f32 %v4454, %v4516
        %v4518 = vsub.f32 1.0, %v4517
        %v4519 = vmul.f32 %v4516, %v4518
        %v4520 = vadd.f32 %v4516, %v4519
        %vm4521 = vweird.f32 %v4454
        %vm4522 = vweird.f32 %v4516
        %vm4523 = vmor %vm4521, %vm4522
        %v4524 = vsel %vm4523, %v4516, %v4520
        %v4525 = vand.u32 2147483647, %v4454
        %vm4526 = vcmp.eq.f32.partialorder %v4525, 8.507059e+37
        %v4527 = vand.u32 %v4454, 2147483648
        %v4528 = vor.u32 1.1754944e-38, %v4527
        %v4529 = vsel %vm4526, %v4528, %v4524
        %v4530 = vmul.f32 %v4197, %v4529
        %v4531 = vmul.f32 %v4199, %v4529
        %v4532 = vrcp.pop %v4455
        %v4533 = vmul.f32 %v4455, %v4532
        %v4534 = vsub.f32 1.0, %v4533
        %v4535 = vmul.f32 %v4532, %v4534
        %v4536 = vadd.f32 %v4532, %v4535
        %vm4537 = vweird.f32 %v4455
        %vm4538 = vweird.f32 %v4532
        %vm4539 = vmor %vm4537, %vm4538
        %v4540 = vsel %vm4539, %v4532, %v4536
        %v4541 = vand.u32 2147483647, %v4455
        %vm4542 = vcmp.eq.f32.partialorder %v4541, 8.507059e+37
        %v4543 = vand.u32 %v4455, 2147483648
        %v4544 = vor.u32 1.1754944e-38, %v4543
        %v4545 = vsel %vm4542, %v4544, %v4540
        %v4546 = vmul.f32 %v4201, %v4545
        %v4547 = vmul.f32 %v4203, %v4545
        %v4548 = vrcp.pop %v4456
        %v4549 = vmul.f32 %v4456, %v4548
        %v4550 = vsub.f32 1.0, %v4549
        %v4551 = vmul.f32 %v4548, %v4550
        %v4552 = vadd.f32 %v4548, %v4551
        %vm4553 = vweird.f32 %v4456
        %vm4554 = vweird.f32 %v4548
        %vm4555 = vmor %vm4553, %vm4554
        %v4556 = vsel %vm4555, %v4548, %v4552
        %v4557 = vand.u32 2147483647, %v4456
        %vm4558 = vcmp.eq.f32.partialorder %v4557, 8.507059e+37
        %v4559 = vand.u32 %v4456, 2147483648
        %v4560 = vor.u32 1.1754944e-38, %v4559
        %v4561 = vsel %vm4558, %v4560, %v4556
        %v4562 = vmul.f32 %v4205, %v4561
        %v4563 = vmul.f32 %v4207, %v4561
        %v4564 = vrcp.pop %v4457
        %v4565 = vmul.f32 %v4457, %v4564
        %v4566 = vsub.f32 1.0, %v4565
        %v4567 = vmul.f32 %v4564, %v4566
        %v4568 = vadd.f32 %v4564, %v4567
        %vm4569 = vweird.f32 %v4457
        %vm4570 = vweird.f32 %v4564
        %vm4571 = vmor %vm4569, %vm4570
        %v4572 = vsel %vm4571, %v4564, %v4568
        %v4573 = vand.u32 2147483647, %v4457
        %vm4574 = vcmp.eq.f32.partialorder %v4573, 8.507059e+37
        %v4575 = vand.u32 %v4457, 2147483648
        %v4576 = vor.u32 1.1754944e-38, %v4575
        %v4577 = vsel %vm4574, %v4576, %v4572
        %v4578 = vmul.f32 %v4209, %v4577
        %v4579 = vmul.f32 %v4211, %v4577
        %v4580 = vrcp.pop %v4458
        %v4581 = vmul.f32 %v4458, %v4580
        %v4582 = vsub.f32 1.0, %v4581
        %v4583 = vmul.f32 %v4580, %v4582
        %v4584 = vadd.f32 %v4580, %v4583
        %vm4585 = vweird.f32 %v4458
        %vm4586 = vweird.f32 %v4580
        %vm4587 = vmor %vm4585, %vm4586
        %v4588 = vsel %vm4587, %v4580, %v4584
        %v4589 = vand.u32 2147483647, %v4458
        %vm4590 = vcmp.eq.f32.partialorder %v4589, 8.507059e+37
        %v4591 = vand.u32 %v4458, 2147483648
        %v4592 = vor.u32 1.1754944e-38, %v4591
        %v4593 = vsel %vm4590, %v4592, %v4588
        %v4594 = vmul.f32 %v4213, %v4593
        %v4595 = vmul.f32 %v4215, %v4593
        %v4596 = vrcp.pop %v4459
        %v4597 = vmul.f32 %v4459, %v4596
        %v4598 = vsub.f32 1.0, %v4597
        %v4599 = vmul.f32 %v4596, %v4598
        %v4600 = vadd.f32 %v4596, %v4599
        %vm4601 = vweird.f32 %v4459
        %vm4602 = vweird.f32 %v4596
        %vm4603 = vmor %vm4601, %vm4602
        %v4604 = vsel %vm4603, %v4596, %v4600
        %v4605 = vand.u32 2147483647, %v4459
        %vm4606 = vcmp.eq.f32.partialorder %v4605, 8.507059e+37
        %v4607 = vand.u32 %v4459, 2147483648
        %v4608 = vor.u32 1.1754944e-38, %v4607
        %v4609 = vsel %vm4606, %v4608, %v4604
        %v4610 = vmul.f32 %v4217, %v4609
        %v4611 = vmul.f32 %v4219, %v4609
        %v4612 = vrcp.pop %v4460
        %v4613 = vmul.f32 %v4460, %v4612
        %v4614 = vsub.f32 1.0, %v4613
        %v4615 = vmul.f32 %v4612, %v4614
        %v4616 = vadd.f32 %v4612, %v4615
        %vm4617 = vweird.f32 %v4460
        %vm4618 = vweird.f32 %v4612
        %vm4619 = vmor %vm4617, %vm4618
        %v4620 = vsel %vm4619, %v4612, %v4616
        %v4621 = vand.u32 2147483647, %v4460
        %vm4622 = vcmp.eq.f32.partialorder %v4621, 8.507059e+37
        %v4623 = vand.u32 %v4460, 2147483648
        %v4624 = vor.u32 1.1754944e-38, %v4623
        %v4625 = vsel %vm4622, %v4624, %v4620
        %v4626 = vmul.f32 %v4221, %v4625
        %v4627 = vmul.f32 %v4223, %v4625
        %v4628 = vrcp.pop %v4461
        %v4629 = vmul.f32 %v4461, %v4628
        %v4630 = vsub.f32 1.0, %v4629
        %v4631 = vmul.f32 %v4628, %v4630
        %v4632 = vadd.f32 %v4628, %v4631
        %vm4633 = vweird.f32 %v4461
        %vm4634 = vweird.f32 %v4628
        %vm4635 = vmor %vm4633, %vm4634
        %v4636 = vsel %vm4635, %v4628, %v4632
        %v4637 = vand.u32 2147483647, %v4461
        %vm4638 = vcmp.eq.f32.partialorder %v4637, 8.507059e+37
        %v4639 = vand.u32 %v4461, 2147483648
        %v4640 = vor.u32 1.1754944e-38, %v4639
        %v4641 = vsel %vm4638, %v4640, %v4636
        %v4642 = vmul.f32 %v4225, %v4641
        %v4643 = vmul.f32 %v4227, %v4641
        %v4644 = vrcp.pop %v4462
        %v4645 = vmul.f32 %v4462, %v4644
        %v4646 = vsub.f32 1.0, %v4645
        %v4647 = vmul.f32 %v4644, %v4646
        %v4648 = vadd.f32 %v4644, %v4647
        %vm4649 = vweird.f32 %v4462
        %vm4650 = vweird.f32 %v4644
        %vm4651 = vmor %vm4649, %vm4650
        %v4652 = vsel %vm4651, %v4644, %v4648
        %v4653 = vand.u32 2147483647, %v4462
        %vm4654 = vcmp.eq.f32.partialorder %v4653, 8.507059e+37
        %v4655 = vand.u32 %v4462, 2147483648
        %v4656 = vor.u32 1.1754944e-38, %v4655
        %v4657 = vsel %vm4654, %v4656, %v4652
        %v4658 = vmul.f32 %v4229, %v4657
        %v4659 = vmul.f32 %v4231, %v4657
        %v4660 = vrcp.pop %v4463
        %v4661 = vmul.f32 %v4463, %v4660
        %v4662 = vsub.f32 1.0, %v4661
        %v4663 = vmul.f32 %v4660, %v4662
        %v4664 = vadd.f32 %v4660, %v4663
        %vm4665 = vweird.f32 %v4463
        %vm4666 = vweird.f32 %v4660
        %vm4667 = vmor %vm4665, %vm4666
        %v4668 = vsel %vm4667, %v4660, %v4664
        %v4669 = vand.u32 2147483647, %v4463
        %vm4670 = vcmp.eq.f32.partialorder %v4669, 8.507059e+37
        %v4671 = vand.u32 %v4463, 2147483648
        %v4672 = vor.u32 1.1754944e-38, %v4671
        %v4673 = vsel %vm4670, %v4672, %v4668
        %v4674 = vmul.f32 %v4233, %v4673
        %v4675 = vmul.f32 %v4235, %v4673
        %v4676 = vrcp.pop %v4464
        %v4677 = vmul.f32 %v4464, %v4676
        %v4678 = vsub.f32 1.0, %v4677
        %v4679 = vmul.f32 %v4676, %v4678
        %v4680 = vadd.f32 %v4676, %v4679
        %vm4681 = vweird.f32 %v4464
        %vm4682 = vweird.f32 %v4676
        %vm4683 = vmor %vm4681, %vm4682
        %v4684 = vsel %vm4683, %v4676, %v4680
        %v4685 = vand.u32 2147483647, %v4464
        %vm4686 = vcmp.eq.f32.partialorder %v4685, 8.507059e+37
        %v4687 = vand.u32 %v4464, 2147483648
        %v4688 = vor.u32 1.1754944e-38, %v4687
        %v4689 = vsel %vm4686, %v4688, %v4684
        %v4690 = vmul.f32 %v4237, %v4689
        %v4691 = vmul.f32 %v4239, %v4689
        %v4692 = vrcp.pop %v4465
        %v4693 = vmul.f32 %v4465, %v4692
        %v4694 = vsub.f32 1.0, %v4693
        %v4695 = vmul.f32 %v4692, %v4694
        %v4696 = vadd.f32 %v4692, %v4695
        %vm4697 = vweird.f32 %v4465
        %vm4698 = vweird.f32 %v4692
        %vm4699 = vmor %vm4697, %vm4698
        %v4700 = vsel %vm4699, %v4692, %v4696
        %v4701 = vand.u32 2147483647, %v4465
        %vm4702 = vcmp.eq.f32.partialorder %v4701, 8.507059e+37
        %v4703 = vand.u32 %v4465, 2147483648
        %v4704 = vor.u32 1.1754944e-38, %v4703
        %v4705 = vsel %vm4702, %v4704, %v4700
        %v4706 = vmul.f32 %v4241, %v4705
        %v4707 = vmul.f32 %v4243, %v4705
        %v4708 = vrcp.pop %v4466
        %v4709 = vmul.f32 %v4466, %v4708
        %v4710 = vsub.f32 1.0, %v4709
        %v4711 = vmul.f32 %v4708, %v4710
        %v4712 = vadd.f32 %v4708, %v4711
        %vm4713 = vweird.f32 %v4466
        %vm4714 = vweird.f32 %v4708
        %vm4715 = vmor %vm4713, %vm4714
        %v4716 = vsel %vm4715, %v4708, %v4712
        %v4717 = vand.u32 2147483647, %v4466
        %vm4718 = vcmp.eq.f32.partialorder %v4717, 8.507059e+37
        %v4719 = vand.u32 %v4466, 2147483648
        %v4720 = vor.u32 1.1754944e-38, %v4719
        %v4721 = vsel %vm4718, %v4720, %v4716
        %v4722 = vmul.f32 %v4245, %v4721
        %v4723 = vmul.f32 %v4247, %v4721
        %v4724 = vrcp.pop %v4467
        %v4725 = vmul.f32 %v4467, %v4724
        %v4726 = vsub.f32 1.0, %v4725
        %v4727 = vmul.f32 %v4724, %v4726
        %v4728 = vadd.f32 %v4724, %v4727
        %vm4729 = vweird.f32 %v4467
        %vm4730 = vweird.f32 %v4724
        %vm4731 = vmor %vm4729, %vm4730
        %v4732 = vsel %vm4731, %v4724, %v4728
        %v4733 = vand.u32 2147483647, %v4467
        %vm4734 = vcmp.eq.f32.partialorder %v4733, 8.507059e+37
        %v4735 = vand.u32 %v4467, 2147483648
        %v4736 = vor.u32 1.1754944e-38, %v4735
        %v4737 = vsel %vm4734, %v4736, %v4732
        %v4738 = vmul.f32 %v4249, %v4737
        %v4739 = vmul.f32 %v4251, %v4737
        %4772 = vset.pattern.permute.xlu0 3
        %4773 = vperm.xlu0 %4772, %v4498
        %v4774 = vpop.permute.xlu0 %4773
        %4775 = vset.pattern.permute.xlu0 3
        %4776 = vperm.xlu0 %4775, %v4499
        %v4777 = vpop.permute.xlu0 %4776
        %4778 = vset.pattern.permute.xlu0 3
        %4779 = vperm.xlu0 %4778, %v4514
        %v4780 = vpop.permute.xlu0 %4779
        %4781 = vset.pattern.permute.xlu0 3
        %4782 = vperm.xlu0 %4781, %v4515
        %v4783 = vpop.permute.xlu0 %4782
        %4784 = vset.pattern.permute.xlu0 3
        %4785 = vperm.xlu0 %4784, %v4530
        %v4786 = vpop.permute.xlu0 %4785
        %4787 = vset.pattern.permute.xlu0 3
        %4788 = vperm.xlu0 %4787, %v4531
        %v4789 = vpop.permute.xlu0 %4788
        %4790 = vset.pattern.permute.xlu0 3
        %4791 = vperm.xlu0 %4790, %v4546
        %v4792 = vpop.permute.xlu0 %4791
        %4793 = vset.pattern.permute.xlu0 3
        %4794 = vperm.xlu0 %4793, %v4547
        %v4795 = vpop.permute.xlu0 %4794
        %4796 = vset.pattern.permute.xlu0 3
        %4797 = vperm.xlu0 %4796, %v4562
        %v4798 = vpop.permute.xlu0 %4797
        %4799 = vset.pattern.permute.xlu0 3
        %4800 = vperm.xlu0 %4799, %v4563
        %v4801 = vpop.permute.xlu0 %4800
        %4802 = vset.pattern.permute.xlu0 3
        %4803 = vperm.xlu0 %4802, %v4578
        %v4804 = vpop.permute.xlu0 %4803
        %4805 = vset.pattern.permute.xlu0 3
        %4806 = vperm.xlu0 %4805, %v4579
        %v4807 = vpop.permute.xlu0 %4806
        %4808 = vset.pattern.permute.xlu0 3
        %4809 = vperm.xlu0 %4808, %v4594
        %v4810 = vpop.permute.xlu0 %4809
        %4811 = vset.pattern.permute.xlu0 3
        %4812 = vperm.xlu0 %4811, %v4595
        %v4813 = vpop.permute.xlu0 %4812
        %4814 = vset.pattern.permute.xlu0 3
        %4815 = vperm.xlu0 %4814, %v4610
        %v4816 = vpop.permute.xlu0 %4815
        %4817 = vset.pattern.permute.xlu0 3
        %4818 = vperm.xlu0 %4817, %v4611
        %v4819 = vpop.permute.xlu0 %4818
        %4820 = vset.pattern.permute.xlu0 3
        %4821 = vperm.xlu0 %4820, %v4626
        %v4822 = vpop.permute.xlu0 %4821
        %4823 = vset.pattern.permute.xlu0 3
        %4824 = vperm.xlu0 %4823, %v4627
        %v4825 = vpop.permute.xlu0 %4824
        %4826 = vset.pattern.permute.xlu0 3
        %4827 = vperm.xlu0 %4826, %v4642
        %v4828 = vpop.permute.xlu0 %4827
        %4829 = vset.pattern.permute.xlu0 3
        %4830 = vperm.xlu0 %4829, %v4643
        %v4831 = vpop.permute.xlu0 %4830
        %4832 = vset.pattern.permute.xlu0 3
        %4833 = vperm.xlu0 %4832, %v4658
        %v4834 = vpop.permute.xlu0 %4833
        %4835 = vset.pattern.permute.xlu0 3
        %4836 = vperm.xlu0 %4835, %v4659
        %v4837 = vpop.permute.xlu0 %4836
        %4838 = vset.pattern.permute.xlu0 3
        %4839 = vperm.xlu0 %4838, %v4674
        %v4840 = vpop.permute.xlu0 %4839
        %4841 = vset.pattern.permute.xlu0 3
        %4842 = vperm.xlu0 %4841, %v4675
        %v4843 = vpop.permute.xlu0 %4842
        %4844 = vset.pattern.permute.xlu0 3
        %4845 = vperm.xlu0 %4844, %v4690
        %v4846 = vpop.permute.xlu0 %4845
        %4847 = vset.pattern.permute.xlu0 3
        %4848 = vperm.xlu0 %4847, %v4691
        %v4849 = vpop.permute.xlu0 %4848
        %4850 = vset.pattern.permute.xlu0 3
        %4851 = vperm.xlu0 %4850, %v4706
        %v4852 = vpop.permute.xlu0 %4851
        %4853 = vset.pattern.permute.xlu0 3
        %4854 = vperm.xlu0 %4853, %v4707
        %v4855 = vpop.permute.xlu0 %4854
        %4856 = vset.pattern.permute.xlu0 3
        %4857 = vperm.xlu0 %4856, %v4722
        %v4858 = vpop.permute.xlu0 %4857
        %4859 = vset.pattern.permute.xlu0 3
        %4860 = vperm.xlu0 %4859, %v4723
        %v4861 = vpop.permute.xlu0 %4860
        %4862 = vset.pattern.permute.xlu0 3
        %4863 = vperm.xlu0 %4862, %v4738
        %v4864 = vpop.permute.xlu0 %4863
        %4865 = vset.pattern.permute.xlu0 3
        %4866 = vperm.xlu0 %4865, %v4739
        %v4867 = vpop.permute.xlu0 %4866
        %v4868 = vperm.slane %v4774, %v1000
        %v4869 = vperm.slane %v4777, %v1002
        %v4870 = vsel %vm1004, %v4869, %v4868
        %v4871 = vperm.slane %v4780, %v1000
        %v4872 = vperm.slane %v4783, %v1002
        %v4873 = vsel %vm1004, %v4872, %v4871
        %v4874 = vperm.slane %v4786, %v1000
        %v4875 = vperm.slane %v4789, %v1002
        %v4876 = vsel %vm1004, %v4875, %v4874
        %v4877 = vperm.slane %v4792, %v1000
        %v4878 = vperm.slane %v4795, %v1002
        %v4879 = vsel %vm1004, %v4878, %v4877
        %v4880 = vperm.slane %v4798, %v1000
        %v4881 = vperm.slane %v4801, %v1002
        %v4882 = vsel %vm1004, %v4881, %v4880
        %v4883 = vperm.slane %v4804, %v1000
        %v4884 = vperm.slane %v4807, %v1002
        %v4885 = vsel %vm1004, %v4884, %v4883
        %v4886 = vperm.slane %v4810, %v1000
        %v4887 = vperm.slane %v4813, %v1002
        %v4888 = vsel %vm1004, %v4887, %v4886
        %v4889 = vperm.slane %v4816, %v1000
        %v4890 = vperm.slane %v4819, %v1002
        %v4891 = vsel %vm1004, %v4890, %v4889
        %v4892 = vperm.slane %v4822, %v1000
        %v4893 = vperm.slane %v4825, %v1002
        %v4894 = vsel %vm1004, %v4893, %v4892
        %v4895 = vperm.slane %v4828, %v1000
        %v4896 = vperm.slane %v4831, %v1002
        %v4897 = vsel %vm1004, %v4896, %v4895
        %v4898 = vperm.slane %v4834, %v1000
        %v4899 = vperm.slane %v4837, %v1002
        %v4900 = vsel %vm1004, %v4899, %v4898
        %v4901 = vperm.slane %v4840, %v1000
        %v4902 = vperm.slane %v4843, %v1002
        %v4903 = vsel %vm1004, %v4902, %v4901
        %v4904 = vperm.slane %v4846, %v1000
        %v4905 = vperm.slane %v4849, %v1002
        %v4906 = vsel %vm1004, %v4905, %v4904
        %v4907 = vperm.slane %v4852, %v1000
        %v4908 = vperm.slane %v4855, %v1002
        %v4909 = vsel %vm1004, %v4908, %v4907
        %v4910 = vperm.slane %v4858, %v1000
        %v4911 = vperm.slane %v4861, %v1002
        %v4912 = vsel %vm1004, %v4911, %v4910
        %v4913 = vperm.slane %v4864, %v1000
        %v4914 = vperm.slane %v4867, %v1002
        %v4915 = vsel %vm1004, %v4914, %v4913
        %v4916 = vsel %vm1051, %v4873, %v4870
        %v4917 = vsel %vm1053, %v4876, %v4916
        %v4918 = vsel %vm1055, %v4879, %v4917
        %v4919 = vsel %vm1057, %v4882, %v4918
        %v4920 = vsel %vm1059, %v4885, %v4919
        %v4921 = vsel %vm1061, %v4888, %v4920
        %v4922 = vsel %vm1063, %v4891, %v4921
        %v4923 = vsel %vm1051, %v4897, %v4894
        %v4924 = vsel %vm1053, %v4900, %v4923
        %v4925 = vsel %vm1055, %v4903, %v4924
        %v4926 = vsel %vm1057, %v4906, %v4925
        %v4927 = vsel %vm1059, %v4909, %v4926
        %v4928 = vsel %vm1061, %v4912, %v4927
        %v4929 = vsel %vm1063, %v4915, %v4928
        %4930 = vrot.lane.b32.xlu0 %v621, 104
        %v4931 = vpop.permute.xlu0 %4930
        %4932 = vrot.lane.b32.xlu0 %v624, 104
        %v4933 = vpop.permute.xlu0 %4932
        %v4936 = vsel %vm1074, %v4922, 0
        %v4938 = vsel %vm1074, %v4929, 0
        %4940 = vmatpush.msra.mxu0 0.0
        %4941 = vmatpush.msra.mxu0 0.0
        %4942 = vmatpush.msra.mxu0 0.0
        %4943 = vmatpush.msra.mxu0 0.0
        %4944 = vmatpush.msra.mxu0 0.0
        %4945 = vmatpush.msra.mxu0 0.0
        %4946 = vmatpush.msra.mxu0 0.0
        %4947 = vmatpush.msra.mxu0 0.0
        %4948 = vmatpush.msra.mxu0 0.0
        %4949 = vmatpush.msra.mxu0 0.0
        %4950 = vmatpush.msra.mxu0 0.0
        %4951 = vmatpush.msra.mxu0 0.0
        %4952 = vmatpush.msra.mxu0 0.0
        %4953 = vmatpush.msra.mxu0 0.0
        %4954 = vmatpush.msra.mxu0 %v4933
        %4955 = vmatpush.msra.mxu0 %v4931
        %4956 = vmatmul.f32.gmra.mxu0 %v4936
        %v4957 = vpop.f32.mrf.mxu0
        %v4958 = vadd.f32 0.0, %v4957
        %4959 = vmatmul.f32.gmra.mxu0 %v4938
        %v4960 = vpop.f32.mrf.mxu0
        %v4961 = vadd.f32 0.0, %v4960
        %4962 = vdwg.mxu0
        %4965 = vrot.lane.b32.xlu0 %v4958, 24
        %v4966 = vpop.permute.xlu0 %4965
        %4967 = vrot.lane.b32.xlu0 %v4961, 24
        %v4968 = vpop.permute.xlu0 %4967
        %vm4971 = vcmask 261312
        %4972 = vst.msk [vmem:[#allocation2] sm:$0xff] %vm4971, %v4966
        %4973 = vst.msk [vmem:[#allocation2 + $0x8] sm:$0xff] %vm4971, %v4968
        %v4974 = vld [vmem:[#allocation2] sm:$0xff]
        %v4975 = vld [vmem:[#allocation2 + $0x8] sm:$0xff]
        %v4976 = vld [vmem:[#allocation6] sm:$0xff]
        %v4977 = vld [vmem:[#allocation6 + $0x8] sm:$0xff]
        %v4978 = vld [vmem:[#allocation6 + $0x10] sm:$0xff]
        %v4979 = vld [vmem:[#allocation6 + $0x18] sm:$0xff]
        %v4981 = vsel %vm596, %v4974, 0
        %v4984 = vsel %vm596, %v4975, 0
        %4986 = vmatpush.msra.mxu0 0.0
        %4987 = vmatpush.msra.mxu0 0.0
        %4988 = vmatpush.msra.mxu0 0.0
        %4989 = vmatpush.msra.mxu0 0.0
        %4990 = vmatpush.msra.mxu0 0.0
        %4991 = vmatpush.msra.mxu0 0.0
        %4992 = vmatpush.msra.mxu0 0.0
        %4993 = vmatpush.msra.mxu0 0.0
        %4994 = vmatpush.msra.mxu0 0.0
        %4995 = vmatpush.msra.mxu0 0.0
        %4996 = vmatpush.msra.mxu0 0.0
        %4997 = vmatpush.msra.mxu0 0.0
        %4998 = vmatpush.msra.mxu0 %v4979
        %4999 = vmatpush.msra.mxu0 %v4978
        %5000 = vmatpush.msra.mxu0 %v4977
        %5001 = vmatpush.msra.mxu0 %v4976
        %5002 = vmatmul.f32.gmra.mxu0 %v4981
        %v5003 = vpop.f32.mrf.mxu0
        %v5004 = vadd.f32 0.0, %v5003
        %5005 = vmatmul.f32.gmra.mxu0 %v4984
        %v5006 = vpop.f32.mrf.mxu0
        %v5007 = vadd.f32 0.0, %v5006
        %5008 = vdwg.mxu0
        %v5009 = vld [vmem:[%s9] sm:$0x1]
        %v5010 = vld [vmem:[%s10] sm:$0x1]
        %v5011 = vsel %vm596, %v5004, 0.0
        %5012 = vadd.xlane.f32.xlu0 %v5011
        %v5013 = vpop.xlane.xlu0 %5012
        %v5014 = vsel %vm596, %v5007, 0.0
        %5015 = vadd.xlane.f32.xlu0 %v5014
        %v5016 = vpop.xlane.xlu0 %5015
        %v5017 = vrcp.pop 32.0
        %v5018 = vmul.f32 32.0, %v5017
        %v5019 = vsub.f32 1.0, %v5018
        %v5020 = vmul.f32 %v5017, %v5019
        %v5021 = vadd.f32 %v5017, %v5020
        %vm5022 = vweird.f32 %v5017
        %v5023 = vsel %vm5022, %v5017, %v5021
        %v5024 = vmul.f32 %v5013, %v5023
        %v5025 = vmul.f32 %v5016, %v5023
        %v5026 = vsub.f32 %v5004, %v5024
        %v5027 = vsub.f32 %v5007, %v5025
        %v5028 = vmul.f32 %v5026, %v5026
        %v5029 = vmul.f32 %v5027, %v5027
        %v5030 = vsel %vm596, %v5028, 0.0
        %5031 = vadd.xlane.f32.xlu0 %v5030
        %v5032 = vpop.xlane.xlu0 %5031
        %v5033 = vsel %vm596, %v5029, 0.0
        %5034 = vadd.xlane.f32.xlu0 %v5033
        %v5035 = vpop.xlane.xlu0 %5034
        %v5036 = vmul.f32 %v5032, %v5023
        %v5037 = vmul.f32 %v5035, %v5023
        %v5038 = vadd.f32 %v5036, 1e-05
        %v5039 = vadd.f32 %v5037, 1e-05
        %v5040 = vrsqrt.pop %v5038
        %v5041 = vmul.f32 %v5040, %v5038
        %v5042 = vmul.f32 %v5041, %v5040
        %v5043 = vmul.f32 0.5, %v5042
        %v5044 = vsub.f32 1.5, %v5043
        %v5045 = vmul.f32 %v5040, %v5044
        %vm5046 = vweird.f32 %v5038
        %vm5047 = vweird.f32 %v5040
        %vm5048 = vmor %vm5046, %vm5047
        %v5049 = vsel %vm5048, %v5040, %v5045
        %v5050 = vrsqrt.pop %v5039
        %v5051 = vmul.f32 %v5050, %v5039
        %v5052 = vmul.f32 %v5051, %v5050
        %v5053 = vmul.f32 0.5, %v5052
        %v5054 = vsub.f32 1.5, %v5053
        %v5055 = vmul.f32 %v5050, %v5054
        %vm5056 = vweird.f32 %v5039
        %vm5057 = vweird.f32 %v5050
        %vm5058 = vmor %vm5056, %vm5057
        %v5059 = vsel %vm5058, %v5050, %v5055
        %v5060 = vmul.f32 %v5026, %v5049
        %v5061 = vmul.f32 %v5027, %v5059
        %v5063 = vperm.slane %v5009, 0
        %v5065 = vmul.f32 %v5060, %v5063
        %v5066 = vmul.f32 %v5061, %v5063
        %v5068 = vperm.slane %v5010, 0
        %v5070 = vadd.f32 %v5065, %v5068
        %v5071 = vadd.f32 %v5066, %v5068
        %v5072 = vld [vmem:[#allocation8] sm:$0xff]
        %v5073 = vld [vmem:[#allocation8 + $0x8] sm:$0xff]
        %v5074 = vld [vmem:[#allocation8 + $0x10] sm:$0xff]
        %v5075 = vld [vmem:[#allocation8 + $0x18] sm:$0xff]
        %v5076 = vld [vmem:[#allocation9] sm:$0xff]
        %v5077 = vld [vmem:[#allocation9 + $0x8] sm:$0xff]
        %v5078 = vld [vmem:[#allocation9 + $0x10] sm:$0xff]
        %v5079 = vld [vmem:[#allocation9 + $0x18] sm:$0xff]
        %v5081 = vsel %vm596, %v5070, 0
        %v5084 = vsel %vm596, %v5071, 0
        %5086 = vmatpush.msra.mxu0 0.0
        %5087 = vmatpush.msra.mxu0 0.0
        %5088 = vmatpush.msra.mxu0 0.0
        %5089 = vmatpush.msra.mxu0 0.0
        %5090 = vmatpush.msra.mxu0 0.0
        %5091 = vmatpush.msra.mxu0 0.0
        %5092 = vmatpush.msra.mxu0 0.0
        %5093 = vmatpush.msra.mxu0 0.0
        %5094 = vmatpush.msra.mxu0 0.0
        %5095 = vmatpush.msra.mxu0 0.0
        %5096 = vmatpush.msra.mxu0 0.0
        %5097 = vmatpush.msra.mxu0 0.0
        %5098 = vmatpush.msra.mxu0 %v5079
        %5099 = vmatpush.msra.mxu0 %v5078
        %5100 = vmatpush.msra.mxu0 %v5077
        %5101 = vmatpush.msra.mxu0 %v5076
        %5102 = vmatmul.f32.gmra.mxu0 %v5081
        %v5103 = vpop.f32.mrf.mxu0
        %v5104 = vadd.f32 0.0, %v5103
        %5105 = vmatmul.f32.gmra.mxu0 %v5084
        %v5106 = vpop.f32.mrf.mxu0
        %v5107 = vadd.f32 0.0, %v5106
        %5108 = vdwg.mxu0
        %v5110 = vsel %vm596, %v590, 0
        %v5113 = vsel %vm596, %v591, 0
        %5115 = vmatpush.msra.mxu0 0.0
        %5116 = vmatpush.msra.mxu0 0.0
        %5117 = vmatpush.msra.mxu0 0.0
        %5118 = vmatpush.msra.mxu0 0.0
        %5119 = vmatpush.msra.mxu0 0.0
        %5120 = vmatpush.msra.mxu0 0.0
        %5121 = vmatpush.msra.mxu0 0.0
        %5122 = vmatpush.msra.mxu0 0.0
        %5123 = vmatpush.msra.mxu0 0.0
        %5124 = vmatpush.msra.mxu0 0.0
        %5125 = vmatpush.msra.mxu0 0.0
        %5126 = vmatpush.msra.mxu0 0.0
        %5127 = vmatpush.msra.mxu0 %v5075
        %5128 = vmatpush.msra.mxu0 %v5074
        %5129 = vmatpush.msra.mxu0 %v5073
        %5130 = vmatpush.msra.mxu0 %v5072
        %5131 = vmatmul.f32.gmra.mxu0 %v5110
        %v5132 = vpop.f32.mrf.mxu0
        %v5133 = vadd.f32 %v5104, %v5132
        %5134 = vmatmul.f32.gmra.mxu0 %v5113
        %v5135 = vpop.f32.mrf.mxu0
        %v5136 = vadd.f32 %v5107, %v5135
        %5137 = vdwg.mxu0
        %v5138 = vmax.f32 %v5133, 0.0
        %v5139 = vmax.f32 %v5136, 0.0
        %v5140 = vld [vmem:[%s8] sm:$0xff]
        %v5141 = vld [vmem:[%s8 + $0x8] sm:$0xff]
        %v5142 = vld [vmem:[%s8 + $0x10] sm:$0xff]
        %v5143 = vld [vmem:[%s8 + $0x18] sm:$0xff]
        %v5144 = vld [vmem:[%s8 + $0x20] sm:$0xff]
        %v5145 = vld [vmem:[%s8 + $0x28] sm:$0xff]
        %v5146 = vld [vmem:[%s8 + $0x30] sm:$0xff]
        %v5147 = vld [vmem:[%s8 + $0x38] sm:$0xff]
        %vm5148 = vcmask 523264
        %v5150 = vsel %vm5148, %v5138, 0
        %v5153 = vsel %vm5148, %v5139, 0
        %5155 = vmatpush.msra.mxu0 0.0
        %5156 = vmatpush.msra.mxu0 0.0
        %5157 = vmatpush.msra.mxu0 0.0
        %5158 = vmatpush.msra.mxu0 0.0
        %5159 = vmatpush.msra.mxu0 0.0
        %5160 = vmatpush.msra.mxu0 0.0
        %5161 = vmatpush.msra.mxu0 0.0
        %5162 = vmatpush.msra.mxu0 0.0
        %5163 = vmatpush.msra.mxu0 %v5147
        %5164 = vmatpush.msra.mxu0 %v5146
        %5165 = vmatpush.msra.mxu0 %v5145
        %5166 = vmatpush.msra.mxu0 %v5144
        %5167 = vmatpush.msra.mxu0 %v5143
        %5168 = vmatpush.msra.mxu0 %v5142
        %5169 = vmatpush.msra.mxu0 %v5141
        %5170 = vmatpush.msra.mxu0 %v5140
        %5171 = vmatmul.f32.gmra.mxu0 %v5150
        %v5172 = vpop.f32.mrf.mxu0
        %v5173 = vadd.f32 0.0, %v5172
        %5174 = vmatmul.f32.gmra.mxu0 %v5153
        %v5175 = vpop.f32.mrf.mxu0
        %v5176 = vadd.f32 0.0, %v5175
        %5177 = vdwg.mxu0
        %v5178 = vld [vmem:[%s11] sm:$0x1]
        %v5179 = vld [vmem:[%s12] sm:$0x1]
        %v5180 = vsel %vm596, %v5173, 0.0
        %5181 = vadd.xlane.f32.xlu0 %v5180
        %v5182 = vpop.xlane.xlu0 %5181
        %v5183 = vsel %vm596, %v5176, 0.0
        %5184 = vadd.xlane.f32.xlu0 %v5183
        %v5185 = vpop.xlane.xlu0 %5184
        %v5186 = vmul.f32 %v5182, %v5023
        %v5187 = vmul.f32 %v5185, %v5023
        %v5188 = vsub.f32 %v5173, %v5186
        %v5189 = vsub.f32 %v5176, %v5187
        %v5190 = vmul.f32 %v5188, %v5188
        %v5191 = vmul.f32 %v5189, %v5189
        %v5192 = vsel %vm596, %v5190, 0.0
        %5193 = vadd.xlane.f32.xlu0 %v5192
        %v5194 = vpop.xlane.xlu0 %5193
        %v5195 = vsel %vm596, %v5191, 0.0
        %5196 = vadd.xlane.f32.xlu0 %v5195
        %v5197 = vpop.xlane.xlu0 %5196
        %v5198 = vmul.f32 %v5194, %v5023
        %v5199 = vmul.f32 %v5197, %v5023
        %v5200 = vadd.f32 %v5198, 1e-05
        %v5201 = vadd.f32 %v5199, 1e-05
        %v5202 = vrsqrt.pop %v5200
        %v5203 = vmul.f32 %v5202, %v5200
        %v5204 = vmul.f32 %v5203, %v5202
        %v5205 = vmul.f32 0.5, %v5204
        %v5206 = vsub.f32 1.5, %v5205
        %v5207 = vmul.f32 %v5202, %v5206
        %vm5208 = vweird.f32 %v5200
        %vm5209 = vweird.f32 %v5202
        %vm5210 = vmor %vm5208, %vm5209
        %v5211 = vsel %vm5210, %v5202, %v5207
        %v5212 = vrsqrt.pop %v5201
        %v5213 = vmul.f32 %v5212, %v5201
        %v5214 = vmul.f32 %v5213, %v5212
        %v5215 = vmul.f32 0.5, %v5214
        %v5216 = vsub.f32 1.5, %v5215
        %v5217 = vmul.f32 %v5212, %v5216
        %vm5218 = vweird.f32 %v5201
        %vm5219 = vweird.f32 %v5212
        %vm5220 = vmor %vm5218, %vm5219
        %v5221 = vsel %vm5220, %v5212, %v5217
        %v5222 = vmul.f32 %v5188, %v5211
        %v5223 = vmul.f32 %v5189, %v5221
        %v5225 = vperm.slane %v5178, 0
        %v5227 = vmul.f32 %v5222, %v5225
        %v5228 = vmul.f32 %v5223, %v5225
        %v5230 = vperm.slane %v5179, 0
        %v5232 = vadd.f32 %v5227, %v5230
        %v5233 = vadd.f32 %v5228, %v5230
        %v5234 = vadd.f32 %v590, %v5232
        %v5235 = vadd.f32 %v591, %v5233
        %5236 = vst.msk [vmem:[%s570] sm:$0xff] %vm596, %v5234
        %5237 = vst.msk [vmem:[%s570 + $0x8] sm:$0xff] %vm596, %v5235
        %s5238 = sand.u32 %s346, 1
        %s5239 = scalar_lea.sflag [#allocation5], %s5238
        %s5240 = sand.u32 %s346, 1
        %s5241 = smul.addr %s5240, 16
        %s5242 = scalar_lea.vmem [#allocation11], %s5241
        // Predicated region
        $region89: #{tpu_custom_call.1} parent=71 // pred_check
          %p5243 = pneg %p356
        $region90: #{tpu_custom_call.1} parent=71 // pred_check_branch
          %5245 = sbr.rel (%p5243) target = $region92
        $region91: #{tpu_custom_call.1} parent=71 // pred_region
          %s5246 = smul.u32 2, %s37
          %5248 = vsyncadd %s5239, 0
          %s5249 = smul.addr %s36, 2
          %s5250 = sadd.s32 %s5246, %s5249
          %s5251 = smul.addr %s5250, 8
          %s5252 = scalar_lea.hbm %s13, %s5251
          %s5253 = sshll.u32 %s5242, 4
          %s5254 = int_to_ptr.vmem [resolvable:$true] %s5253
          %s5255 = sshll.u32 %s5252, 4
          %s5256 = int_to_ptr.hbm [resolvable:$true] %s5255
          %5261 = dma.vmem_to_hbm [thread:$0]  %s5254, 256, %s5256, %s5239, 128, 128, 8
        $region92: #{tpu_custom_call.1} parent=71 // pred_fallthru
          _
      $region72: #{tpu_custom_call.1} parent=5 // pred_fallthru
        _
      %p5262 = scmp.le.s32.totalorder 2, %s27
      // Predicated region
      $region93: #{tpu_custom_call.1} parent=5 // pred_check
        %p5263 = pneg %p5262
      $region94: #{tpu_custom_call.1} parent=5 // pred_check_branch
        %5265 = sbr.rel (%p5263) target = $region96
      $region95: #{tpu_custom_call.1} parent=5 // pred_region
        %s5266 = ssub.s32 %s27, 2
        // Predicated region
        $region97: #{tpu_custom_call.1} parent=95 // pred_check
          %p5267 = pneg %p362
        $region98: #{tpu_custom_call.1} parent=95 // pred_check_branch
          %5269 = sbr.rel (%p5267) target = $region100
        $region99: #{tpu_custom_call.1} parent=95 // pred_region
          %s5270 = sand.u32 %s347, 1
          %s5271 = scalar_lea.sflag [#allocation5], %s5270
          %s5272 = sand.u32 %s347, 1
          %s5273 = smul.addr %s5272, 16
          %s5274 = scalar_lea.vmem [#allocation11], %s5273
          %5276 = dma.done %s5271, 256
        $region100: #{tpu_custom_call.1} parent=95 // pred_fallthru
          _
      $region96: #{tpu_custom_call.1} parent=5 // pred_fallthru
        _
    $region6: #{tpu_custom_call.1} parent=1 // loop_footer
      %s31 = sadd.s32 1, %s27
    $region7: #{tpu_custom_call.1} parent=1 // loop_footer_branch
      %26 = sbr.rel target = $region3
    $region8: #{tpu_custom_call.1} parent=1 // loop_exit
      _
    %5277 = vsyncpa [#allocation4], 1
    %s5278 = scalar_lea.sflag [#allocation4], 1
    %5279 = vsyncpa %s5278, 1
    %5280 = vsyncpa [#allocation7], 1
    %5281 = vsyncpa [#allocation10], 1
    %5282 = vsyncpa [#allocation5], 1
    %s5283 = scalar_lea.sflag [#allocation5], 1
    %5284 = vsyncpa %s5283, 1

</llo_original>
